<compile_context>
chip_gen: v7x
topology: tpu7x:2x2x1
jax: 0.10.0
libtpu: 0.0.40
codegen_flags: <defaults>
</compile_context>

<pallas_src>
from functools import partial

import jax
import jax.numpy as jnp
import numpy as np
from jax.experimental import pallas as pl
from jax.experimental.pallas import tpu as pltpu

EPS = 1e-5
LANE = 128


def _round_up(v, m):
    return (v + m - 1) // m * m


def _pick_strip_rows(H, target=32):
    """Largest divisor of H that is <= target (bounds per-step VMEM).

    v7x (64 MiB VMEM) prefers target ~16-32; v5e/v6e (128 MiB) can go larger.
    """
    for sh in range(min(H, target), 0, -1):
        if H % sh == 0:
            return sh
    return H


# ---------------------------------------------------------------------------
# In-kernel helpers
# ---------------------------------------------------------------------------
def _conv3x3_strip(strip, w_ref, b_ref):
    """3x3 'same' conv on a halo-padded strip, as 3 tap-row-grouped matmuls.

    strip: (SH+2, W+2, Cp) bf16 value (zero halo already in place)
    w_ref: (3, 3*Cp, Cp) bf16 — per-ky weight block, rows ordered (kx, cin)
    b_ref: (1, Cp) f32 bias
    returns (SH*W, Cp) float32
    """
    SH = strip.shape[0] - 2
    W = strip.shape[1] - 2
    Cp = strip.shape[2]
    acc = jnp.zeros((SH * W, Cp), jnp.float32)
    for ky in range(3):
        # Concatenate the 3 kx-shifted windows of one ky row -> K = 3*Cp.
        lhs = jnp.concatenate(
            [strip[ky:ky + SH, kx:kx + W, :] for kx in range(3)], axis=-1)
        acc = acc + jnp.dot(lhs.reshape(SH * W, 3 * Cp), w_ref[ky],
                            preferred_element_type=jnp.float32)
    return acc + b_ref[...]


# ---------------------------------------------------------------------------
# Kernels
# ---------------------------------------------------------------------------
def conv1_stats_kernel(top_ref, mid_ref, bot_ref, w_ref, b_ref, y_ref, st_ref):
    """conv1(x strip) + fused per-strip BN1 partial statistics.

    Inputs are W-pre-padded bf16 rows: mid = SH rows, top/bot = 1 halo row each
    (clamped at the image edge; zero-masked here when out of image).
    """
    s = pl.program_id(1)
    n_s = pl.num_programs(1)
    tmask = jnp.where(s > 0, 1.0, 0.0)            # top halo valid?
    bmask = jnp.where(s < n_s - 1, 1.0, 0.0)      # bottom halo valid?
    top = (top_ref[...].astype(jnp.float32) * tmask).astype(jnp.bfloat16)
    bot = (bot_ref[...].astype(jnp.float32) * bmask).astype(jnp.bfloat16)
    strip = jnp.concatenate([top, mid_ref[...], bot], axis=0)   # (SH+2, W+2, Cp)

    y = _conv3x3_strip(strip, w_ref, b_ref)                     # (SH*W, Cp) f32
    SH, W, Cp = y_ref.shape
    y_ref[...] = y.reshape(SH, W, Cp).astype(y_ref.dtype)       # bf16 intermediate
    st_ref[0:1, :] = jnp.sum(y, axis=0, keepdims=True)          # sum
    st_ref[1:2, :] = jnp.sum(y * y, axis=0, keepdims=True)      # sum of squares


def bn_prelu_conv2_stats_kernel(top_ref, mid_ref, bot_ref, sc_ref, sh_ref,
                                a_ref, w_ref, b_ref, y_ref, st_ref):
    """BN1-apply + PReLU + conv2 on a strip, plus fused BN2 partial stats."""
    s = pl.program_id(1)
    n_s = pl.num_programs(1)
    Cp = mid_ref.shape[-1]
    scale = sc_ref[...].reshape(1, 1, Cp)
    shift = sh_ref[...].reshape(1, 1, Cp)
    alpha = a_ref[...].reshape(1, 1, Cp)

    def bn_prelu(ref, mask):
        h = ref[...].astype(jnp.float32) * scale + shift
        h = jnp.where(h > 0, h, alpha * h)
        return (h * mask).astype(jnp.bfloat16)

    tmask = jnp.where(s > 0, 1.0, 0.0)
    bmask = jnp.where(s < n_s - 1, 1.0, 0.0)
    rows = jnp.concatenate([bn_prelu(top_ref, tmask),
                            bn_prelu(mid_ref, 1.0),
                            bn_prelu(bot_ref, bmask)], axis=0)   # (SH+2, W, Cp)
    zcol = jnp.zeros((rows.shape[0], 1, Cp), jnp.bfloat16)
    strip = jnp.concatenate([zcol, rows, zcol], axis=1)          # (SH+2, W+2, Cp)

    y = _conv3x3_strip(strip, w_ref, b_ref)
    SH, W, _ = y_ref.shape
    y_ref[...] = y.reshape(SH, W, Cp).astype(y_ref.dtype)
    st_ref[0:1, :] = jnp.sum(y, axis=0, keepdims=True)
    st_ref[1:2, :] = jnp.sum(y * y, axis=0, keepdims=True)


def bn2_residual_kernel(x_ref, y2_ref, sc_ref, sh_ref, o_ref):
    """BN2-apply + residual add (elementwise, per strip)."""
    Cp = x_ref.shape[-1]
    o_ref[...] = (x_ref[...]
                  + y2_ref[...].astype(jnp.float32) * sc_ref[...].reshape(1, 1, Cp)
                  + sh_ref[...].reshape(1, 1, Cp))


# ---------------------------------------------------------------------------
# Host-side wrapper
# ---------------------------------------------------------------------------
def _bn_affine(stats, gamma_row, beta_row, count):
    """Reduce per-strip (sum, sumsq) partials into the BN affine (scale, shift)."""
    s = jnp.sum(stats[:, :, 0, :], axis=(0, 1))
    ss = jnp.sum(stats[:, :, 1, :], axis=(0, 1))
    mean = s / count
    var = jnp.maximum(ss / count - mean * mean, 0.0)   # biased variance
    scale = gamma_row[0] * jax.lax.rsqrt(var + EPS)
    shift = beta_row[0] - mean * scale
    return scale.reshape(1, -1), shift.reshape(1, -1)


@partial(jax.jit, static_argnames=("strip_rows",))
def residual_block(x_nchw, params, *, strip_rows=None):
    """x_nchw: (N, C, H, W) float32. params as produced in __main__."""
    w1, b1, g1, be1, a, w2, b2, g2, be2 = params
    N, C, H, W = x_nchw.shape
    SH = strip_rows if strip_rows is not None else _pick_strip_rows(H)
    if H % SH != 0:
        raise ValueError("strip_rows must divide H")
    if W % 8 != 0:
        raise ValueError("W must be a multiple of 8 (sublane-aligned reshape)")
    S = H // SH
    Cp = max(LANE, _round_up(C, LANE))          # lane-dense channel padding

    # NCHW -> NHWC, zero-pad channels to Cp (padded channels stay exactly 0
    # through conv / BN / PReLU / residual, sliced off at the end).
    x = jnp.transpose(x_nchw, (0, 2, 3, 1)).astype(jnp.float32)
    x = jnp.pad(x, ((0, 0), (0, 0), (0, 0), (0, Cp - C)))              # f32, residual
    xw = jnp.pad(x, ((0, 0), (0, 0), (1, 1), (0, 0))).astype(jnp.bfloat16)  # W-padded bf16

    def prep_w(w):   # torch (Cout, Cin, 3, 3) -> (3, 3*Cp, Cp) bf16, rows = (kx, cin)
        wt = jnp.transpose(w.astype(jnp.float32), (2, 3, 1, 0))   # (ky, kx, Ci, Co)
        wt = jnp.pad(wt, ((0, 0), (0, 0), (0, Cp - C), (0, Cp - C)))
        return wt.reshape(3, 3 * Cp, Cp).astype(jnp.bfloat16)

    def prep_v(v):   # (C,) -> (1, Cp) f32
        return jnp.pad(v.astype(jnp.float32), (0, Cp - C)).reshape(1, Cp)

    w1p, w2p = prep_w(w1), prep_w(w2)
    b1p, b2p = prep_v(b1), prep_v(b2)
    g1p, g2p = prep_v(g1), prep_v(g2)
    be1p, be2p = prep_v(be1), prep_v(be2)
    a_vec = jnp.full((1, Cp), jnp.asarray(a, jnp.float32), jnp.float32)

    # --- Block specs (grid = (batch, H-strip)) ------------------------------
    def strip_spec(width):
        return pl.BlockSpec((None, SH, width, Cp), lambda n, s: (n, s, 0, 0))

    def halo_top_spec(width):   # row s*SH - 1, clamped (zero-masked in kernel)
        return pl.BlockSpec((None, 1, width, Cp),
                            lambda n, s: (n, jnp.maximum(s * SH - 1, 0), 0, 0))

    def halo_bot_spec(width):   # row s*SH + SH, clamped (zero-masked in kernel)
        return pl.BlockSpec((None, 1, width, Cp),
                            lambda n, s: (n, jnp.minimum(s * SH + SH, H - 1), 0, 0))

    w_spec = pl.BlockSpec((3, 3 * Cp, Cp), lambda n, s: (0, 0, 0))
    v_spec = pl.BlockSpec((1, Cp), lambda n, s: (0, 0))
    st_spec = pl.BlockSpec((None, None, 2, Cp), lambda n, s: (n, s, 0, 0))

    cparams = pltpu.CompilerParams(
        dimension_semantics=("parallel", "parallel"),   # batch x strips -> megacore
        vmem_limit_bytes=48 * 1024 * 1024)              # v7x-safe (< 64 MiB physical)

    grid = (N, S)
    count = jnp.float32(N * H * W)
    conv_out_shapes = (jax.ShapeDtypeStruct((N, H, W, Cp), jnp.bfloat16),
                       jax.ShapeDtypeStruct((N, S, 2, Cp), jnp.float32))

    # ---- pass 1: conv1 + BN1 statistic partials ----------------------------
    y1, st1 = pl.pallas_call(
        conv1_stats_kernel,
        grid=grid,
        in_specs=[halo_top_spec(W + 2), strip_spec(W + 2), halo_bot_spec(W + 2),
                  w_spec, v_spec],
        out_specs=(strip_spec(W), st_spec),
        out_shape=conv_out_shapes,
        compiler_params=cparams,
    )(xw, xw, xw, w1p, b1p)
    scale1, shift1 = _bn_affine(st1, g1p, be1p, count)

    # ---- pass 2: BN1-apply + PReLU + conv2 + BN2 statistic partials --------
    y2, st2 = pl.pallas_call(
        bn_prelu_conv2_stats_kernel,
        grid=grid,
        in_specs=[halo_top_spec(W), strip_spec(W), halo_bot_spec(W),
                  v_spec, v_spec, v_spec, w_spec, v_spec],
        out_specs=(strip_spec(W), st_spec),
        out_shape=conv_out_shapes,
        compiler_params=cparams,
    )(y1, y1, y1, scale1, shift1, a_vec, w2p, b2p)
    scale2, shift2 = _bn_affine(st2, g2p, be2p, count)

    # ---- pass 3: BN2-apply + residual add (x aliased to output) ------------
    out = pl.pallas_call(
        bn2_residual_kernel,
        grid=grid,
        in_specs=[strip_spec(W), strip_spec(W), v_spec, v_spec],
        out_specs=strip_spec(W),
        out_shape=jax.ShapeDtypeStruct((N, H, W, Cp), jnp.float32),
        input_output_aliases={0: 0},
        compiler_params=cparams,
    )(x, y2, scale2, shift2)

    out = out[..., :C]                               # drop channel padding
    return jnp.transpose(out, (0, 3, 1, 2)).astype(x_nchw.dtype)


# ---------------------------------------------------------------------------
# Pure-JAX reference (PyTorch training-mode semantics, full f32)
# ---------------------------------------------------------------------------
def residual_block_reference(x, params):
    w1, b1, g1, be1, a, w2, b2, g2, be2 = params

    def conv(h, w, b):
        y = jax.lax.conv_general_dilated(
            h, w, window_strides=(1, 1), padding=((1, 1), (1, 1)),
            dimension_numbers=('NCHW', 'OIHW', 'NCHW'))
        return y + b[None, :, None, None]

    def bn(h, g, bt):
        m = h.mean(axis=(0, 2, 3), keepdims=True)
        v = ((h - m) ** 2).mean(axis=(0, 2, 3), keepdims=True)
        return (h - m) * jax.lax.rsqrt(v + EPS) * g[None, :, None, None] \
            + bt[None, :, None, None]

    h = conv(x, w1, b1)
    h = bn(h, g1, be1)
    h = jnp.where(h > 0, h, a * h)
    h = conv(h, w2, b2)
    h = bn(h, g2, be2)
    return x + h


if __name__ == "__main__":
    N, C, H, W = 2, 4, 16, 16   # small synthetic shapes (in_features = C = 4)

    key = jax.random.PRNGKey(0)
    keys = jax.random.split(key, 7)
    x = jax.random.normal(keys[0], (N, C, H, W), jnp.float32)

    # Deterministic parameter init (shapes follow the PyTorch module).
    w1 = jax.random.normal(keys[1], (C, C, 3, 3), jnp.float32) * 0.1
    b1 = jax.random.normal(keys[2], (C,), jnp.float32) * 0.1
    g1 = 1.0 + 0.1 * jax.random.normal(keys[3], (C,), jnp.float32)
    be1 = 0.1 * jax.random.normal(keys[4], (C,), jnp.float32)
    w2 = jax.random.normal(keys[5], (C, C, 3, 3), jnp.float32) * 0.1
    b2 = jax.random.normal(keys[6], (C,), jnp.float32) * 0.1
    g2 = jnp.ones((C,), jnp.float32)       # BatchNorm default gamma
    be2 = jnp.zeros((C,), jnp.float32)     # BatchNorm default beta
    a = jnp.float32(0.25)                  # PReLU default slope

    params = (w1, b1, g1, be1, a, w2, b2, g2, be2)

    # strip_rows=8 -> 2 strips per image: exercises the halo / edge-mask path.
    out = jax.block_until_ready(residual_block(x, params, strip_rows=8))
    ref = jax.block_until_ready(residual_block_reference(x, params))

    assert out.shape == x.shape and out.dtype == x.dtype
    # Tolerance reflects bf16 MXU operands + bf16 intermediate activations
    # (review-requested); the f32 reference uses full-precision convolutions.
    np.testing.assert_allclose(np.asarray(out), np.asarray(ref),
                               rtol=5e-2, atol=5e-2)
    print("KERNEL_OK")
</pallas_src>

<mosaic_0001>
module attributes {stable_mosaic.version = 11 : i64} {
  func.func @bn2_residual_kernel(%arg0: i32, %arg1: i32, %arg2: memref<1x8x16x128xf32, #tpu.memory_space<vmem>>, %arg3: memref<1x8x16x128xbf16, #tpu.memory_space<vmem>>, %arg4: memref<1x128xf32, #tpu.memory_space<vmem>>, %arg5: memref<1x128xf32, #tpu.memory_space<vmem>>, %arg6: memref<1x8x16x128xf32, #tpu.memory_space<vmem>>) attributes {dimension_semantics = [#tpu.dimension_semantics<parallel>, #tpu.dimension_semantics<parallel>], iteration_bounds = array<i64: 2, 2>, scalar_prefetch = 0 : i64, scratch_operands = 0 : i64, tpu.core_type = #tpu.core_type<tc>, window_params = [{transform_indices = @transform_0, window_bounds = array<i64: 1, 8, 16, 128>}, {transform_indices = @transform_1, window_bounds = array<i64: 1, 8, 16, 128>}, {pipeline_mode = #tpu.pipeline_mode<synchronous>, transform_indices = @transform_2, window_bounds = array<i64: 1, 128>}, {pipeline_mode = #tpu.pipeline_mode<synchronous>, transform_indices = @transform_3, window_bounds = array<i64: 1, 128>}, {transform_indices = @transform_4, window_bounds = array<i64: 1, 8, 16, 128>}]} {
    %c0 = arith.constant 0 : index
    %c0_0 = arith.constant 0 : index
    %c0_1 = arith.constant 0 : index
    %c0_2 = arith.constant 0 : index
    %0 = vector.load %arg2[%c0, %c0_0, %c0_1, %c0_2] : memref<1x8x16x128xf32, #tpu.memory_space<vmem>>, vector<1x8x16x128xf32>
    %1 = vector.shape_cast %0 : vector<1x8x16x128xf32> to vector<8x16x128xf32>
    %c0_3 = arith.constant 0 : index
    %c0_4 = arith.constant 0 : index
    %c0_5 = arith.constant 0 : index
    %c0_6 = arith.constant 0 : index
    %2 = vector.load %arg3[%c0_3, %c0_4, %c0_5, %c0_6] : memref<1x8x16x128xbf16, #tpu.memory_space<vmem>>, vector<1x8x16x128xbf16>
    %3 = vector.shape_cast %2 : vector<1x8x16x128xbf16> to vector<8x16x128xbf16>
    %4 = arith.extf %3 : vector<8x16x128xbf16> to vector<8x16x128xf32>
    %c0_7 = arith.constant 0 : index
    %c0_8 = arith.constant 0 : index
    %5 = vector.load %arg4[%c0_7, %c0_8] : memref<1x128xf32, #tpu.memory_space<vmem>>, vector<1x128xf32>
    %6 = vector.shape_cast %5 : vector<1x128xf32> to vector<1x1x128xf32>
    %7 = vector.broadcast %6 : vector<1x1x128xf32> to vector<8x16x128xf32>
    %8 = arith.mulf %4, %7 : vector<8x16x128xf32>
    %9 = arith.addf %1, %8 : vector<8x16x128xf32>
    %c0_9 = arith.constant 0 : index
    %c0_10 = arith.constant 0 : index
    %10 = vector.load %arg5[%c0_9, %c0_10] : memref<1x128xf32, #tpu.memory_space<vmem>>, vector<1x128xf32>
    %11 = vector.shape_cast %10 : vector<1x128xf32> to vector<1x1x128xf32>
    %12 = vector.broadcast %11 : vector<1x1x128xf32> to vector<8x16x128xf32>
    %13 = arith.addf %9, %12 : vector<8x16x128xf32>
    %c0_11 = arith.constant 0 : index
    %c0_12 = arith.constant 0 : index
    %c0_13 = arith.constant 0 : index
    %c0_14 = arith.constant 0 : index
    %14 = vector.load %arg6[%c0_11, %c0_12, %c0_13, %c0_14] : memref<1x8x16x128xf32, #tpu.memory_space<vmem>>, vector<1x8x16x128xf32>
    %15 = vector.shape_cast %14 : vector<1x8x16x128xf32> to vector<8x16x128xf32>
    %16 = vector.shape_cast %13 : vector<8x16x128xf32> to vector<1x8x16x128xf32>
    tpu.vector_store %arg6[%c0_11, %c0_12, %c0_13, %c0_14], %16 {strides = array<i32>} : memref<1x8x16x128xf32, #tpu.memory_space<vmem>>, vector<1x8x16x128xf32>,
    return
  }
  func.func @transform_0(%arg0: i32, %arg1: i32) -> (i32, i32, i32, i32) {
    %c0_i32 = arith.constant 0 : i32
    %c0_i32_0 = arith.constant 0 : i32
    %c0_i32_1 = arith.constant 0 : i32
    return %arg0, %arg1, %c0_i32, %c0_i32_0 : i32, i32, i32, i32
  }
  func.func @transform_1(%arg0: i32, %arg1: i32) -> (i32, i32, i32, i32) {
    %c0_i32 = arith.constant 0 : i32
    %c0_i32_0 = arith.constant 0 : i32
    %c0_i32_1 = arith.constant 0 : i32
    return %arg0, %arg1, %c0_i32, %c0_i32_0 : i32, i32, i32, i32
  }
  func.func @transform_2(%arg0: i32, %arg1: i32) -> (i32, i32) {
    %c0_i32 = arith.constant 0 : i32
    %c0_i32_0 = arith.constant 0 : i32
    %c0_i32_1 = arith.constant 0 : i32
    return %c0_i32, %c0_i32_0 : i32, i32
  }
  func.func @transform_3(%arg0: i32, %arg1: i32) -> (i32, i32) {
    %c0_i32 = arith.constant 0 : i32
    %c0_i32_0 = arith.constant 0 : i32
    %c0_i32_1 = arith.constant 0 : i32
    return %c0_i32, %c0_i32_0 : i32, i32
  }
  func.func @transform_4(%arg0: i32, %arg1: i32) -> (i32, i32, i32, i32) {
    %c0_i32 = arith.constant 0 : i32
    %c0_i32_0 = arith.constant 0 : i32
    %c0_i32_1 = arith.constant 0 : i32
    return %arg0, %arg1, %c0_i32, %c0_i32_0 : i32, i32, i32, i32
  }
}

module attributes {stable_mosaic.version = 11 : i64} {
  func.func @conv1_stats_kernel(%arg0: i32, %arg1: i32, %arg2: memref<1x1x18x128xbf16, #tpu.memory_space<vmem>>, %arg3: memref<1x8x18x128xbf16, #tpu.memory_space<vmem>>, %arg4: memref<1x1x18x128xbf16, #tpu.memory_space<vmem>>, %arg5: memref<3x384x128xbf16, #tpu.memory_space<vmem>>, %arg6: memref<1x128xf32, #tpu.memory_space<vmem>>, %arg7: memref<1x8x16x128xbf16, #tpu.memory_space<vmem>>, %arg8: memref<1x1x2x128xf32, #tpu.memory_space<vmem>>) attributes {dimension_semantics = [#tpu.dimension_semantics<parallel>, #tpu.dimension_semantics<parallel>], iteration_bounds = array<i64: 2, 2>, scalar_prefetch = 0 : i64, scratch_operands = 0 : i64, tpu.core_type = #tpu.core_type<tc>, window_params = [{transform_indices = @transform_0, window_bounds = array<i64: 1, 1, 18, 128>}, {transform_indices = @transform_1, window_bounds = array<i64: 1, 8, 18, 128>}, {transform_indices = @transform_2, window_bounds = array<i64: 1, 1, 18, 128>}, {pipeline_mode = #tpu.pipeline_mode<synchronous>, transform_indices = @transform_3, window_bounds = array<i64: 3, 384, 128>}, {pipeline_mode = #tpu.pipeline_mode<synchronous>, transform_indices = @transform_4, window_bounds = array<i64: 1, 128>}, {transform_indices = @transform_5, window_bounds = array<i64: 1, 8, 16, 128>}, {transform_indices = @transform_6, window_bounds = array<i64: 1, 1, 2, 128>}]} {
    %c0_i32 = arith.constant 0 : i32
    %0 = arith.cmpi sgt, %arg1, %c0_i32 : i32
    %cst = arith.constant 1.000000e+00 : f32
    %cst_0 = arith.constant 0.000000e+00 : f32
    %1 = arith.select %0, %cst, %cst_0 : f32
    %c1_i32 = arith.constant 1 : i32
    %2 = arith.cmpi slt, %arg1, %c1_i32 : i32
    %cst_1 = arith.constant 1.000000e+00 : f32
    %cst_2 = arith.constant 0.000000e+00 : f32
    %3 = arith.select %2, %cst_1, %cst_2 : f32
    %c0 = arith.constant 0 : index
    %c0_3 = arith.constant 0 : index
    %c0_4 = arith.constant 0 : index
    %c0_5 = arith.constant 0 : index
    %4 = vector.load %arg2[%c0, %c0_3, %c0_4, %c0_5] : memref<1x1x18x128xbf16, #tpu.memory_space<vmem>>, vector<1x1x18x128xbf16>
    %5 = vector.shape_cast %4 : vector<1x1x18x128xbf16> to vector<1x18x128xbf16>
    %6 = arith.extf %5 : vector<1x18x128xbf16> to vector<1x18x128xf32>
    %7 = vector.broadcast %1 : f32 to vector<1x18x128xf32>
    %8 = arith.mulf %6, %7 : vector<1x18x128xf32>
    %9 = arith.truncf %8 : vector<1x18x128xf32> to vector<1x18x128xbf16>
    %c0_6 = arith.constant 0 : index
    %c0_7 = arith.constant 0 : index
    %c0_8 = arith.constant 0 : index
    %c0_9 = arith.constant 0 : index
    %10 = vector.load %arg4[%c0_6, %c0_7, %c0_8, %c0_9] : memref<1x1x18x128xbf16, #tpu.memory_space<vmem>>, vector<1x1x18x128xbf16>
    %11 = vector.shape_cast %10 : vector<1x1x18x128xbf16> to vector<1x18x128xbf16>
    %12 = arith.extf %11 : vector<1x18x128xbf16> to vector<1x18x128xf32>
    %13 = vector.broadcast %3 : f32 to vector<1x18x128xf32>
    %14 = arith.mulf %12, %13 : vector<1x18x128xf32>
    %15 = arith.truncf %14 : vector<1x18x128xf32> to vector<1x18x128xbf16>
    %c0_10 = arith.constant 0 : index
    %c0_11 = arith.constant 0 : index
    %c0_12 = arith.constant 0 : index
    %c0_13 = arith.constant 0 : index
    %16 = vector.load %arg3[%c0_10, %c0_11, %c0_12, %c0_13] : memref<1x8x18x128xbf16, #tpu.memory_space<vmem>>, vector<1x8x18x128xbf16>
    %17 = vector.shape_cast %16 : vector<1x8x18x128xbf16> to vector<8x18x128xbf16>
    %18 = tpu.concatenate %9, %17, %15 in 0 : vector<1x18x128xbf16>, vector<8x18x128xbf16>, vector<1x18x128xbf16> -> vector<10x18x128xbf16>
    %cst_14 = arith.constant 0.000000e+00 : f32
    %19 = vector.broadcast %cst_14 : f32 to vector<128x128xf32>
    %20 = vector.extract_strided_slice %18 {offsets = [0, 0, 0], sizes = [8, 16, 128], strides = [1, 1, 1]} : vector<10x18x128xbf16> to vector<8x16x128xbf16>
    %21 = vector.extract_strided_slice %18 {offsets = [0, 1, 0], sizes = [8, 16, 128], strides = [1, 1, 1]} : vector<10x18x128xbf16> to vector<8x16x128xbf16>
    %22 = vector.extract_strided_slice %18 {offsets = [0, 2, 0], sizes = [8, 16, 128], strides = [1, 1, 1]} : vector<10x18x128xbf16> to vector<8x16x128xbf16>
    %23 = tpu.concatenate %20, %21, %22 in 2 : vector<8x16x128xbf16>, vector<8x16x128xbf16>, vector<8x16x128xbf16> -> vector<8x16x384xbf16>
    %24 = vector.shape_cast %23 : vector<8x16x384xbf16> to vector<128x384xbf16>
    %c0_15 = arith.constant 0 : index
    %c0_16 = arith.constant 0 : index
    %c0_17 = arith.constant 0 : index
    %25 = vector.load %arg5[%c0_15, %c0_16, %c0_17] : memref<3x384x128xbf16, #tpu.memory_space<vmem>>, vector<1x384x128xbf16>
    %26 = vector.shape_cast %25 : vector<1x384x128xbf16> to vector<384x128xbf16>
    %cst_18 = arith.constant dense<0.000000e+00> : vector<128x128xf32>
    %27 = tpu.matmul %24, %26, %cst_18 {dimension_numbers = #tpu.dot_dimension_numbers<[1], [0], [0], [1], [0, 0, 1, 1], [], []>} : vector<128x384xbf16>, vector<384x128xbf16>, vector<128x128xf32> -> vector<128x128xf32>
    %28 = arith.addf %19, %27 : vector<128x128xf32>
    %29 = vector.extract_strided_slice %18 {offsets = [1, 0, 0], sizes = [8, 16, 128], strides = [1, 1, 1]} : vector<10x18x128xbf16> to vector<8x16x128xbf16>
    %30 = vector.extract_strided_slice %18 {offsets = [1, 1, 0], sizes = [8, 16, 128], strides = [1, 1, 1]} : vector<10x18x128xbf16> to vector<8x16x128xbf16>
    %31 = vector.extract_strided_slice %18 {offsets = [1, 2, 0], sizes = [8, 16, 128], strides = [1, 1, 1]} : vector<10x18x128xbf16> to vector<8x16x128xbf16>
    %32 = tpu.concatenate %29, %30, %31 in 2 : vector<8x16x128xbf16>, vector<8x16x128xbf16>, vector<8x16x128xbf16> -> vector<8x16x384xbf16>
    %33 = vector.shape_cast %32 : vector<8x16x384xbf16> to vector<128x384xbf16>
    %c1 = arith.constant 1 : index
    %c0_19 = arith.constant 0 : index
    %c0_20 = arith.constant 0 : index
    %34 = vector.load %arg5[%c1, %c0_19, %c0_20] : memref<3x384x128xbf16, #tpu.memory_space<vmem>>, vector<1x384x128xbf16>
    %35 = vector.shape_cast %34 : vector<1x384x128xbf16> to vector<384x128xbf16>
    %cst_21 = arith.constant dense<0.000000e+00> : vector<128x128xf32>
    %36 = tpu.matmul %33, %35, %cst_21 {dimension_numbers = #tpu.dot_dimension_numbers<[1], [0], [0], [1], [0, 0, 1, 1], [], []>} : vector<128x384xbf16>, vector<384x128xbf16>, vector<128x128xf32> -> vector<128x128xf32>
    %37 = arith.addf %28, %36 : vector<128x128xf32>
    %38 = vector.extract_strided_slice %18 {offsets = [2, 0, 0], sizes = [8, 16, 128], strides = [1, 1, 1]} : vector<10x18x128xbf16> to vector<8x16x128xbf16>
    %39 = vector.extract_strided_slice %18 {offsets = [2, 1, 0], sizes = [8, 16, 128], strides = [1, 1, 1]} : vector<10x18x128xbf16> to vector<8x16x128xbf16>
    %40 = vector.extract_strided_slice %18 {offsets = [2, 2, 0], sizes = [8, 16, 128], strides = [1, 1, 1]} : vector<10x18x128xbf16> to vector<8x16x128xbf16>
    %41 = tpu.concatenate %38, %39, %40 in 2 : vector<8x16x128xbf16>, vector<8x16x128xbf16>, vector<8x16x128xbf16> -> vector<8x16x384xbf16>
    %42 = vector.shape_cast %41 : vector<8x16x384xbf16> to vector<128x384xbf16>
    %c2 = arith.constant 2 : index
    %c0_22 = arith.constant 0 : index
    %c0_23 = arith.constant 0 : index
    %43 = vector.load %arg5[%c2, %c0_22, %c0_23] : memref<3x384x128xbf16, #tpu.memory_space<vmem>>, vector<1x384x128xbf16>
    %44 = vector.shape_cast %43 : vector<1x384x128xbf16> to vector<384x128xbf16>
    %cst_24 = arith.constant dense<0.000000e+00> : vector<128x128xf32>
    %45 = tpu.matmul %42, %44, %cst_24 {dimension_numbers = #tpu.dot_dimension_numbers<[1], [0], [0], [1], [0, 0, 1, 1], [], []>} : vector<128x384xbf16>, vector<384x128xbf16>, vector<128x128xf32> -> vector<128x128xf32>
    %46 = arith.addf %37, %45 : vector<128x128xf32>
    %c0_25 = arith.constant 0 : index
    %c0_26 = arith.constant 0 : index
    %47 = vector.load %arg6[%c0_25, %c0_26] : memref<1x128xf32, #tpu.memory_space<vmem>>, vector<1x128xf32>
    %48 = vector.broadcast %47 : vector<1x128xf32> to vector<128x128xf32>
    %49 = arith.addf %46, %48 : vector<128x128xf32>
    %50 = vector.shape_cast %49 : vector<128x128xf32> to vector<8x16x128xf32>
    %51 = arith.truncf %50 : vector<8x16x128xf32> to vector<8x16x128xbf16>
    %c0_27 = arith.constant 0 : index
    %c0_28 = arith.constant 0 : index
    %c0_29 = arith.constant 0 : index
    %c0_30 = arith.constant 0 : index
    %52 = vector.load %arg7[%c0_27, %c0_28, %c0_29, %c0_30] : memref<1x8x16x128xbf16, #tpu.memory_space<vmem>>, vector<1x8x16x128xbf16>
    %53 = vector.shape_cast %52 : vector<1x8x16x128xbf16> to vector<8x16x128xbf16>
    %54 = vector.shape_cast %51 : vector<8x16x128xbf16> to vector<1x8x16x128xbf16>
    tpu.vector_store %arg7[%c0_27, %c0_28, %c0_29, %c0_30], %54 {strides = array<i32>} : memref<1x8x16x128xbf16, #tpu.memory_space<vmem>>, vector<1x8x16x128xbf16>,
    %cst_31 = arith.constant dense<0.000000e+00> : vector<128xf32>
    %55 = vector.multi_reduction <add>, %49, %cst_31 [0] : vector<128x128xf32> to vector<128xf32>
    %56 = vector.shape_cast %55 : vector<128xf32> to vector<1x128xf32>
    %c0_32 = arith.constant 0 : index
    %c0_33 = arith.constant 0 : index
    %c0_34 = arith.constant 0 : index
    %c0_35 = arith.constant 0 : index
    %57 = vector.load %arg8[%c0_32, %c0_33, %c0_34, %c0_35] : memref<1x1x2x128xf32, #tpu.memory_space<vmem>>, vector<1x1x1x128xf32>
    %58 = vector.shape_cast %57 : vector<1x1x1x128xf32> to vector<1x128xf32>
    %59 = vector.shape_cast %56 : vector<1x128xf32> to vector<1x1x1x128xf32>
    tpu.vector_store %arg8[%c0_32, %c0_33, %c0_34, %c0_35], %59 {strides = array<i32>} : memref<1x1x2x128xf32, #tpu.memory_space<vmem>>, vector<1x1x1x128xf32>,
    %60 = arith.mulf %49, %49 : vector<128x128xf32>
    %cst_36 = arith.constant dense<0.000000e+00> : vector<128xf32>
    %61 = vector.multi_reduction <add>, %60, %cst_36 [0] : vector<128x128xf32> to vector<128xf32>
    %62 = vector.shape_cast %61 : vector<128xf32> to vector<1x128xf32>
    %c0_37 = arith.constant 0 : index
    %c0_38 = arith.constant 0 : index
    %c1_39 = arith.constant 1 : index
    %c0_40 = arith.constant 0 : index
    %63 = vector.load %arg8[%c0_37, %c0_38, %c1_39, %c0_40] : memref<1x1x2x128xf32, #tpu.memory_space<vmem>>, vector<1x1x1x128xf32>
    %64 = vector.shape_cast %63 : vector<1x1x1x128xf32> to vector<1x128xf32>
    %65 = vector.shape_cast %62 : vector<1x128xf32> to vector<1x1x1x128xf32>
    tpu.vector_store %arg8[%c0_37, %c0_38, %c1_39, %c0_40], %65 {strides = array<i32>} : memref<1x1x2x128xf32, #tpu.memory_space<vmem>>, vector<1x1x1x128xf32>,
    return
  }
  func.func @transform_0(%arg0: i32, %arg1: i32) -> (i32, i32, i32, i32) {
    %c8_i32 = arith.constant 8 : i32
    %0 = arith.muli %arg1, %c8_i32 : i32
    %c1_i32 = arith.constant 1 : i32
    %1 = arith.subi %0, %c1_i32 : i32
    %c0_i32 = arith.constant 0 : i32
    %2 = arith.maxsi %1, %c0_i32 : i32
    %c0_i32_0 = arith.constant 0 : i32
    %c0_i32_1 = arith.constant 0 : i32
    %c0_i32_2 = arith.constant 0 : i32
    return %arg0, %2, %c0_i32_0, %c0_i32_1 : i32, i32, i32, i32
  }
  func.func @transform_1(%arg0: i32, %arg1: i32) -> (i32, i32, i32, i32) {
    %c0_i32 = arith.constant 0 : i32
    %c0_i32_0 = arith.constant 0 : i32
    %c0_i32_1 = arith.constant 0 : i32
    return %arg0, %arg1, %c0_i32, %c0_i32_0 : i32, i32, i32, i32
  }
  func.func @transform_2(%arg0: i32, %arg1: i32) -> (i32, i32, i32, i32) {
    %c8_i32 = arith.constant 8 : i32
    %0 = arith.muli %arg1, %c8_i32 : i32
    %c8_i32_0 = arith.constant 8 : i32
    %1 = arith.addi %0, %c8_i32_0 : i32
    %c15_i32 = arith.constant 15 : i32
    %2 = arith.minsi %1, %c15_i32 : i32
    %c0_i32 = arith.constant 0 : i32
    %c0_i32_1 = arith.constant 0 : i32
    %c0_i32_2 = arith.constant 0 : i32
    return %arg0, %2, %c0_i32, %c0_i32_1 : i32, i32, i32, i32
  }
  func.func @transform_3(%arg0: i32, %arg1: i32) -> (i32, i32, i32) {
    %c0_i32 = arith.constant 0 : i32
    %c0_i32_0 = arith.constant 0 : i32
    %c0_i32_1 = arith.constant 0 : i32
    %c0_i32_2 = arith.constant 0 : i32
    return %c0_i32, %c0_i32_0, %c0_i32_1 : i32, i32, i32
  }
  func.func @transform_4(%arg0: i32, %arg1: i32) -> (i32, i32) {
    %c0_i32 = arith.constant 0 : i32
    %c0_i32_0 = arith.constant 0 : i32
    %c0_i32_1 = arith.constant 0 : i32
    return %c0_i32, %c0_i32_0 : i32, i32
  }
  func.func @transform_5(%arg0: i32, %arg1: i32) -> (i32, i32, i32, i32) {
    %c0_i32 = arith.constant 0 : i32
    %c0_i32_0 = arith.constant 0 : i32
    %c0_i32_1 = arith.constant 0 : i32
    return %arg0, %arg1, %c0_i32, %c0_i32_0 : i32, i32, i32, i32
  }
  func.func @transform_6(%arg0: i32, %arg1: i32) -> (i32, i32, i32, i32) {
    %c0_i32 = arith.constant 0 : i32
    %c0_i32_0 = arith.constant 0 : i32
    %c0_i32_1 = arith.constant 0 : i32
    return %arg0, %arg1, %c0_i32, %c0_i32_0 : i32, i32, i32, i32
  }
}

module attributes {stable_mosaic.version = 11 : i64} {
  func.func @bn_prelu_conv2_stats_kernel(%arg0: i32, %arg1: i32, %arg2: memref<1x1x16x128xbf16, #tpu.memory_space<vmem>>, %arg3: memref<1x8x16x128xbf16, #tpu.memory_space<vmem>>, %arg4: memref<1x1x16x128xbf16, #tpu.memory_space<vmem>>, %arg5: memref<1x128xf32, #tpu.memory_space<vmem>>, %arg6: memref<1x128xf32, #tpu.memory_space<vmem>>, %arg7: memref<1x128xf32, #tpu.memory_space<vmem>>, %arg8: memref<3x384x128xbf16, #tpu.memory_space<vmem>>, %arg9: memref<1x128xf32, #tpu.memory_space<vmem>>, %arg10: memref<1x8x16x128xbf16, #tpu.memory_space<vmem>>, %arg11: memref<1x1x2x128xf32, #tpu.memory_space<vmem>>) attributes {dimension_semantics = [#tpu.dimension_semantics<parallel>, #tpu.dimension_semantics<parallel>], iteration_bounds = array<i64: 2, 2>, scalar_prefetch = 0 : i64, scratch_operands = 0 : i64, tpu.core_type = #tpu.core_type<tc>, window_params = [{transform_indices = @transform_0, window_bounds = array<i64: 1, 1, 16, 128>}, {transform_indices = @transform_1, window_bounds = array<i64: 1, 8, 16, 128>}, {transform_indices = @transform_2, window_bounds = array<i64: 1, 1, 16, 128>}, {pipeline_mode = #tpu.pipeline_mode<synchronous>, transform_indices = @transform_3, window_bounds = array<i64: 1, 128>}, {pipeline_mode = #tpu.pipeline_mode<synchronous>, transform_indices = @transform_4, window_bounds = array<i64: 1, 128>}, {pipeline_mode = #tpu.pipeline_mode<synchronous>, transform_indices = @transform_5, window_bounds = array<i64: 1, 128>}, {pipeline_mode = #tpu.pipeline_mode<synchronous>, transform_indices = @transform_6, window_bounds = array<i64: 3, 384, 128>}, {pipeline_mode = #tpu.pipeline_mode<synchronous>, transform_indices = @transform_7, window_bounds = array<i64: 1, 128>}, {transform_indices = @transform_8, window_bounds = array<i64: 1, 8, 16, 128>}, {transform_indices = @transform_9, window_bounds = array<i64: 1, 1, 2, 128>}]} {
    %c0 = arith.constant 0 : index
    %c0_0 = arith.constant 0 : index
    %0 = vector.load %arg5[%c0, %c0_0] : memref<1x128xf32, #tpu.memory_space<vmem>>, vector<1x128xf32>
    %1 = vector.shape_cast %0 : vector<1x128xf32> to vector<1x1x128xf32>
    %c0_1 = arith.constant 0 : index
    %c0_2 = arith.constant 0 : index
    %2 = vector.load %arg6[%c0_1, %c0_2] : memref<1x128xf32, #tpu.memory_space<vmem>>, vector<1x128xf32>
    %3 = vector.shape_cast %2 : vector<1x128xf32> to vector<1x1x128xf32>
    %c0_3 = arith.constant 0 : index
    %c0_4 = arith.constant 0 : index
    %4 = vector.load %arg7[%c0_3, %c0_4] : memref<1x128xf32, #tpu.memory_space<vmem>>, vector<1x128xf32>
    %5 = vector.shape_cast %4 : vector<1x128xf32> to vector<1x1x128xf32>
    %c0_i32 = arith.constant 0 : i32
    %6 = arith.cmpi sgt, %arg1, %c0_i32 : i32
    %cst = arith.constant 1.000000e+00 : f32
    %cst_5 = arith.constant 0.000000e+00 : f32
    %7 = arith.select %6, %cst, %cst_5 : f32
    %c1_i32 = arith.constant 1 : i32
    %8 = arith.cmpi slt, %arg1, %c1_i32 : i32
    %cst_6 = arith.constant 1.000000e+00 : f32
    %cst_7 = arith.constant 0.000000e+00 : f32
    %9 = arith.select %8, %cst_6, %cst_7 : f32
    %c0_8 = arith.constant 0 : index
    %c0_9 = arith.constant 0 : index
    %c0_10 = arith.constant 0 : index
    %c0_11 = arith.constant 0 : index
    %10 = vector.load %arg2[%c0_8, %c0_9, %c0_10, %c0_11] : memref<1x1x16x128xbf16, #tpu.memory_space<vmem>>, vector<1x1x16x128xbf16>
    %11 = vector.shape_cast %10 : vector<1x1x16x128xbf16> to vector<1x16x128xbf16>
    %12 = arith.extf %11 : vector<1x16x128xbf16> to vector<1x16x128xf32>
    %13 = vector.broadcast %1 : vector<1x1x128xf32> to vector<1x16x128xf32>
    %14 = arith.mulf %12, %13 : vector<1x16x128xf32>
    %15 = vector.broadcast %3 : vector<1x1x128xf32> to vector<1x16x128xf32>
    %16 = arith.addf %14, %15 : vector<1x16x128xf32>
    %cst_12 = arith.constant 0.000000e+00 : f32
    %17 = vector.broadcast %cst_12 : f32 to vector<1x16x128xf32>
    %18 = arith.cmpf ogt, %16, %17 : vector<1x16x128xf32>
    %19 = vector.broadcast %5 : vector<1x1x128xf32> to vector<1x16x128xf32>
    %20 = arith.mulf %19, %16 : vector<1x16x128xf32>
    %21 = arith.select %18, %16, %20 : vector<1x16x128xi1>, vector<1x16x128xf32>
    %22 = vector.broadcast %7 : f32 to vector<1x16x128xf32>
    %23 = arith.mulf %21, %22 : vector<1x16x128xf32>
    %24 = arith.truncf %23 : vector<1x16x128xf32> to vector<1x16x128xbf16>
    %c0_13 = arith.constant 0 : index
    %c0_14 = arith.constant 0 : index
    %c0_15 = arith.constant 0 : index
    %c0_16 = arith.constant 0 : index
    %25 = vector.load %arg3[%c0_13, %c0_14, %c0_15, %c0_16] : memref<1x8x16x128xbf16, #tpu.memory_space<vmem>>, vector<1x8x16x128xbf16>
    %26 = vector.shape_cast %25 : vector<1x8x16x128xbf16> to vector<8x16x128xbf16>
    %27 = arith.extf %26 : vector<8x16x128xbf16> to vector<8x16x128xf32>
    %28 = vector.broadcast %1 : vector<1x1x128xf32> to vector<8x16x128xf32>
    %29 = arith.mulf %27, %28 : vector<8x16x128xf32>
    %30 = vector.broadcast %3 : vector<1x1x128xf32> to vector<8x16x128xf32>
    %31 = arith.addf %29, %30 : vector<8x16x128xf32>
    %cst_17 = arith.constant 0.000000e+00 : f32
    %32 = vector.broadcast %cst_17 : f32 to vector<8x16x128xf32>
    %33 = arith.cmpf ogt, %31, %32 : vector<8x16x128xf32>
    %34 = vector.broadcast %5 : vector<1x1x128xf32> to vector<8x16x128xf32>
    %35 = arith.mulf %34, %31 : vector<8x16x128xf32>
    %36 = arith.select %33, %31, %35 : vector<8x16x128xi1>, vector<8x16x128xf32>
    %cst_18 = arith.constant 1.000000e+00 : f32
    %37 = vector.broadcast %cst_18 : f32 to vector<8x16x128xf32>
    %38 = arith.mulf %36, %37 : vector<8x16x128xf32>
    %39 = arith.truncf %38 : vector<8x16x128xf32> to vector<8x16x128xbf16>
    %c0_19 = arith.constant 0 : index
    %c0_20 = arith.constant 0 : index
    %c0_21 = arith.constant 0 : index
    %c0_22 = arith.constant 0 : index
    %40 = vector.load %arg4[%c0_19, %c0_20, %c0_21, %c0_22] : memref<1x1x16x128xbf16, #tpu.memory_space<vmem>>, vector<1x1x16x128xbf16>
    %41 = vector.shape_cast %40 : vector<1x1x16x128xbf16> to vector<1x16x128xbf16>
    %42 = arith.extf %41 : vector<1x16x128xbf16> to vector<1x16x128xf32>
    %43 = vector.broadcast %1 : vector<1x1x128xf32> to vector<1x16x128xf32>
    %44 = arith.mulf %42, %43 : vector<1x16x128xf32>
    %45 = vector.broadcast %3 : vector<1x1x128xf32> to vector<1x16x128xf32>
    %46 = arith.addf %44, %45 : vector<1x16x128xf32>
    %cst_23 = arith.constant 0.000000e+00 : f32
    %47 = vector.broadcast %cst_23 : f32 to vector<1x16x128xf32>
    %48 = arith.cmpf ogt, %46, %47 : vector<1x16x128xf32>
    %49 = vector.broadcast %5 : vector<1x1x128xf32> to vector<1x16x128xf32>
    %50 = arith.mulf %49, %46 : vector<1x16x128xf32>
    %51 = arith.select %48, %46, %50 : vector<1x16x128xi1>, vector<1x16x128xf32>
    %52 = vector.broadcast %9 : f32 to vector<1x16x128xf32>
    %53 = arith.mulf %51, %52 : vector<1x16x128xf32>
    %54 = arith.truncf %53 : vector<1x16x128xf32> to vector<1x16x128xbf16>
    %55 = tpu.concatenate %24, %39, %54 in 0 : vector<1x16x128xbf16>, vector<8x16x128xbf16>, vector<1x16x128xbf16> -> vector<10x16x128xbf16>
    %cst_24 = arith.constant 0.000000e+00 : bf16
    %56 = vector.broadcast %cst_24 : bf16 to vector<10x1x128xbf16>
    %57 = tpu.concatenate %56, %55, %56 in 1 : vector<10x1x128xbf16>, vector<10x16x128xbf16>, vector<10x1x128xbf16> -> vector<10x18x128xbf16>
    %cst_25 = arith.constant 0.000000e+00 : f32
    %58 = vector.broadcast %cst_25 : f32 to vector<128x128xf32>
    %59 = vector.extract_strided_slice %57 {offsets = [0, 0, 0], sizes = [8, 16, 128], strides = [1, 1, 1]} : vector<10x18x128xbf16> to vector<8x16x128xbf16>
    %60 = vector.extract_strided_slice %57 {offsets = [0, 1, 0], sizes = [8, 16, 128], strides = [1, 1, 1]} : vector<10x18x128xbf16> to vector<8x16x128xbf16>
    %61 = vector.extract_strided_slice %57 {offsets = [0, 2, 0], sizes = [8, 16, 128], strides = [1, 1, 1]} : vector<10x18x128xbf16> to vector<8x16x128xbf16>
    %62 = tpu.concatenate %59, %60, %61 in 2 : vector<8x16x128xbf16>, vector<8x16x128xbf16>, vector<8x16x128xbf16> -> vector<8x16x384xbf16>
    %63 = vector.shape_cast %62 : vector<8x16x384xbf16> to vector<128x384xbf16>
    %c0_26 = arith.constant 0 : index
    %c0_27 = arith.constant 0 : index
    %c0_28 = arith.constant 0 : index
    %64 = vector.load %arg8[%c0_26, %c0_27, %c0_28] : memref<3x384x128xbf16, #tpu.memory_space<vmem>>, vector<1x384x128xbf16>
    %65 = vector.shape_cast %64 : vector<1x384x128xbf16> to vector<384x128xbf16>
    %cst_29 = arith.constant dense<0.000000e+00> : vector<128x128xf32>
    %66 = tpu.matmul %63, %65, %cst_29 {dimension_numbers = #tpu.dot_dimension_numbers<[1], [0], [0], [1], [0, 0, 1, 1], [], []>} : vector<128x384xbf16>, vector<384x128xbf16>, vector<128x128xf32> -> vector<128x128xf32>
    %67 = arith.addf %58, %66 : vector<128x128xf32>
    %68 = vector.extract_strided_slice %57 {offsets = [1, 0, 0], sizes = [8, 16, 128], strides = [1, 1, 1]} : vector<10x18x128xbf16> to vector<8x16x128xbf16>
    %69 = vector.extract_strided_slice %57 {offsets = [1, 1, 0], sizes = [8, 16, 128], strides = [1, 1, 1]} : vector<10x18x128xbf16> to vector<8x16x128xbf16>
    %70 = vector.extract_strided_slice %57 {offsets = [1, 2, 0], sizes = [8, 16, 128], strides = [1, 1, 1]} : vector<10x18x128xbf16> to vector<8x16x128xbf16>
    %71 = tpu.concatenate %68, %69, %70 in 2 : vector<8x16x128xbf16>, vector<8x16x128xbf16>, vector<8x16x128xbf16> -> vector<8x16x384xbf16>
    %72 = vector.shape_cast %71 : vector<8x16x384xbf16> to vector<128x384xbf16>
    %c1 = arith.constant 1 : index
    %c0_30 = arith.constant 0 : index
    %c0_31 = arith.constant 0 : index
    %73 = vector.load %arg8[%c1, %c0_30, %c0_31] : memref<3x384x128xbf16, #tpu.memory_space<vmem>>, vector<1x384x128xbf16>
    %74 = vector.shape_cast %73 : vector<1x384x128xbf16> to vector<384x128xbf16>
    %cst_32 = arith.constant dense<0.000000e+00> : vector<128x128xf32>
    %75 = tpu.matmul %72, %74, %cst_32 {dimension_numbers = #tpu.dot_dimension_numbers<[1], [0], [0], [1], [0, 0, 1, 1], [], []>} : vector<128x384xbf16>, vector<384x128xbf16>, vector<128x128xf32> -> vector<128x128xf32>
    %76 = arith.addf %67, %75 : vector<128x128xf32>
    %77 = vector.extract_strided_slice %57 {offsets = [2, 0, 0], sizes = [8, 16, 128], strides = [1, 1, 1]} : vector<10x18x128xbf16> to vector<8x16x128xbf16>
    %78 = vector.extract_strided_slice %57 {offsets = [2, 1, 0], sizes = [8, 16, 128], strides = [1, 1, 1]} : vector<10x18x128xbf16> to vector<8x16x128xbf16>
    %79 = vector.extract_strided_slice %57 {offsets = [2, 2, 0], sizes = [8, 16, 128], strides = [1, 1, 1]} : vector<10x18x128xbf16> to vector<8x16x128xbf16>
    %80 = tpu.concatenate %77, %78, %79 in 2 : vector<8x16x128xbf16>, vector<8x16x128xbf16>, vector<8x16x128xbf16> -> vector<8x16x384xbf16>
    %81 = vector.shape_cast %80 : vector<8x16x384xbf16> to vector<128x384xbf16>
    %c2 = arith.constant 2 : index
    %c0_33 = arith.constant 0 : index
    %c0_34 = arith.constant 0 : index
    %82 = vector.load %arg8[%c2, %c0_33, %c0_34] : memref<3x384x128xbf16, #tpu.memory_space<vmem>>, vector<1x384x128xbf16>
    %83 = vector.shape_cast %82 : vector<1x384x128xbf16> to vector<384x128xbf16>
    %cst_35 = arith.constant dense<0.000000e+00> : vector<128x128xf32>
    %84 = tpu.matmul %81, %83, %cst_35 {dimension_numbers = #tpu.dot_dimension_numbers<[1], [0], [0], [1], [0, 0, 1, 1], [], []>} : vector<128x384xbf16>, vector<384x128xbf16>, vector<128x128xf32> -> vector<128x128xf32>
    %85 = arith.addf %76, %84 : vector<128x128xf32>
    %c0_36 = arith.constant 0 : index
    %c0_37 = arith.constant 0 : index
    %86 = vector.load %arg9[%c0_36, %c0_37] : memref<1x128xf32, #tpu.memory_space<vmem>>, vector<1x128xf32>
    %87 = vector.broadcast %86 : vector<1x128xf32> to vector<128x128xf32>
    %88 = arith.addf %85, %87 : vector<128x128xf32>
    %89 = vector.shape_cast %88 : vector<128x128xf32> to vector<8x16x128xf32>
    %90 = arith.truncf %89 : vector<8x16x128xf32> to vector<8x16x128xbf16>
    %c0_38 = arith.constant 0 : index
    %c0_39 = arith.constant 0 : index
    %c0_40 = arith.constant 0 : index
    %c0_41 = arith.constant 0 : index
    %91 = vector.load %arg10[%c0_38, %c0_39, %c0_40, %c0_41] : memref<1x8x16x128xbf16, #tpu.memory_space<vmem>>, vector<1x8x16x128xbf16>
    %92 = vector.shape_cast %91 : vector<1x8x16x128xbf16> to vector<8x16x128xbf16>
    %93 = vector.shape_cast %90 : vector<8x16x128xbf16> to vector<1x8x16x128xbf16>
    tpu.vector_store %arg10[%c0_38, %c0_39, %c0_40, %c0_41], %93 {strides = array<i32>} : memref<1x8x16x128xbf16, #tpu.memory_space<vmem>>, vector<1x8x16x128xbf16>,
    %cst_42 = arith.constant dense<0.000000e+00> : vector<128xf32>
    %94 = vector.multi_reduction <add>, %88, %cst_42 [0] : vector<128x128xf32> to vector<128xf32>
    %95 = vector.shape_cast %94 : vector<128xf32> to vector<1x128xf32>
    %c0_43 = arith.constant 0 : index
    %c0_44 = arith.constant 0 : index
    %c0_45 = arith.constant 0 : index
    %c0_46 = arith.constant 0 : index
    %96 = vector.load %arg11[%c0_43, %c0_44, %c0_45, %c0_46] : memref<1x1x2x128xf32, #tpu.memory_space<vmem>>, vector<1x1x1x128xf32>
    %97 = vector.shape_cast %96 : vector<1x1x1x128xf32> to vector<1x128xf32>
    %98 = vector.shape_cast %95 : vector<1x128xf32> to vector<1x1x1x128xf32>
    tpu.vector_store %arg11[%c0_43, %c0_44, %c0_45, %c0_46], %98 {strides = array<i32>} : memref<1x1x2x128xf32, #tpu.memory_space<vmem>>, vector<1x1x1x128xf32>,
    %99 = arith.mulf %88, %88 : vector<128x128xf32>
    %cst_47 = arith.constant dense<0.000000e+00> : vector<128xf32>
    %100 = vector.multi_reduction <add>, %99, %cst_47 [0] : vector<128x128xf32> to vector<128xf32>
    %101 = vector.shape_cast %100 : vector<128xf32> to vector<1x128xf32>
    %c0_48 = arith.constant 0 : index
    %c0_49 = arith.constant 0 : index
    %c1_50 = arith.constant 1 : index
    %c0_51 = arith.constant 0 : index
    %102 = vector.load %arg11[%c0_48, %c0_49, %c1_50, %c0_51] : memref<1x1x2x128xf32, #tpu.memory_space<vmem>>, vector<1x1x1x128xf32>
    %103 = vector.shape_cast %102 : vector<1x1x1x128xf32> to vector<1x128xf32>
    %104 = vector.shape_cast %101 : vector<1x128xf32> to vector<1x1x1x128xf32>
    tpu.vector_store %arg11[%c0_48, %c0_49, %c1_50, %c0_51], %104 {strides = array<i32>} : memref<1x1x2x128xf32, #tpu.memory_space<vmem>>, vector<1x1x1x128xf32>,
    return
  }
  func.func @transform_0(%arg0: i32, %arg1: i32) -> (i32, i32, i32, i32) {
    %c8_i32 = arith.constant 8 : i32
    %0 = arith.muli %arg1, %c8_i32 : i32
    %c1_i32 = arith.constant 1 : i32
    %1 = arith.subi %0, %c1_i32 : i32
    %c0_i32 = arith.constant 0 : i32
    %2 = arith.maxsi %1, %c0_i32 : i32
    %c0_i32_0 = arith.constant 0 : i32
    %c0_i32_1 = arith.constant 0 : i32
    %c0_i32_2 = arith.constant 0 : i32
    return %arg0, %2, %c0_i32_0, %c0_i32_1 : i32, i32, i32, i32
  }
  func.func @transform_1(%arg0: i32, %arg1: i32) -> (i32, i32, i32, i32) {
    %c0_i32 = arith.constant 0 : i32
    %c0_i32_0 = arith.constant 0 : i32
    %c0_i32_1 = arith.constant 0 : i32
    return %arg0, %arg1, %c0_i32, %c0_i32_0 : i32, i32, i32, i32
  }
  func.func @transform_2(%arg0: i32, %arg1: i32) -> (i32, i32, i32, i32) {
    %c8_i32 = arith.constant 8 : i32
    %0 = arith.muli %arg1, %c8_i32 : i32
    %c8_i32_0 = arith.constant 8 : i32
    %1 = arith.addi %0, %c8_i32_0 : i32
    %c15_i32 = arith.constant 15 : i32
    %2 = arith.minsi %1, %c15_i32 : i32
    %c0_i32 = arith.constant 0 : i32
    %c0_i32_1 = arith.constant 0 : i32
    %c0_i32_2 = arith.constant 0 : i32
    return %arg0, %2, %c0_i32, %c0_i32_1 : i32, i32, i32, i32
  }
  func.func @transform_3(%arg0: i32, %arg1: i32) -> (i32, i32) {
    %c0_i32 = arith.constant 0 : i32
    %c0_i32_0 = arith.constant 0 : i32
    %c0_i32_1 = arith.constant 0 : i32
    return %c0_i32, %c0_i32_0 : i32, i32
  }
  func.func @transform_4(%arg0: i32, %arg1: i32) -> (i32, i32) {
    %c0_i32 = arith.constant 0 : i32
    %c0_i32_0 = arith.constant 0 : i32
    %c0_i32_1 = arith.constant 0 : i32
    return %c0_i32, %c0_i32_0 : i32, i32
  }
  func.func @transform_5(%arg0: i32, %arg1: i32) -> (i32, i32) {
    %c0_i32 = arith.constant 0 : i32
    %c0_i32_0 = arith.constant 0 : i32
    %c0_i32_1 = arith.constant 0 : i32
    return %c0_i32, %c0_i32_0 : i32, i32
  }
  func.func @transform_6(%arg0: i32, %arg1: i32) -> (i32, i32, i32) {
    %c0_i32 = arith.constant 0 : i32
    %c0_i32_0 = arith.constant 0 : i32
    %c0_i32_1 = arith.constant 0 : i32
    %c0_i32_2 = arith.constant 0 : i32
    return %c0_i32, %c0_i32_0, %c0_i32_1 : i32, i32, i32
  }
  func.func @transform_7(%arg0: i32, %arg1: i32) -> (i32, i32) {
    %c0_i32 = arith.constant 0 : i32
    %c0_i32_0 = arith.constant 0 : i32
    %c0_i32_1 = arith.constant 0 : i32
    return %c0_i32, %c0_i32_0 : i32, i32
  }
  func.func @transform_8(%arg0: i32, %arg1: i32) -> (i32, i32, i32, i32) {
    %c0_i32 = arith.constant 0 : i32
    %c0_i32_0 = arith.constant 0 : i32
    %c0_i32_1 = arith.constant 0 : i32
    return %arg0, %arg1, %c0_i32, %c0_i32_0 : i32, i32, i32, i32
  }
  func.func @transform_9(%arg0: i32, %arg1: i32) -> (i32, i32, i32, i32) {
    %c0_i32 = arith.constant 0 : i32
    %c0_i32_0 = arith.constant 0 : i32
    %c0_i32_1 = arith.constant 0 : i32
    return %arg0, %arg1, %c0_i32, %c0_i32_0 : i32, i32, i32, i32
  }
}

</mosaic_0001>

<llo_original>
// kernel: residual_block.5
$region0: #{residual_block.5}
  #allocation0 [shape = 'u32[]', space=smem, size = 0x4, offset = 0x4, fixed_abs, tag = 'smem constant byte address 0x4 - core index']
  #allocation1 [shape = 'u32[144,128]{1,0:T(1,128)}', space=vmem, size = 0x12000, scoped, tag = 'internal scratch']
  %s0 = inlined_call_operand.vmem [shape: f32[2,16,16,128], index: 0, kind: input, shape index: {}, may-alias: {0,4}]
  %s1 = inlined_call_operand.vmem [shape: bf16[2,16,16,128], index: 1, kind: input, shape index: {}]
  %s2 = inlined_call_operand.vmem [shape: f32[1,128], index: 2, kind: input, shape index: {}]
  %s3 = inlined_call_operand.vmem [shape: f32[1,128], index: 3, kind: input, shape index: {}]
  %s4 = inlined_call_operand.vmem [shape: f32[2,16,16,128], index: 4, kind: output, shape index: {}, may-alias: {0,4}]
  %s5 = sld [smem:[#allocation0]]
  $region49: #{residual_block.5} parent=0
    _
  %s7 = ssub.s32 1, %s5
  %s8 = scalar_select 0, %s7, %s5
  loop: start=0, step=1, limit=6
  $region2: #{residual_block.5} parent=0 // loop_pre_header
    _
  $region3: #{residual_block.5} parent=0 // loop_header
    %s10 = sphi 0, %s14
    %p11 = scmp.ge.s32.totalorder %s10, 6
    %s17 = sphi 0, %s29
    %s18 = sphi 0, %s25
    %s19 = sphi 0, %s17
    %s20 = sphi 0, %s18
    %s21 = sphi 0, %s19
    %s22 = sphi 0, %s20
    %s34 = sphi 0, %s36
    %s37 = sphi 0, %s34
    %s38 = sphi 0, %s37
    %s54 = sphi 0, %s38
    %s62 = sphi 0, %s64
    %s65 = sphi 0, %s62
    %s66 = sphi 0, %s65
    %s82 = sphi 0, %s66
    %s86 = sphi 0, %s86
    %s88 = sphi 0, %s86
    %s89 = sphi 0, %s88
    %s103 = sphi 0, %s89
    %s107 = sphi 0, %s107
    %s109 = sphi 0, %s107
    %s110 = sphi 0, %s109
    %s124 = sphi 0, %s110
    %s132 = sphi 0, %s134
    %s135 = sphi 0, %s132
    %s136 = sphi 0, %s135
    %s152 = sphi 0, %s136
  $region4: #{residual_block.5} parent=0 // loop_header_branch
    %13 = sbr.rel (%p11) target = $region8
  $region5: #{residual_block.5} parent=0 // loop_body
    %s15 = ssub.s32 %s10, 1
    %s16 = ssub.s32 %s10, 2
    %s23 = sadd.s32 1, %s18
    %p24 = scmp.ge.s32.totalorder %s23, 2
    %s25 = scalar_select %p24, 0, %s23
    %s26 = sadd.s32 1, %s17
    %s27 = scalar_select %p24, %s26, %s17
    %p28 = scmp.ge.s32.totalorder %s27, 2
    %s29 = scalar_select %p28, 0, %s27
    %s30 = ssub.s32 %s17, %s29
    %s31 = ssub.s32 %s18, %s25
    %s32 = sor.u32 %s30, %s31
    %p33 = scmp.eq.s32.totalorder %s32, 0
    %s35 = sadd.s32 %s34, 1
    %s36 = scalar_select %p33, %s34, %s35
    %p39 = pneg %p33
    %p40 = scmp.eq.s32.totalorder %s10, 3
    %p41 = por %p39, %p40
    %p42 = scmp.ne.s32.totalorder %s34, %s37
    %p43 = scmp.eq.s32.totalorder %s10, 0
    %p44 = por %p42, %p43
    %p45 = scmp.ne.s32.totalorder %s34, %s37
    %p46 = scmp.eq.s32.totalorder %s15, 3
    %p47 = por %p45, %p46
    %p48 = scmp.ne.s32.totalorder %s37, %s38
    %p49 = scmp.eq.s32.totalorder %s15, 0
    %p50 = por %p48, %p49
    %p51 = scmp.ne.s32.totalorder %s37, %s38
    %p52 = scmp.eq.s32.totalorder %s16, 3
    %p53 = por %p51, %p52
    %p55 = scmp.ne.s32.totalorder %s38, %s54
    %p56 = scmp.eq.s32.totalorder %s16, 0
    %p57 = por %p55, %p56
    %s58 = ssub.s32 %s17, %s29
    %s59 = ssub.s32 %s18, %s25
    %s60 = sor.u32 %s58, %s59
    %p61 = scmp.eq.s32.totalorder %s60, 0
    %s63 = sadd.s32 %s62, 1
    %s64 = scalar_select %p61, %s62, %s63
    %p67 = pneg %p61
    %p68 = scmp.eq.s32.totalorder %s10, 3
    %p69 = por %p67, %p68
    %p70 = scmp.ne.s32.totalorder %s62, %s65
    %p71 = scmp.eq.s32.totalorder %s10, 0
    %p72 = por %p70, %p71
    %p73 = scmp.ne.s32.totalorder %s62, %s65
    %p74 = scmp.eq.s32.totalorder %s15, 3
    %p75 = por %p73, %p74
    %p76 = scmp.ne.s32.totalorder %s65, %s66
    %p77 = scmp.eq.s32.totalorder %s15, 0
    %p78 = por %p76, %p77
    %p79 = scmp.ne.s32.totalorder %s65, %s66
    %p80 = scmp.eq.s32.totalorder %s16, 3
    %p81 = por %p79, %p80
    %p83 = scmp.ne.s32.totalorder %s66, %s82
    %p84 = scmp.eq.s32.totalorder %s16, 0
    %p85 = por %p83, %p84
    %s87 = sadd.s32 %s86, 1
    %p90 = scmp.eq.s32.totalorder %s10, 3
    %p91 = scmp.ne.s32.totalorder %s86, %s88
    %p92 = scmp.eq.s32.totalorder %s10, 0
    %p93 = por %p91, %p92
    %p94 = scmp.ne.s32.totalorder %s86, %s88
    %p95 = scmp.eq.s32.totalorder %s15, 3
    %p96 = por %p94, %p95
    %p97 = scmp.ne.s32.totalorder %s88, %s89
    %p98 = scmp.eq.s32.totalorder %s15, 0
    %p99 = por %p97, %p98
    %p100 = scmp.ne.s32.totalorder %s88, %s89
    %p101 = scmp.eq.s32.totalorder %s16, 3
    %p102 = por %p100, %p101
    %p104 = scmp.ne.s32.totalorder %s89, %s103
    %p105 = scmp.eq.s32.totalorder %s16, 0
    %p106 = por %p104, %p105
    %s108 = sadd.s32 %s107, 1
    %p111 = scmp.eq.s32.totalorder %s10, 3
    %p112 = scmp.ne.s32.totalorder %s107, %s109
    %p113 = scmp.eq.s32.totalorder %s10, 0
    %p114 = por %p112, %p113
    %p115 = scmp.ne.s32.totalorder %s107, %s109
    %p116 = scmp.eq.s32.totalorder %s15, 3
    %p117 = por %p115, %p116
    %p118 = scmp.ne.s32.totalorder %s109, %s110
    %p119 = scmp.eq.s32.totalorder %s15, 0
    %p120 = por %p118, %p119
    %p121 = scmp.ne.s32.totalorder %s109, %s110
    %p122 = scmp.eq.s32.totalorder %s16, 3
    %p123 = por %p121, %p122
    %p125 = scmp.ne.s32.totalorder %s110, %s124
    %p126 = scmp.eq.s32.totalorder %s16, 0
    %p127 = por %p125, %p126
    %s128 = ssub.s32 %s17, %s29
    %s129 = ssub.s32 %s18, %s25
    %s130 = sor.u32 %s128, %s129
    %p131 = scmp.eq.s32.totalorder %s130, 0
    %s133 = sadd.s32 %s132, 1
    %s134 = scalar_select %p131, %s132, %s133
    %p137 = pneg %p131
    %p138 = scmp.eq.s32.totalorder %s10, 3
    %p139 = por %p137, %p138
    %p140 = scmp.ne.s32.totalorder %s132, %s135
    %p141 = scmp.eq.s32.totalorder %s10, 0
    %p142 = por %p140, %p141
    %p143 = scmp.ne.s32.totalorder %s132, %s135
    %p144 = scmp.eq.s32.totalorder %s15, 3
    %p145 = por %p143, %p144
    %p146 = scmp.ne.s32.totalorder %s135, %s136
    %p147 = scmp.eq.s32.totalorder %s15, 0
    %p148 = por %p146, %p147
    %p149 = scmp.ne.s32.totalorder %s135, %s136
    %p150 = scmp.eq.s32.totalorder %s16, 3
    %p151 = por %p149, %p150
    %p153 = scmp.ne.s32.totalorder %s136, %s152
    %p154 = scmp.eq.s32.totalorder %s16, 0
    %p155 = por %p153, %p154
    %p156 = scmp.le.s32.totalorder 1, %s10
    %p157 = scmp.lt.s32.totalorder %s10, 5
    %p158 = pnand %p156, %p157
    %p159 = pneg %p158
    // Predicated region
    $region9: #{residual_block.5} parent=5 // pred_check
      _
    $region10: #{residual_block.5} parent=5 // pred_check_branch
      %161 = sbr.rel (%p158) target = $region12
    $region11: #{residual_block.5} parent=5 // pred_region
      %s162 = ssub.s32 %s10, 1
      // Predicated region
      $region13: #{residual_block.5} parent=11 // pred_check
        %p163 = pneg %p99
      $region14: #{residual_block.5} parent=11 // pred_check_branch
        %165 = sbr.rel (%p163) target = $region16
      $region15: #{residual_block.5} parent=11 // pred_region
        _
      $region16: #{residual_block.5} parent=11 // pred_fallthru
        _
      // Predicated region
      $region17: #{residual_block.5} parent=11 // pred_check
        %p166 = pneg %p120
      $region18: #{residual_block.5} parent=11 // pred_check_branch
        %168 = sbr.rel (%p166) target = $region20
      $region19: #{residual_block.5} parent=11 // pred_region
        _
      $region20: #{residual_block.5} parent=11 // pred_fallthru
        _
    $region12: #{residual_block.5} parent=5 // pred_fallthru
      _
    %p169 = scmp.lt.s32.totalorder %s10, 4
    // Predicated region
    $region21: #{residual_block.5} parent=5 // pred_check
      %p170 = pneg %p169
    $region22: #{residual_block.5} parent=5 // pred_check_branch
      %172 = sbr.rel (%p170) target = $region24
    $region23: #{residual_block.5} parent=5 // pred_region
      // Predicated region
      $region25: #{residual_block.5} parent=23 // pred_check
        %p173 = pneg %p44
      $region26: #{residual_block.5} parent=23 // pred_check_branch
        %175 = sbr.rel (%p173) target = $region28
      $region27: #{residual_block.5} parent=23 // pred_region
        %s176 = smul.u32 8, %s18
        %p177 = scmp.lt.s32.totalorder %s17, 1
        %s178 = scalar_select %p177, %s17, 1
        %p179 = scmp.lt.s32.totalorder %s176, 15
        %s180 = scalar_select %p179, %s176, 15
        %s181 = smul.addr %s180, 2
        %s182 = smul.addr %s178, 32
        %s183 = sadd.s32 %s181, %s182
        %s184 = smul.addr %s183, 8
        %s185 = scalar_lea.vmem %s0, %s184
        %s186 = smul.u32 8, %s18
      $region28: #{residual_block.5} parent=23 // pred_fallthru
        _
      // Predicated region
      $region29: #{residual_block.5} parent=23 // pred_check
        %p187 = pneg %p72
      $region30: #{residual_block.5} parent=23 // pred_check_branch
        %189 = sbr.rel (%p187) target = $region32
      $region31: #{residual_block.5} parent=23 // pred_region
        %s190 = smul.u32 8, %s18
        %p191 = scmp.lt.s32.totalorder %s17, 1
        %s192 = scalar_select %p191, %s17, 1
        %p193 = scmp.lt.s32.totalorder %s190, 15
        %s194 = scalar_select %p193, %s190, 15
        %s195 = smul.addr %s194, 2
        %s196 = smul.addr %s192, 32
        %s197 = sadd.s32 %s195, %s196
        %s198 = smul.addr %s197, 4
        %s199 = scalar_lea.vmem %s1, %s198
        %s200 = smul.u32 8, %s18
      $region32: #{residual_block.5} parent=23 // pred_fallthru
        _
    $region24: #{residual_block.5} parent=5 // pred_fallthru
      _
    %p201 = scmp.le.s32.totalorder 1, %s10
    %p202 = scmp.lt.s32.totalorder %s10, 5
    %p203 = pnand %p201, %p202
    %p204 = pneg %p203
    // Predicated region
    $region33: #{residual_block.5} parent=5 // pred_check
      _
    $region34: #{residual_block.5} parent=5 // pred_check_branch
      %206 = sbr.rel (%p203) target = $region36
    $region35: #{residual_block.5} parent=5 // pred_region
      %s207 = ssub.s32 %s10, 1
      %s208 = smul.u32 8, %s20
      %p209 = scmp.lt.s32.totalorder %s19, 1
      %s210 = scalar_select %p209, %s19, 1
      %p211 = scmp.lt.s32.totalorder %s208, 15
      %s212 = scalar_select %p211, %s208, 15
      %s213 = smul.addr %s212, 2
      %s214 = smul.addr %s210, 32
      %s215 = sadd.s32 %s213, %s214
      %s216 = smul.addr %s215, 8
      %s217 = scalar_lea.vmem %s0, %s216
      %p218 = pneg %p50
      %p219 = pneg %p47
      %s220 = smul.u32 8, %s20
      %p221 = scmp.lt.s32.totalorder %s19, 1
      %s222 = scalar_select %p221, %s19, 1
      %p223 = scmp.lt.s32.totalorder %s220, 15
      %s224 = scalar_select %p223, %s220, 15
      %s225 = smul.addr %s224, 2
      %s226 = smul.addr %s222, 32
      %s227 = sadd.s32 %s225, %s226
      %s228 = smul.addr %s227, 4
      %s229 = scalar_lea.vmem %s1, %s228
      %p230 = pneg %p78
      %p231 = pneg %p75
      %p232 = pneg %p99
      %p233 = pneg %p96
      %p234 = pneg %p120
      %p235 = pneg %p117
      %p236 = pneg %p148
      %p237 = pneg %p145
      %s238 = smul.u32 8, %s20
      %p239 = scmp.lt.s32.totalorder %s19, 1
      %s240 = scalar_select %p239, %s19, 1
      %p241 = scmp.lt.s32.totalorder %s238, 15
      %s242 = scalar_select %p241, %s238, 15
      %s243 = smul.addr %s242, 2
      %s244 = smul.addr %s240, 32
      %s245 = sadd.s32 %s243, %s244
      %s246 = smul.addr %s245, 8
      %s247 = scalar_lea.vmem %s4, %s246
      %s248 = smul.u32 8, %s20
      %p249 = scmp.lt.s32.totalorder %s19, 1
      %s250 = scalar_select %p249, %s19, 1
      %p251 = scmp.lt.s32.totalorder %s248, 15
      %s252 = scalar_select %p251, %s248, 15
      %s253 = smul.addr %s252, 2
      %s254 = smul.addr %s250, 32
      %s255 = sadd.s32 %s253, %s254
      %s256 = smul.addr %s255, 8
      %s257 = scalar_lea.vmem %s0, %s256
      %s258 = smul.u32 8, %s20
      %s259 = smul.u32 8, %s20
      %p260 = scmp.lt.s32.totalorder %s19, 1
      %s261 = scalar_select %p260, %s19, 1
      %p262 = scmp.lt.s32.totalorder %s259, 15
      %s263 = scalar_select %p262, %s259, 15
      %s264 = smul.addr %s263, 2
      %s265 = smul.addr %s261, 32
      %s266 = sadd.s32 %s264, %s265
      %s267 = smul.addr %s266, 4
      %s268 = scalar_lea.vmem %s1, %s267
      %s269 = smul.u32 8, %s20
      %s270 = smul.u32 8, %s20
      %p271 = scmp.lt.s32.totalorder %s19, 1
      %s272 = scalar_select %p271, %s19, 1
      %p273 = scmp.lt.s32.totalorder %s270, 15
      %s274 = scalar_select %p273, %s270, 15
      %s275 = smul.addr %s274, 2
      %s276 = smul.addr %s272, 32
      %s277 = sadd.s32 %s275, %s276
      %s278 = smul.addr %s277, 8
      %s279 = scalar_lea.vmem %s4, %s278
      %s280 = smul.u32 8, %s20
      %v281 = vld [vmem:[%s257] sm:$0xff]
      %v282 = vld [vmem:[%s257 + $0x8] sm:$0xff]
      %v283 = vld [vmem:[%s257 + $0x10] sm:$0xff]
      %v284 = vld [vmem:[%s257 + $0x18] sm:$0xff]
      %v285 = vld [vmem:[%s257 + $0x20] sm:$0xff]
      %v286 = vld [vmem:[%s257 + $0x28] sm:$0xff]
      %v287 = vld [vmem:[%s257 + $0x30] sm:$0xff]
      %v288 = vld [vmem:[%s257 + $0x38] sm:$0xff]
      %v289 = vld [vmem:[%s257 + $0x40] sm:$0xff]
      %v290 = vld [vmem:[%s257 + $0x48] sm:$0xff]
      %v291 = vld [vmem:[%s257 + $0x50] sm:$0xff]
      %v292 = vld [vmem:[%s257 + $0x58] sm:$0xff]
      %v293 = vld [vmem:[%s257 + $0x60] sm:$0xff]
      %v294 = vld [vmem:[%s257 + $0x68] sm:$0xff]
      %v295 = vld [vmem:[%s257 + $0x70] sm:$0xff]
      %v296 = vld [vmem:[%s257 + $0x78] sm:$0xff]
      %v297 = vld [vmem:[%s268] sm:$0xf]
      %v298 = vld [vmem:[%s268 + $0x4] sm:$0xf]
      %v299 = vld [vmem:[%s268 + $0x8] sm:$0xf]
      %v300 = vld [vmem:[%s268 + $0xc] sm:$0xf]
      %v301 = vld [vmem:[%s268 + $0x10] sm:$0xf]
      %v302 = vld [vmem:[%s268 + $0x14] sm:$0xf]
      %v303 = vld [vmem:[%s268 + $0x18] sm:$0xf]
      %v304 = vld [vmem:[%s268 + $0x1c] sm:$0xf]
      %v305 = vld [vmem:[%s268 + $0x20] sm:$0xf]
      %v306 = vld [vmem:[%s268 + $0x24] sm:$0xf]
      %v307 = vld [vmem:[%s268 + $0x28] sm:$0xf]
      %v308 = vld [vmem:[%s268 + $0x2c] sm:$0xf]
      %v309 = vld [vmem:[%s268 + $0x30] sm:$0xf]
      %v310 = vld [vmem:[%s268 + $0x34] sm:$0xf]
      %v311 = vld [vmem:[%s268 + $0x38] sm:$0xf]
      %v312 = vld [vmem:[%s268 + $0x3c] sm:$0xf]
      %v313 = vunpack.c.l.bf16 %v297
      %v314 = vunpack.c.l.bf16 %v298
      %v315 = vunpack.c.l.bf16 %v299
      %v316 = vunpack.c.l.bf16 %v300
      %v317 = vunpack.c.l.bf16 %v301
      %v318 = vunpack.c.l.bf16 %v302
      %v319 = vunpack.c.l.bf16 %v303
      %v320 = vunpack.c.l.bf16 %v304
      %v321 = vunpack.c.l.bf16 %v305
      %v322 = vunpack.c.l.bf16 %v306
      %v323 = vunpack.c.l.bf16 %v307
      %v324 = vunpack.c.l.bf16 %v308
      %v325 = vunpack.c.l.bf16 %v309
      %v326 = vunpack.c.l.bf16 %v310
      %v327 = vunpack.c.l.bf16 %v311
      %v328 = vunpack.c.l.bf16 %v312
      %v329 = vld [vmem:[%s2] sm:$0x1]
      %v331 = vlaneseq
      %v332 = vshrl.u32 %v331, 7
      %v333 = vsub.s32 0, %v332
      %v334 = vrot.slane %v329, %v333
      %v336 = vmul.f32 %v313, %v334
      %v337 = vmul.f32 %v314, %v334
      %v338 = vmul.f32 %v315, %v334
      %v339 = vmul.f32 %v316, %v334
      %v340 = vmul.f32 %v317, %v334
      %v341 = vmul.f32 %v318, %v334
      %v342 = vmul.f32 %v319, %v334
      %v343 = vmul.f32 %v320, %v334
      %v344 = vmul.f32 %v321, %v334
      %v345 = vmul.f32 %v322, %v334
      %v346 = vmul.f32 %v323, %v334
      %v347 = vmul.f32 %v324, %v334
      %v348 = vmul.f32 %v325, %v334
      %v349 = vmul.f32 %v326, %v334
      %v350 = vmul.f32 %v327, %v334
      %v351 = vmul.f32 %v328, %v334
      %v352 = vadd.f32 %v281, %v336
      %v353 = vadd.f32 %v282, %v337
      %v354 = vadd.f32 %v283, %v338
      %v355 = vadd.f32 %v284, %v339
      %v356 = vadd.f32 %v285, %v340
      %v357 = vadd.f32 %v286, %v341
      %v358 = vadd.f32 %v287, %v342
      %v359 = vadd.f32 %v288, %v343
      %v360 = vadd.f32 %v289, %v344
      %v361 = vadd.f32 %v290, %v345
      %v362 = vadd.f32 %v291, %v346
      %v363 = vadd.f32 %v292, %v347
      %v364 = vadd.f32 %v293, %v348
      %v365 = vadd.f32 %v294, %v349
      %v366 = vadd.f32 %v295, %v350
      %v367 = vadd.f32 %v296, %v351
      %v368 = vld [vmem:[%s3] sm:$0x1]
      %v370 = vlaneseq
      %v371 = vshrl.u32 %v370, 7
      %v372 = vsub.s32 0, %v371
      %v373 = vrot.slane %v368, %v372
      %v375 = vadd.f32 %v352, %v373
      %v376 = vadd.f32 %v353, %v373
      %v377 = vadd.f32 %v354, %v373
      %v378 = vadd.f32 %v355, %v373
      %v379 = vadd.f32 %v356, %v373
      %v380 = vadd.f32 %v357, %v373
      %v381 = vadd.f32 %v358, %v373
      %v382 = vadd.f32 %v359, %v373
      %v383 = vadd.f32 %v360, %v373
      %v384 = vadd.f32 %v361, %v373
      %v385 = vadd.f32 %v362, %v373
      %v386 = vadd.f32 %v363, %v373
      %v387 = vadd.f32 %v364, %v373
      %v388 = vadd.f32 %v365, %v373
      %v389 = vadd.f32 %v366, %v373
      %v390 = vadd.f32 %v367, %v373
      %391 = vst [vmem:[%s279] sm:$0xff] %v375
      %392 = vst [vmem:[%s279 + $0x8] sm:$0xff] %v376
      %393 = vst [vmem:[%s279 + $0x10] sm:$0xff] %v377
      %394 = vst [vmem:[%s279 + $0x18] sm:$0xff] %v378
      %395 = vst [vmem:[%s279 + $0x20] sm:$0xff] %v379
      %396 = vst [vmem:[%s279 + $0x28] sm:$0xff] %v380
      %397 = vst [vmem:[%s279 + $0x30] sm:$0xff] %v381
      %398 = vst [vmem:[%s279 + $0x38] sm:$0xff] %v382
      %399 = vst [vmem:[%s279 + $0x40] sm:$0xff] %v383
      %400 = vst [vmem:[%s279 + $0x48] sm:$0xff] %v384
      %401 = vst [vmem:[%s279 + $0x50] sm:$0xff] %v385
      %402 = vst [vmem:[%s279 + $0x58] sm:$0xff] %v386
      %403 = vst [vmem:[%s279 + $0x60] sm:$0xff] %v387
      %404 = vst [vmem:[%s279 + $0x68] sm:$0xff] %v388
      %405 = vst [vmem:[%s279 + $0x70] sm:$0xff] %v389
      %406 = vst [vmem:[%s279 + $0x78] sm:$0xff] %v390
      %s407 = smul.u32 8, %s20
      %p408 = scmp.lt.s32.totalorder %s19, 1
      %s409 = scalar_select %p408, %s19, 1
      %p410 = scmp.lt.s32.totalorder %s407, 15
      %s411 = scalar_select %p410, %s407, 15
      %s412 = smul.addr %s411, 2
      %s413 = smul.addr %s409, 32
      %s414 = sadd.s32 %s412, %s413
      %s415 = smul.addr %s414, 8
      %s416 = scalar_lea.vmem %s4, %s415
      // Predicated region
      $region37: #{residual_block.5} parent=35 // pred_check
        %p417 = pneg %p145
      $region38: #{residual_block.5} parent=35 // pred_check_branch
        %419 = sbr.rel (%p417) target = $region40
      $region39: #{residual_block.5} parent=35 // pred_region
        %s420 = smul.u32 8, %s20
      $region40: #{residual_block.5} parent=35 // pred_fallthru
        _
    $region36: #{residual_block.5} parent=5 // pred_fallthru
      _
    %p421 = scmp.le.s32.totalorder 2, %s10
    // Predicated region
    $region41: #{residual_block.5} parent=5 // pred_check
      %p422 = pneg %p421
    $region42: #{residual_block.5} parent=5 // pred_check_branch
      %424 = sbr.rel (%p422) target = $region44
    $region43: #{residual_block.5} parent=5 // pred_region
      %s425 = ssub.s32 %s10, 2
      // Predicated region
      $region45: #{residual_block.5} parent=43 // pred_check
        %p426 = pneg %p151
      $region46: #{residual_block.5} parent=43 // pred_check_branch
        %428 = sbr.rel (%p426) target = $region48
      $region47: #{residual_block.5} parent=43 // pred_region
        %s429 = smul.u32 8, %s22
        %p430 = scmp.lt.s32.totalorder %s21, 1
        %s431 = scalar_select %p430, %s21, 1
        %p432 = scmp.lt.s32.totalorder %s429, 15
        %s433 = scalar_select %p432, %s429, 15
        %s434 = smul.addr %s433, 2
        %s435 = smul.addr %s431, 32
        %s436 = sadd.s32 %s434, %s435
        %s437 = smul.addr %s436, 8
        %s438 = scalar_lea.vmem %s4, %s437
      $region48: #{residual_block.5} parent=43 // pred_fallthru
        _
    $region44: #{residual_block.5} parent=5 // pred_fallthru
      _
  $region6: #{residual_block.5} parent=0 // loop_footer
    %s14 = sadd.s32 1, %s10
  $region7: #{residual_block.5} parent=0 // loop_footer_branch
    %9 = sbr.rel target = $region3
  $region8: #{residual_block.5} parent=0 // loop_exit
    _

// kernel: residual_block.3
$region0: #{residual_block.3}
  #allocation0 [shape = 'u32[]', space=smem, size = 0x4, offset = 0x4, fixed_abs, tag = 'smem constant byte address 0x4 - core index']
  #allocation1 [shape = 'u32[144,128]{1,0:T(1,128)}', space=vmem, size = 0x12000, scoped, tag = 'internal scratch']
  %s0 = inlined_call_operand.vmem [shape: bf16[2,16,18,128], index: 0, kind: input, shape index: {}, may-alias: {0,1,2}]
  %s1 = inlined_call_operand.vmem [shape: bf16[2,16,18,128], index: 1, kind: input, shape index: {}, may-alias: {0,1,2}]
  %s2 = inlined_call_operand.vmem [shape: bf16[2,16,18,128], index: 2, kind: input, shape index: {}, may-alias: {0,1,2}]
  %s3 = inlined_call_operand.vmem [shape: bf16[3,384,128], index: 3, kind: input, shape index: {}]
  %s4 = inlined_call_operand.vmem [shape: f32[1,128], index: 4, kind: input, shape index: {}]
  %s5 = inlined_call_operand.vmem [shape: bf16[2,16,16,128], index: 5, kind: output, shape index: {0}]
  %s6 = inlined_call_operand.vmem [shape: f32[2,2,2,128], index: 6, kind: output, shape index: {1}]
  %7 = xla_tuple %s5, %s6
  %s8 = sld [smem:[#allocation0]]
  $region61: #{residual_block.3} parent=0
    _
  %s10 = ssub.s32 1, %s8
  %s11 = scalar_select 0, %s10, %s8
  loop: start=0, step=1, limit=6
  $region2: #{residual_block.3} parent=0 // loop_pre_header
    _
  $region3: #{residual_block.3} parent=0 // loop_header
    %s13 = sphi 0, %s17
    %p14 = scmp.ge.s32.totalorder %s13, 6
    %s20 = sphi 0, %s32
    %s21 = sphi 0, %s28
    %s22 = sphi 0, %s20
    %s23 = sphi 0, %s21
    %s24 = sphi 0, %s22
    %s25 = sphi 0, %s23
    %s45 = sphi 0, %s47
    %s48 = sphi 0, %s45
    %s49 = sphi 0, %s48
    %s65 = sphi 0, %s49
    %s73 = sphi 0, %s75
    %s76 = sphi 0, %s73
    %s77 = sphi 0, %s76
    %s93 = sphi 0, %s77
    %s109 = sphi 0, %s111
    %s112 = sphi 0, %s109
    %s113 = sphi 0, %s112
    %s129 = sphi 0, %s113
    %s133 = sphi 0, %s133
    %s135 = sphi 0, %s133
    %s136 = sphi 0, %s135
    %s150 = sphi 0, %s136
    %s154 = sphi 0, %s154
    %s156 = sphi 0, %s154
    %s157 = sphi 0, %s156
    %s171 = sphi 0, %s157
    %s179 = sphi 0, %s181
    %s182 = sphi 0, %s179
    %s183 = sphi 0, %s182
    %s199 = sphi 0, %s183
    %s207 = sphi 0, %s209
    %s210 = sphi 0, %s207
    %s211 = sphi 0, %s210
    %s227 = sphi 0, %s211
  $region4: #{residual_block.3} parent=0 // loop_header_branch
    %16 = sbr.rel (%p14) target = $region8
  $region5: #{residual_block.3} parent=0 // loop_body
    %s18 = ssub.s32 %s13, 1
    %s19 = ssub.s32 %s13, 2
    %s26 = sadd.s32 1, %s21
    %p27 = scmp.ge.s32.totalorder %s26, 2
    %s28 = scalar_select %p27, 0, %s26
    %s29 = sadd.s32 1, %s20
    %s30 = scalar_select %p27, %s29, %s20
    %p31 = scmp.ge.s32.totalorder %s30, 2
    %s32 = scalar_select %p31, 0, %s30
    %s33 = smul.u32 %s21, 8
    %s34 = ssub.s32 %s33, 1
    %p35 = scmp.gt.s32.totalorder %s34, 0
    %s36 = scalar_select %p35, %s34, 0
    %s37 = smul.u32 %s28, 8
    %s38 = ssub.s32 %s37, 1
    %p39 = scmp.gt.s32.totalorder %s38, 0
    %s40 = scalar_select %p39, %s38, 0
    %s41 = ssub.s32 %s20, %s32
    %s42 = ssub.s32 %s36, %s40
    %s43 = sor.u32 %s41, %s42
    %p44 = scmp.eq.s32.totalorder %s43, 0
    %s46 = sadd.s32 %s45, 1
    %s47 = scalar_select %p44, %s45, %s46
    %p50 = pneg %p44
    %p51 = scmp.eq.s32.totalorder %s13, 3
    %p52 = por %p50, %p51
    %p53 = scmp.ne.s32.totalorder %s45, %s48
    %p54 = scmp.eq.s32.totalorder %s13, 0
    %p55 = por %p53, %p54
    %p56 = scmp.ne.s32.totalorder %s45, %s48
    %p57 = scmp.eq.s32.totalorder %s18, 3
    %p58 = por %p56, %p57
    %p59 = scmp.ne.s32.totalorder %s48, %s49
    %p60 = scmp.eq.s32.totalorder %s18, 0
    %p61 = por %p59, %p60
    %p62 = scmp.ne.s32.totalorder %s48, %s49
    %p63 = scmp.eq.s32.totalorder %s19, 3
    %p64 = por %p62, %p63
    %p66 = scmp.ne.s32.totalorder %s49, %s65
    %p67 = scmp.eq.s32.totalorder %s19, 0
    %p68 = por %p66, %p67
    %s69 = ssub.s32 %s20, %s32
    %s70 = ssub.s32 %s21, %s28
    %s71 = sor.u32 %s69, %s70
    %p72 = scmp.eq.s32.totalorder %s71, 0
    %s74 = sadd.s32 %s73, 1
    %s75 = scalar_select %p72, %s73, %s74
    %p78 = pneg %p72
    %p79 = scmp.eq.s32.totalorder %s13, 3
    %p80 = por %p78, %p79
    %p81 = scmp.ne.s32.totalorder %s73, %s76
    %p82 = scmp.eq.s32.totalorder %s13, 0
    %p83 = por %p81, %p82
    %p84 = scmp.ne.s32.totalorder %s73, %s76
    %p85 = scmp.eq.s32.totalorder %s18, 3
    %p86 = por %p84, %p85
    %p87 = scmp.ne.s32.totalorder %s76, %s77
    %p88 = scmp.eq.s32.totalorder %s18, 0
    %p89 = por %p87, %p88
    %p90 = scmp.ne.s32.totalorder %s76, %s77
    %p91 = scmp.eq.s32.totalorder %s19, 3
    %p92 = por %p90, %p91
    %p94 = scmp.ne.s32.totalorder %s77, %s93
    %p95 = scmp.eq.s32.totalorder %s19, 0
    %p96 = por %p94, %p95
    %s97 = smul.u32 %s21, 8
    %s98 = sadd.s32 %s97, 8
    %p99 = scmp.lt.s32.totalorder %s98, 15
    %s100 = scalar_select %p99, %s98, 15
    %s101 = smul.u32 %s28, 8
    %s102 = sadd.s32 %s101, 8
    %p103 = scmp.lt.s32.totalorder %s102, 15
    %s104 = scalar_select %p103, %s102, 15
    %s105 = ssub.s32 %s20, %s32
    %s106 = ssub.s32 %s100, %s104
    %s107 = sor.u32 %s105, %s106
    %p108 = scmp.eq.s32.totalorder %s107, 0
    %s110 = sadd.s32 %s109, 1
    %s111 = scalar_select %p108, %s109, %s110
    %p114 = pneg %p108
    %p115 = scmp.eq.s32.totalorder %s13, 3
    %p116 = por %p114, %p115
    %p117 = scmp.ne.s32.totalorder %s109, %s112
    %p118 = scmp.eq.s32.totalorder %s13, 0
    %p119 = por %p117, %p118
    %p120 = scmp.ne.s32.totalorder %s109, %s112
    %p121 = scmp.eq.s32.totalorder %s18, 3
    %p122 = por %p120, %p121
    %p123 = scmp.ne.s32.totalorder %s112, %s113
    %p124 = scmp.eq.s32.totalorder %s18, 0
    %p125 = por %p123, %p124
    %p126 = scmp.ne.s32.totalorder %s112, %s113
    %p127 = scmp.eq.s32.totalorder %s19, 3
    %p128 = por %p126, %p127
    %p130 = scmp.ne.s32.totalorder %s113, %s129
    %p131 = scmp.eq.s32.totalorder %s19, 0
    %p132 = por %p130, %p131
    %s134 = sadd.s32 %s133, 1
    %p137 = scmp.eq.s32.totalorder %s13, 3
    %p138 = scmp.ne.s32.totalorder %s133, %s135
    %p139 = scmp.eq.s32.totalorder %s13, 0
    %p140 = por %p138, %p139
    %p141 = scmp.ne.s32.totalorder %s133, %s135
    %p142 = scmp.eq.s32.totalorder %s18, 3
    %p143 = por %p141, %p142
    %p144 = scmp.ne.s32.totalorder %s135, %s136
    %p145 = scmp.eq.s32.totalorder %s18, 0
    %p146 = por %p144, %p145
    %p147 = scmp.ne.s32.totalorder %s135, %s136
    %p148 = scmp.eq.s32.totalorder %s19, 3
    %p149 = por %p147, %p148
    %p151 = scmp.ne.s32.totalorder %s136, %s150
    %p152 = scmp.eq.s32.totalorder %s19, 0
    %p153 = por %p151, %p152
    %s155 = sadd.s32 %s154, 1
    %p158 = scmp.eq.s32.totalorder %s13, 3
    %p159 = scmp.ne.s32.totalorder %s154, %s156
    %p160 = scmp.eq.s32.totalorder %s13, 0
    %p161 = por %p159, %p160
    %p162 = scmp.ne.s32.totalorder %s154, %s156
    %p163 = scmp.eq.s32.totalorder %s18, 3
    %p164 = por %p162, %p163
    %p165 = scmp.ne.s32.totalorder %s156, %s157
    %p166 = scmp.eq.s32.totalorder %s18, 0
    %p167 = por %p165, %p166
    %p168 = scmp.ne.s32.totalorder %s156, %s157
    %p169 = scmp.eq.s32.totalorder %s19, 3
    %p170 = por %p168, %p169
    %p172 = scmp.ne.s32.totalorder %s157, %s171
    %p173 = scmp.eq.s32.totalorder %s19, 0
    %p174 = por %p172, %p173
    %s175 = ssub.s32 %s20, %s32
    %s176 = ssub.s32 %s21, %s28
    %s177 = sor.u32 %s175, %s176
    %p178 = scmp.eq.s32.totalorder %s177, 0
    %s180 = sadd.s32 %s179, 1
    %s181 = scalar_select %p178, %s179, %s180
    %p184 = pneg %p178
    %p185 = scmp.eq.s32.totalorder %s13, 3
    %p186 = por %p184, %p185
    %p187 = scmp.ne.s32.totalorder %s179, %s182
    %p188 = scmp.eq.s32.totalorder %s13, 0
    %p189 = por %p187, %p188
    %p190 = scmp.ne.s32.totalorder %s179, %s182
    %p191 = scmp.eq.s32.totalorder %s18, 3
    %p192 = por %p190, %p191
    %p193 = scmp.ne.s32.totalorder %s182, %s183
    %p194 = scmp.eq.s32.totalorder %s18, 0
    %p195 = por %p193, %p194
    %p196 = scmp.ne.s32.totalorder %s182, %s183
    %p197 = scmp.eq.s32.totalorder %s19, 3
    %p198 = por %p196, %p197
    %p200 = scmp.ne.s32.totalorder %s183, %s199
    %p201 = scmp.eq.s32.totalorder %s19, 0
    %p202 = por %p200, %p201
    %s203 = ssub.s32 %s20, %s32
    %s204 = ssub.s32 %s21, %s28
    %s205 = sor.u32 %s203, %s204
    %p206 = scmp.eq.s32.totalorder %s205, 0
    %s208 = sadd.s32 %s207, 1
    %s209 = scalar_select %p206, %s207, %s208
    %p212 = pneg %p206
    %p213 = scmp.eq.s32.totalorder %s13, 3
    %p214 = por %p212, %p213
    %p215 = scmp.ne.s32.totalorder %s207, %s210
    %p216 = scmp.eq.s32.totalorder %s13, 0
    %p217 = por %p215, %p216
    %p218 = scmp.ne.s32.totalorder %s207, %s210
    %p219 = scmp.eq.s32.totalorder %s18, 3
    %p220 = por %p218, %p219
    %p221 = scmp.ne.s32.totalorder %s210, %s211
    %p222 = scmp.eq.s32.totalorder %s18, 0
    %p223 = por %p221, %p222
    %p224 = scmp.ne.s32.totalorder %s210, %s211
    %p225 = scmp.eq.s32.totalorder %s19, 3
    %p226 = por %p224, %p225
    %p228 = scmp.ne.s32.totalorder %s211, %s227
    %p229 = scmp.eq.s32.totalorder %s19, 0
    %p230 = por %p228, %p229
    %p231 = scmp.le.s32.totalorder 1, %s13
    %p232 = scmp.lt.s32.totalorder %s13, 5
    %p233 = pnand %p231, %p232
    %p234 = pneg %p233
    // Predicated region
    $region9: #{residual_block.3} parent=5 // pred_check
      _
    $region10: #{residual_block.3} parent=5 // pred_check_branch
      %236 = sbr.rel (%p233) target = $region12
    $region11: #{residual_block.3} parent=5 // pred_region
      %s237 = ssub.s32 %s13, 1
      // Predicated region
      $region13: #{residual_block.3} parent=11 // pred_check
        %p238 = pneg %p146
      $region14: #{residual_block.3} parent=11 // pred_check_branch
        %240 = sbr.rel (%p238) target = $region16
      $region15: #{residual_block.3} parent=11 // pred_region
        _
      $region16: #{residual_block.3} parent=11 // pred_fallthru
        _
      // Predicated region
      $region17: #{residual_block.3} parent=11 // pred_check
        %p241 = pneg %p167
      $region18: #{residual_block.3} parent=11 // pred_check_branch
        %243 = sbr.rel (%p241) target = $region20
      $region19: #{residual_block.3} parent=11 // pred_region
        _
      $region20: #{residual_block.3} parent=11 // pred_fallthru
        _
    $region12: #{residual_block.3} parent=5 // pred_fallthru
      _
    %p244 = scmp.lt.s32.totalorder %s13, 4
    // Predicated region
    $region21: #{residual_block.3} parent=5 // pred_check
      %p245 = pneg %p244
    $region22: #{residual_block.3} parent=5 // pred_check_branch
      %247 = sbr.rel (%p245) target = $region24
    $region23: #{residual_block.3} parent=5 // pred_region
      // Predicated region
      $region25: #{residual_block.3} parent=23 // pred_check
        %p248 = pneg %p55
      $region26: #{residual_block.3} parent=23 // pred_check_branch
        %250 = sbr.rel (%p248) target = $region28
      $region27: #{residual_block.3} parent=23 // pred_region
        %s251 = smul.u32 %s21, 8
        %s252 = ssub.s32 %s251, 1
        %p253 = scmp.gt.s32.totalorder %s252, 0
        %s254 = scalar_select %p253, %s252, 0
        %p255 = scmp.lt.s32.totalorder %s20, 1
        %s256 = scalar_select %p255, %s20, 1
        %p257 = scmp.lt.s32.totalorder %s254, 15
        %s258 = scalar_select %p257, %s254, 15
        %s259 = smul.addr %s258, 3
        %s260 = smul.addr %s256, 48
        %s261 = sadd.s32 %s259, %s260
        %s262 = smul.addr %s261, 4
        %s263 = scalar_lea.vmem %s0, %s262
        %s264 = smul.u32 %s21, 8
        %s265 = ssub.s32 %s264, 1
        %p266 = scmp.gt.s32.totalorder %s265, 0
        %s267 = scalar_select %p266, %s265, 0
      $region28: #{residual_block.3} parent=23 // pred_fallthru
        _
      // Predicated region
      $region29: #{residual_block.3} parent=23 // pred_check
        %p268 = pneg %p83
      $region30: #{residual_block.3} parent=23 // pred_check_branch
        %270 = sbr.rel (%p268) target = $region32
      $region31: #{residual_block.3} parent=23 // pred_region
        %s271 = smul.u32 8, %s21
        %p272 = scmp.lt.s32.totalorder %s20, 1
        %s273 = scalar_select %p272, %s20, 1
        %p274 = scmp.lt.s32.totalorder %s271, 15
        %s275 = scalar_select %p274, %s271, 15
        %s276 = smul.addr %s275, 3
        %s277 = smul.addr %s273, 48
        %s278 = sadd.s32 %s276, %s277
        %s279 = smul.addr %s278, 4
        %s280 = scalar_lea.vmem %s1, %s279
        %s281 = smul.u32 8, %s21
      $region32: #{residual_block.3} parent=23 // pred_fallthru
        _
      // Predicated region
      $region33: #{residual_block.3} parent=23 // pred_check
        %p282 = pneg %p119
      $region34: #{residual_block.3} parent=23 // pred_check_branch
        %284 = sbr.rel (%p282) target = $region36
      $region35: #{residual_block.3} parent=23 // pred_region
        %s285 = smul.u32 %s21, 8
        %s286 = sadd.s32 %s285, 8
        %p287 = scmp.lt.s32.totalorder %s286, 15
        %s288 = scalar_select %p287, %s286, 15
        %p289 = scmp.lt.s32.totalorder %s20, 1
        %s290 = scalar_select %p289, %s20, 1
        %p291 = scmp.lt.s32.totalorder %s288, 15
        %s292 = scalar_select %p291, %s288, 15
        %s293 = smul.addr %s292, 3
        %s294 = smul.addr %s290, 48
        %s295 = sadd.s32 %s293, %s294
        %s296 = smul.addr %s295, 4
        %s297 = scalar_lea.vmem %s2, %s296
        %s298 = smul.u32 %s21, 8
        %s299 = sadd.s32 %s298, 8
        %p300 = scmp.lt.s32.totalorder %s299, 15
        %s301 = scalar_select %p300, %s299, 15
      $region36: #{residual_block.3} parent=23 // pred_fallthru
        _
    $region24: #{residual_block.3} parent=5 // pred_fallthru
      _
    %p302 = scmp.le.s32.totalorder 1, %s13
    %p303 = scmp.lt.s32.totalorder %s13, 5
    %p304 = pnand %p302, %p303
    %p305 = pneg %p304
    // Predicated region
    $region37: #{residual_block.3} parent=5 // pred_check
      _
    $region38: #{residual_block.3} parent=5 // pred_check_branch
      %307 = sbr.rel (%p304) target = $region40
    $region39: #{residual_block.3} parent=5 // pred_region
      %s308 = ssub.s32 %s13, 1
      %s309 = smul.u32 %s23, 8
      %s310 = ssub.s32 %s309, 1
      %p311 = scmp.gt.s32.totalorder %s310, 0
      %s312 = scalar_select %p311, %s310, 0
      %p313 = scmp.lt.s32.totalorder %s22, 1
      %s314 = scalar_select %p313, %s22, 1
      %p315 = scmp.lt.s32.totalorder %s312, 15
      %s316 = scalar_select %p315, %s312, 15
      %s317 = smul.addr %s316, 3
      %s318 = smul.addr %s314, 48
      %s319 = sadd.s32 %s317, %s318
      %s320 = smul.addr %s319, 4
      %s321 = scalar_lea.vmem %s0, %s320
      %p322 = pneg %p61
      %p323 = pneg %p58
      %s324 = smul.u32 8, %s23
      %p325 = scmp.lt.s32.totalorder %s22, 1
      %s326 = scalar_select %p325, %s22, 1
      %p327 = scmp.lt.s32.totalorder %s324, 15
      %s328 = scalar_select %p327, %s324, 15
      %s329 = smul.addr %s328, 3
      %s330 = smul.addr %s326, 48
      %s331 = sadd.s32 %s329, %s330
      %s332 = smul.addr %s331, 4
      %s333 = scalar_lea.vmem %s1, %s332
      %p334 = pneg %p89
      %p335 = pneg %p86
      %s336 = smul.u32 %s23, 8
      %s337 = sadd.s32 %s336, 8
      %p338 = scmp.lt.s32.totalorder %s337, 15
      %s339 = scalar_select %p338, %s337, 15
      %p340 = scmp.lt.s32.totalorder %s22, 1
      %s341 = scalar_select %p340, %s22, 1
      %p342 = scmp.lt.s32.totalorder %s339, 15
      %s343 = scalar_select %p342, %s339, 15
      %s344 = smul.addr %s343, 3
      %s345 = smul.addr %s341, 48
      %s346 = sadd.s32 %s344, %s345
      %s347 = smul.addr %s346, 4
      %s348 = scalar_lea.vmem %s2, %s347
      %p349 = pneg %p125
      %p350 = pneg %p122
      %p351 = pneg %p146
      %p352 = pneg %p143
      %p353 = pneg %p167
      %p354 = pneg %p164
      %p355 = pneg %p195
      %p356 = pneg %p192
      %s357 = smul.u32 8, %s23
      %p358 = scmp.lt.s32.totalorder %s22, 1
      %s359 = scalar_select %p358, %s22, 1
      %p360 = scmp.lt.s32.totalorder %s357, 15
      %s361 = scalar_select %p360, %s357, 15
      %s362 = smul.addr %s361, 2
      %s363 = smul.addr %s359, 32
      %s364 = sadd.s32 %s362, %s363
      %s365 = smul.addr %s364, 4
      %s366 = scalar_lea.vmem %s5, %s365
      %p367 = pneg %p223
      %p368 = pneg %p220
      %p369 = scmp.lt.s32.totalorder %s22, 1
      %s370 = scalar_select %p369, %s22, 1
      %p371 = scmp.lt.s32.totalorder %s23, 1
      %s372 = scalar_select %p371, %s23, 1
      %s373 = smul.addr %s370, 2
      %s374 = sadd.s32 %s372, %s373
      %s375 = smul.addr %s374, 2
      %s376 = scalar_lea.vmem %s6, %s375
      %s377 = smul.u32 %s23, 8
      %s378 = ssub.s32 %s377, 1
      %p379 = scmp.gt.s32.totalorder %s378, 0
      %s380 = scalar_select %p379, %s378, 0
      %p381 = scmp.lt.s32.totalorder %s22, 1
      %s382 = scalar_select %p381, %s22, 1
      %p383 = scmp.lt.s32.totalorder %s380, 15
      %s384 = scalar_select %p383, %s380, 15
      %s385 = smul.addr %s384, 3
      %s386 = smul.addr %s382, 48
      %s387 = sadd.s32 %s385, %s386
      %s388 = smul.addr %s387, 4
      %s389 = scalar_lea.vmem %s0, %s388
      %s390 = smul.u32 %s23, 8
      %s391 = ssub.s32 %s390, 1
      %p392 = scmp.gt.s32.totalorder %s391, 0
      %s393 = scalar_select %p392, %s391, 0
      %s394 = smul.u32 8, %s23
      %p395 = scmp.lt.s32.totalorder %s22, 1
      %s396 = scalar_select %p395, %s22, 1
      %p397 = scmp.lt.s32.totalorder %s394, 15
      %s398 = scalar_select %p397, %s394, 15
      %s399 = smul.addr %s398, 3
      %s400 = smul.addr %s396, 48
      %s401 = sadd.s32 %s399, %s400
      %s402 = smul.addr %s401, 4
      %s403 = scalar_lea.vmem %s1, %s402
      %s404 = smul.u32 8, %s23
      %s405 = smul.u32 %s23, 8
      %s406 = sadd.s32 %s405, 8
      %p407 = scmp.lt.s32.totalorder %s406, 15
      %s408 = scalar_select %p407, %s406, 15
      %p409 = scmp.lt.s32.totalorder %s22, 1
      %s410 = scalar_select %p409, %s22, 1
      %p411 = scmp.lt.s32.totalorder %s408, 15
      %s412 = scalar_select %p411, %s408, 15
      %s413 = smul.addr %s412, 3
      %s414 = smul.addr %s410, 48
      %s415 = sadd.s32 %s413, %s414
      %s416 = smul.addr %s415, 4
      %s417 = scalar_lea.vmem %s2, %s416
      %s418 = smul.u32 %s23, 8
      %s419 = sadd.s32 %s418, 8
      %p420 = scmp.lt.s32.totalorder %s419, 15
      %s421 = scalar_select %p420, %s419, 15
      %s422 = smul.u32 8, %s23
      %p423 = scmp.lt.s32.totalorder %s22, 1
      %s424 = scalar_select %p423, %s22, 1
      %p425 = scmp.lt.s32.totalorder %s422, 15
      %s426 = scalar_select %p425, %s422, 15
      %s427 = smul.addr %s426, 2
      %s428 = smul.addr %s424, 32
      %s429 = sadd.s32 %s427, %s428
      %s430 = smul.addr %s429, 4
      %s431 = scalar_lea.vmem %s5, %s430
      %s432 = smul.u32 8, %s23
      %p433 = scmp.lt.s32.totalorder %s22, 1
      %s434 = scalar_select %p433, %s22, 1
      %p435 = scmp.lt.s32.totalorder %s23, 1
      %s436 = scalar_select %p435, %s23, 1
      %s437 = smul.addr %s434, 2
      %s438 = sadd.s32 %s436, %s437
      %s439 = smul.addr %s438, 2
      %s440 = scalar_lea.vmem %s6, %s439
      %p442 = scmp.gt.s32.totalorder %s23, 0
      %s443 = scalar_select %p442, 1.0, 0.0
      %p444 = scmp.lt.s32.totalorder %s23, 1
      %s445 = scalar_select %p444, 1.0, 0.0
      %v446 = vld [vmem:[%s389] sm:$0xf]
      %v447 = vld [vmem:[%s389 + $0x4] sm:$0xf]
      %v448 = vld [vmem:[%s389 + $0x8] sm:$0x1]
      %v449 = vunpack.c.l.bf16 %v446
      %v450 = vunpack.c.l.bf16 %v447
      %v451 = vunpack.c.l.bf16 %v448
      %v452 = vstv %s443
      %v453 = vmul.f32 %v449, %v452
      %v454 = vmul.f32 %v450, %v452
      %v455 = vmul.f32 %v451, %v452
      %v456 = vpack.c.bf16 %v454, %v453
      %v457 = vpack.c.bf16 %v455, %v455
      %v458 = vld [vmem:[%s417] sm:$0xf]
      %v459 = vld [vmem:[%s417 + $0x4] sm:$0xf]
      %v460 = vld [vmem:[%s417 + $0x8] sm:$0x1]
      %v461 = vunpack.c.l.bf16 %v458
      %v462 = vunpack.c.l.bf16 %v459
      %v463 = vunpack.c.l.bf16 %v460
      %v464 = vstv %s445
      %v465 = vmul.f32 %v461, %v464
      %v466 = vmul.f32 %v462, %v464
      %v467 = vmul.f32 %v463, %v464
      %v468 = vpack.c.bf16 %v466, %v465
      %v469 = vpack.c.bf16 %v467, %v467
      %v470 = vld [vmem:[%s403] sm:$0xf]
      %v471 = vld [vmem:[%s403 + $0x4] sm:$0xf]
      %v472 = vld [vmem:[%s403 + $0x8] sm:$0x1]
      %v473 = vld [vmem:[%s403 + $0xc] sm:$0xf]
      %v474 = vld [vmem:[%s403 + $0x10] sm:$0xf]
      %v475 = vld [vmem:[%s403 + $0x14] sm:$0x1]
      %v476 = vld [vmem:[%s403 + $0x18] sm:$0xf]
      %v477 = vld [vmem:[%s403 + $0x1c] sm:$0xf]
      %v478 = vld [vmem:[%s403 + $0x20] sm:$0x1]
      %v479 = vld [vmem:[%s403 + $0x24] sm:$0xf]
      %v480 = vld [vmem:[%s403 + $0x28] sm:$0xf]
      %v481 = vld [vmem:[%s403 + $0x2c] sm:$0x1]
      %v482 = vld [vmem:[%s403 + $0x30] sm:$0xf]
      %v483 = vld [vmem:[%s403 + $0x34] sm:$0xf]
      %v484 = vld [vmem:[%s403 + $0x38] sm:$0x1]
      %v485 = vld [vmem:[%s403 + $0x3c] sm:$0xf]
      %v486 = vld [vmem:[%s403 + $0x40] sm:$0xf]
      %v487 = vld [vmem:[%s403 + $0x44] sm:$0x1]
      %v488 = vld [vmem:[%s403 + $0x48] sm:$0xf]
      %v489 = vld [vmem:[%s403 + $0x4c] sm:$0xf]
      %v490 = vld [vmem:[%s403 + $0x50] sm:$0x1]
      %v491 = vld [vmem:[%s403 + $0x54] sm:$0xf]
      %v492 = vld [vmem:[%s403 + $0x58] sm:$0xf]
      %v493 = vld [vmem:[%s403 + $0x5c] sm:$0x1]
      %v518 = vunpack.c.l.b16 %v470
      %v519 = vunpack.c.l.b16 %v471
      %v520 = vunpack.c.l.b16 %v472
      %v521 = vunpack.c.l.b16 %v473
      %v522 = vunpack.c.l.b16 %v474
      %v523 = vunpack.c.l.b16 %v475
      %v524 = vunpack.c.l.b16 %v476
      %v525 = vunpack.c.l.b16 %v477
      %v526 = vunpack.c.l.b16 %v478
      %v527 = vunpack.c.l.b16 %v479
      %v528 = vunpack.c.l.b16 %v480
      %v529 = vunpack.c.l.b16 %v481
      %v530 = vunpack.c.l.b16 %v482
      %v531 = vunpack.c.l.b16 %v483
      %v532 = vunpack.c.l.b16 %v484
      %v533 = vunpack.c.l.b16 %v485
      %v534 = vunpack.c.l.b16 %v486
      %v535 = vunpack.c.l.b16 %v487
      %v536 = vunpack.c.l.b16 %v488
      %v537 = vunpack.c.l.b16 %v489
      %v538 = vunpack.c.l.b16 %v490
      %v539 = vunpack.c.l.b16 %v491
      %v540 = vunpack.c.l.b16 %v492
      %v541 = vunpack.c.l.b16 %v493
      %v542 = vpack.c.b16 %v519, %v518
      %v543 = vpack.c.b16 %v520, %v520
      %v544 = vpack.c.b16 %v522, %v521
      %v545 = vpack.c.b16 %v523, %v523
      %v546 = vpack.c.b16 %v525, %v524
      %v547 = vpack.c.b16 %v526, %v526
      %v548 = vpack.c.b16 %v528, %v527
      %v549 = vpack.c.b16 %v529, %v529
      %v550 = vpack.c.b16 %v531, %v530
      %v551 = vpack.c.b16 %v532, %v532
      %v552 = vpack.c.b16 %v534, %v533
      %v553 = vpack.c.b16 %v535, %v535
      %v554 = vpack.c.b16 %v537, %v536
      %v555 = vpack.c.b16 %v538, %v538
      %v556 = vpack.c.b16 %v540, %v539
      %v557 = vpack.c.b16 %v541, %v541
      %vm566 = vsmask.f32 7424
      %v568 = vshrl.u32 %v456, 16
      %v570 = vshll.u32 %v456, 16
      %v572 = vrot.slane %v570, 1
      %v573 = vor.u32 %v568, %v572
      %v575 = vshll.u32 %v457, 16
      %v577 = vrot.slane %v575, 1
      %v578 = vsel %vm566, %v573, %v577
      %v580 = vshrl.u32 %v542, 16
      %v582 = vshll.u32 %v542, 16
      %v584 = vrot.slane %v582, 1
      %v585 = vor.u32 %v580, %v584
      %v587 = vshll.u32 %v543, 16
      %v589 = vrot.slane %v587, 1
      %v590 = vsel %vm566, %v585, %v589
      %v592 = vshrl.u32 %v544, 16
      %v594 = vshll.u32 %v544, 16
      %v596 = vrot.slane %v594, 1
      %v597 = vor.u32 %v592, %v596
      %v599 = vshll.u32 %v545, 16
      %v601 = vrot.slane %v599, 1
      %v602 = vsel %vm566, %v597, %v601
      %v604 = vshrl.u32 %v546, 16
      %v606 = vshll.u32 %v546, 16
      %v608 = vrot.slane %v606, 1
      %v609 = vor.u32 %v604, %v608
      %v611 = vshll.u32 %v547, 16
      %v613 = vrot.slane %v611, 1
      %v614 = vsel %vm566, %v609, %v613
      %v616 = vshrl.u32 %v548, 16
      %v618 = vshll.u32 %v548, 16
      %v620 = vrot.slane %v618, 1
      %v621 = vor.u32 %v616, %v620
      %v623 = vshll.u32 %v549, 16
      %v625 = vrot.slane %v623, 1
      %v626 = vsel %vm566, %v621, %v625
      %v628 = vshrl.u32 %v550, 16
      %v630 = vshll.u32 %v550, 16
      %v632 = vrot.slane %v630, 1
      %v633 = vor.u32 %v628, %v632
      %v635 = vshll.u32 %v551, 16
      %v637 = vrot.slane %v635, 1
      %v638 = vsel %vm566, %v633, %v637
      %v640 = vshrl.u32 %v552, 16
      %v642 = vshll.u32 %v552, 16
      %v644 = vrot.slane %v642, 1
      %v645 = vor.u32 %v640, %v644
      %v647 = vshll.u32 %v553, 16
      %v649 = vrot.slane %v647, 1
      %v650 = vsel %vm566, %v645, %v649
      %v652 = vshrl.u32 %v554, 16
      %v654 = vshll.u32 %v554, 16
      %v656 = vrot.slane %v654, 1
      %v657 = vor.u32 %v652, %v656
      %v659 = vshll.u32 %v555, 16
      %v661 = vrot.slane %v659, 1
      %v662 = vsel %vm566, %v657, %v661
      %vm673 = vcmask 1046528
      %v674 = vrot.slane %v456, 1
      %v675 = vrot.slane %v457, 1
      %v676 = vsel %vm673, %v674, %v675
      %v677 = vrot.slane %v542, 1
      %v678 = vrot.slane %v543, 1
      %v679 = vsel %vm673, %v677, %v678
      %v680 = vrot.slane %v544, 1
      %v681 = vrot.slane %v545, 1
      %v682 = vsel %vm673, %v680, %v681
      %v683 = vrot.slane %v546, 1
      %v684 = vrot.slane %v547, 1
      %v685 = vsel %vm673, %v683, %v684
      %v686 = vrot.slane %v548, 1
      %v687 = vrot.slane %v549, 1
      %v688 = vsel %vm673, %v686, %v687
      %v689 = vrot.slane %v550, 1
      %v690 = vrot.slane %v551, 1
      %v691 = vsel %vm673, %v689, %v690
      %v692 = vrot.slane %v552, 1
      %v693 = vrot.slane %v553, 1
      %v694 = vsel %vm673, %v692, %v693
      %v695 = vrot.slane %v554, 1
      %v696 = vrot.slane %v555, 1
      %v697 = vsel %vm673, %v695, %v696
      %v706 = vld [vmem:[%s3] sm:$0xf]
      %v707 = vld [vmem:[%s3 + $0x4] sm:$0xf]
      %v708 = vld [vmem:[%s3 + $0x8] sm:$0xf]
      %v709 = vld [vmem:[%s3 + $0xc] sm:$0xf]
      %v710 = vld [vmem:[%s3 + $0x10] sm:$0xf]
      %v711 = vld [vmem:[%s3 + $0x14] sm:$0xf]
      %v712 = vld [vmem:[%s3 + $0x18] sm:$0xf]
      %v713 = vld [vmem:[%s3 + $0x1c] sm:$0xf]
      %v714 = vld [vmem:[%s3 + $0x20] sm:$0xf]
      %v715 = vld [vmem:[%s3 + $0x24] sm:$0xf]
      %v716 = vld [vmem:[%s3 + $0x28] sm:$0xf]
      %v717 = vld [vmem:[%s3 + $0x2c] sm:$0xf]
      %v718 = vld [vmem:[%s3 + $0x30] sm:$0xf]
      %v719 = vld [vmem:[%s3 + $0x34] sm:$0xf]
      %v720 = vld [vmem:[%s3 + $0x38] sm:$0xf]
      %v721 = vld [vmem:[%s3 + $0x3c] sm:$0xf]
      %v722 = vld [vmem:[%s3 + $0x40] sm:$0xf]
      %v723 = vld [vmem:[%s3 + $0x44] sm:$0xf]
      %v724 = vld [vmem:[%s3 + $0x48] sm:$0xf]
      %v725 = vld [vmem:[%s3 + $0x4c] sm:$0xf]
      %v726 = vld [vmem:[%s3 + $0x50] sm:$0xf]
      %v727 = vld [vmem:[%s3 + $0x54] sm:$0xf]
      %v728 = vld [vmem:[%s3 + $0x58] sm:$0xf]
      %v729 = vld [vmem:[%s3 + $0x5c] sm:$0xf]
      %v730 = vld [vmem:[%s3 + $0x60] sm:$0xf]
      %v731 = vld [vmem:[%s3 + $0x64] sm:$0xf]
      %v732 = vld [vmem:[%s3 + $0x68] sm:$0xf]
      %v733 = vld [vmem:[%s3 + $0x6c] sm:$0xf]
      %v734 = vld [vmem:[%s3 + $0x70] sm:$0xf]
      %v735 = vld [vmem:[%s3 + $0x74] sm:$0xf]
      %v736 = vld [vmem:[%s3 + $0x78] sm:$0xf]
      %v737 = vld [vmem:[%s3 + $0x7c] sm:$0xf]
      %v738 = vld [vmem:[%s3 + $0x80] sm:$0xf]
      %v739 = vld [vmem:[%s3 + $0x84] sm:$0xf]
      %v740 = vld [vmem:[%s3 + $0x88] sm:$0xf]
      %v741 = vld [vmem:[%s3 + $0x8c] sm:$0xf]
      %v742 = vld [vmem:[%s3 + $0x90] sm:$0xf]
      %v743 = vld [vmem:[%s3 + $0x94] sm:$0xf]
      %v744 = vld [vmem:[%s3 + $0x98] sm:$0xf]
      %v745 = vld [vmem:[%s3 + $0x9c] sm:$0xf]
      %v746 = vld [vmem:[%s3 + $0xa0] sm:$0xf]
      %v747 = vld [vmem:[%s3 + $0xa4] sm:$0xf]
      %v748 = vld [vmem:[%s3 + $0xa8] sm:$0xf]
      %v749 = vld [vmem:[%s3 + $0xac] sm:$0xf]
      %v750 = vld [vmem:[%s3 + $0xb0] sm:$0xf]
      %v751 = vld [vmem:[%s3 + $0xb4] sm:$0xf]
      %v752 = vld [vmem:[%s3 + $0xb8] sm:$0xf]
      %v753 = vld [vmem:[%s3 + $0xbc] sm:$0xf]
      %v755 = vshrl.u32 %v556, 16
      %v757 = vshll.u32 %v556, 16
      %v759 = vrot.slane %v757, 1
      %v760 = vor.u32 %v755, %v759
      %v762 = vshll.u32 %v557, 16
      %v764 = vrot.slane %v762, 1
      %v765 = vsel %vm566, %v760, %v764
      %v767 = vrot.slane %v556, 1
      %v768 = vrot.slane %v557, 1
      %v769 = vsel %vm673, %v767, %v768
      %s771 = scalar_lea.vmem %s3, 192
      %v772 = vld [vmem:[%s771] sm:$0xf]
      %v773 = vld [vmem:[%s771 + $0x4] sm:$0xf]
      %v774 = vld [vmem:[%s771 + $0x8] sm:$0xf]
      %v775 = vld [vmem:[%s771 + $0xc] sm:$0xf]
      %v776 = vld [vmem:[%s771 + $0x10] sm:$0xf]
      %v777 = vld [vmem:[%s771 + $0x14] sm:$0xf]
      %v778 = vld [vmem:[%s771 + $0x18] sm:$0xf]
      %v779 = vld [vmem:[%s771 + $0x1c] sm:$0xf]
      %v780 = vld [vmem:[%s771 + $0x20] sm:$0xf]
      %v781 = vld [vmem:[%s771 + $0x24] sm:$0xf]
      %v782 = vld [vmem:[%s771 + $0x28] sm:$0xf]
      %v783 = vld [vmem:[%s771 + $0x2c] sm:$0xf]
      %v784 = vld [vmem:[%s771 + $0x30] sm:$0xf]
      %v785 = vld [vmem:[%s771 + $0x34] sm:$0xf]
      %v786 = vld [vmem:[%s771 + $0x38] sm:$0xf]
      %v787 = vld [vmem:[%s771 + $0x3c] sm:$0xf]
      %v788 = vld [vmem:[%s771 + $0x40] sm:$0xf]
      %v789 = vld [vmem:[%s771 + $0x44] sm:$0xf]
      %v790 = vld [vmem:[%s771 + $0x48] sm:$0xf]
      %v791 = vld [vmem:[%s771 + $0x4c] sm:$0xf]
      %v792 = vld [vmem:[%s771 + $0x50] sm:$0xf]
      %v793 = vld [vmem:[%s771 + $0x54] sm:$0xf]
      %v794 = vld [vmem:[%s771 + $0x58] sm:$0xf]
      %v795 = vld [vmem:[%s771 + $0x5c] sm:$0xf]
      %v796 = vld [vmem:[%s771 + $0x60] sm:$0xf]
      %v797 = vld [vmem:[%s771 + $0x64] sm:$0xf]
      %v798 = vld [vmem:[%s771 + $0x68] sm:$0xf]
      %v799 = vld [vmem:[%s771 + $0x6c] sm:$0xf]
      %v800 = vld [vmem:[%s771 + $0x70] sm:$0xf]
      %v801 = vld [vmem:[%s771 + $0x74] sm:$0xf]
      %v802 = vld [vmem:[%s771 + $0x78] sm:$0xf]
      %v803 = vld [vmem:[%s771 + $0x7c] sm:$0xf]
      %v804 = vld [vmem:[%s771 + $0x80] sm:$0xf]
      %v805 = vld [vmem:[%s771 + $0x84] sm:$0xf]
      %v806 = vld [vmem:[%s771 + $0x88] sm:$0xf]
      %v807 = vld [vmem:[%s771 + $0x8c] sm:$0xf]
      %v808 = vld [vmem:[%s771 + $0x90] sm:$0xf]
      %v809 = vld [vmem:[%s771 + $0x94] sm:$0xf]
      %v810 = vld [vmem:[%s771 + $0x98] sm:$0xf]
      %v811 = vld [vmem:[%s771 + $0x9c] sm:$0xf]
      %v812 = vld [vmem:[%s771 + $0xa0] sm:$0xf]
      %v813 = vld [vmem:[%s771 + $0xa4] sm:$0xf]
      %v814 = vld [vmem:[%s771 + $0xa8] sm:$0xf]
      %v815 = vld [vmem:[%s771 + $0xac] sm:$0xf]
      %v816 = vld [vmem:[%s771 + $0xb0] sm:$0xf]
      %v817 = vld [vmem:[%s771 + $0xb4] sm:$0xf]
      %v818 = vld [vmem:[%s771 + $0xb8] sm:$0xf]
      %v819 = vld [vmem:[%s771 + $0xbc] sm:$0xf]
      %v868 = vunpack.c.l.b16 %v772
      %v869 = vunpack.c.l.b16 %v773
      %v870 = vunpack.c.l.b16 %v774
      %v871 = vunpack.c.l.b16 %v775
      %v872 = vunpack.c.l.b16 %v776
      %v873 = vunpack.c.l.b16 %v777
      %v874 = vunpack.c.l.b16 %v778
      %v875 = vunpack.c.l.b16 %v779
      %v876 = vunpack.c.l.b16 %v780
      %v877 = vunpack.c.l.b16 %v781
      %v878 = vunpack.c.l.b16 %v782
      %v879 = vunpack.c.l.b16 %v783
      %v880 = vunpack.c.l.b16 %v784
      %v881 = vunpack.c.l.b16 %v785
      %v882 = vunpack.c.l.b16 %v786
      %v883 = vunpack.c.l.b16 %v787
      %v884 = vunpack.c.l.b16 %v788
      %v885 = vunpack.c.l.b16 %v789
      %v886 = vunpack.c.l.b16 %v790
      %v887 = vunpack.c.l.b16 %v791
      %v888 = vunpack.c.l.b16 %v792
      %v889 = vunpack.c.l.b16 %v793
      %v890 = vunpack.c.l.b16 %v794
      %v891 = vunpack.c.l.b16 %v795
      %v892 = vunpack.c.l.b16 %v796
      %v893 = vunpack.c.l.b16 %v797
      %v894 = vunpack.c.l.b16 %v798
      %v895 = vunpack.c.l.b16 %v799
      %v896 = vunpack.c.l.b16 %v800
      %v897 = vunpack.c.l.b16 %v801
      %v898 = vunpack.c.l.b16 %v802
      %v899 = vunpack.c.l.b16 %v803
      %v900 = vunpack.c.l.b16 %v804
      %v901 = vunpack.c.l.b16 %v805
      %v902 = vunpack.c.l.b16 %v806
      %v903 = vunpack.c.l.b16 %v807
      %v904 = vunpack.c.l.b16 %v808
      %v905 = vunpack.c.l.b16 %v809
      %v906 = vunpack.c.l.b16 %v810
      %v907 = vunpack.c.l.b16 %v811
      %v908 = vunpack.c.l.b16 %v812
      %v909 = vunpack.c.l.b16 %v813
      %v910 = vunpack.c.l.b16 %v814
      %v911 = vunpack.c.l.b16 %v815
      %v912 = vunpack.c.l.b16 %v816
      %v913 = vunpack.c.l.b16 %v817
      %v914 = vunpack.c.l.b16 %v818
      %v915 = vunpack.c.l.b16 %v819
      %v916 = vpack.c.b16 %v869, %v868
      %v917 = vpack.c.b16 %v871, %v870
      %v918 = vpack.c.b16 %v873, %v872
      %v919 = vpack.c.b16 %v875, %v874
      %v920 = vpack.c.b16 %v877, %v876
      %v921 = vpack.c.b16 %v879, %v878
      %v922 = vpack.c.b16 %v881, %v880
      %v923 = vpack.c.b16 %v883, %v882
      %v924 = vpack.c.b16 %v885, %v884
      %v925 = vpack.c.b16 %v887, %v886
      %v926 = vpack.c.b16 %v889, %v888
      %v927 = vpack.c.b16 %v891, %v890
      %v928 = vpack.c.b16 %v893, %v892
      %v929 = vpack.c.b16 %v895, %v894
      %v930 = vpack.c.b16 %v897, %v896
      %v931 = vpack.c.b16 %v899, %v898
      %v932 = vpack.c.b16 %v901, %v900
      %v933 = vpack.c.b16 %v903, %v902
      %v934 = vpack.c.b16 %v905, %v904
      %v935 = vpack.c.b16 %v907, %v906
      %v936 = vpack.c.b16 %v909, %v908
      %v937 = vpack.c.b16 %v911, %v910
      %v938 = vpack.c.b16 %v913, %v912
      %v939 = vpack.c.b16 %v915, %v914
      %964 = vmatprep.subr.bf16.mxu0 0
      %965 = vmatpush1.bf16.msra.mxu0 %v916
      %966 = vmatprep.subr.bf16.mxu0 0
      %967 = vmatpush1.bf16.msra.mxu0 %v917
      %968 = vmatprep.subr.bf16.mxu0 0
      %969 = vmatpush1.bf16.msra.mxu0 %v918
      %970 = vmatprep.subr.bf16.mxu0 0
      %971 = vmatpush1.bf16.msra.mxu0 %v919
      %972 = vmatprep.subr.bf16.mxu0 0
      %973 = vmatpush1.bf16.msra.mxu0 %v920
      %974 = vmatprep.subr.bf16.mxu0 0
      %975 = vmatpush1.bf16.msra.mxu0 %v921
      %976 = vmatprep.subr.bf16.mxu0 0
      %977 = vmatpush1.bf16.msra.mxu0 %v922
      %978 = vmatprep.subr.bf16.mxu0 0
      %979 = vmatpush1.bf16.msra.mxu0 %v923
      %980 = vmatprep.subr.bf16.mxu0 0
      %981 = vmatpush1.bf16.msra.mxu0 %v924
      %982 = vmatprep.subr.bf16.mxu0 0
      %983 = vmatpush1.bf16.msra.mxu0 %v925
      %984 = vmatprep.subr.bf16.mxu0 0
      %985 = vmatpush1.bf16.msra.mxu0 %v926
      %986 = vmatprep.subr.bf16.mxu0 0
      %987 = vmatpush1.bf16.msra.mxu0 %v927
      %988 = vmatprep.subr.bf16.mxu0 0
      %989 = vmatpush1.bf16.msra.mxu0 %v928
      %990 = vmatprep.subr.bf16.mxu0 0
      %991 = vmatpush1.bf16.msra.mxu0 %v929
      %992 = vmatprep.subr.bf16.mxu0 0
      %993 = vmatpush1.bf16.msra.mxu0 %v930
      %994 = vmatprep.subr.bf16.mxu0 0
      %995 = vmatpush1.bf16.msra.mxu0 %v931
      %996 = vmatprep.mubr.bf16.mxu0 %v590
      %997 = vmatmul.mubr.bf16.gmra.mrb[0].mxu0 %v542
      %v998 = vpop.f32.mrb[0].mxu0
      %v999 = vadd.f32 0.0, %v998
      %v1000 = vpop.f32.mrb[0].mxu0
      %v1001 = vpop.f32.mrb[0].mxu0
      %v1002 = vadd.f32 0.0, %v1001
      %v1003 = vpop.f32.mrb[0].mxu0
      %1004 = vmatprep.mubr.bf16.mxu0 %v602
      %1005 = vmatmul.mubr.bf16.gmra.mrb[0].mxu0 %v544
      %v1006 = vpop.f32.mrb[0].mxu0
      %v1007 = vadd.f32 0.0, %v1006
      %v1008 = vpop.f32.mrb[0].mxu0
      %v1009 = vpop.f32.mrb[0].mxu0
      %v1010 = vadd.f32 0.0, %v1009
      %v1011 = vpop.f32.mrb[0].mxu0
      %1012 = vmatprep.mubr.bf16.mxu0 %v614
      %1013 = vmatmul.mubr.bf16.gmra.mrb[0].mxu0 %v546
      %v1014 = vpop.f32.mrb[0].mxu0
      %v1015 = vadd.f32 0.0, %v1014
      %v1016 = vpop.f32.mrb[0].mxu0
      %v1017 = vpop.f32.mrb[0].mxu0
      %v1018 = vadd.f32 0.0, %v1017
      %v1019 = vpop.f32.mrb[0].mxu0
      %1020 = vmatprep.mubr.bf16.mxu0 %v626
      %1021 = vmatmul.mubr.bf16.gmra.mrb[0].mxu0 %v548
      %v1022 = vpop.f32.mrb[0].mxu0
      %v1023 = vadd.f32 0.0, %v1022
      %v1024 = vpop.f32.mrb[0].mxu0
      %v1025 = vpop.f32.mrb[0].mxu0
      %v1026 = vadd.f32 0.0, %v1025
      %v1027 = vpop.f32.mrb[0].mxu0
      %1028 = vmatprep.mubr.bf16.mxu0 %v638
      %1029 = vmatmul.mubr.bf16.gmra.mrb[0].mxu0 %v550
      %v1030 = vpop.f32.mrb[0].mxu0
      %v1031 = vadd.f32 0.0, %v1030
      %v1032 = vpop.f32.mrb[0].mxu0
      %v1033 = vpop.f32.mrb[0].mxu0
      %v1034 = vadd.f32 0.0, %v1033
      %v1035 = vpop.f32.mrb[0].mxu0
      %1036 = vmatprep.mubr.bf16.mxu0 %v650
      %1037 = vmatmul.mubr.bf16.gmra.mrb[0].mxu0 %v552
      %v1038 = vpop.f32.mrb[0].mxu0
      %v1039 = vadd.f32 0.0, %v1038
      %v1040 = vpop.f32.mrb[0].mxu0
      %v1041 = vpop.f32.mrb[0].mxu0
      %v1042 = vadd.f32 0.0, %v1041
      %v1043 = vpop.f32.mrb[0].mxu0
      %1044 = vmatprep.mubr.bf16.mxu0 %v662
      %1045 = vmatmul.mubr.bf16.gmra.mrb[0].mxu0 %v554
      %v1046 = vpop.f32.mrb[0].mxu0
      %v1047 = vadd.f32 0.0, %v1046
      %v1048 = vpop.f32.mrb[0].mxu0
      %v1049 = vpop.f32.mrb[0].mxu0
      %v1050 = vadd.f32 0.0, %v1049
      %v1051 = vpop.f32.mrb[0].mxu0
      %1052 = vmatprep.mubr.bf16.mxu0 %v765
      %1053 = vmatmul.mubr.bf16.gmra.mrb[0].mxu0 %v556
      %v1054 = vpop.f32.mrb[0].mxu0
      %v1055 = vadd.f32 0.0, %v1054
      %v1056 = vpop.f32.mrb[0].mxu0
      %v1057 = vpop.f32.mrb[0].mxu0
      %v1058 = vadd.f32 0.0, %v1057
      %v1059 = vpop.f32.mrb[0].mxu0
      %1060 = vdwg.mxu0
      %1061 = vmatprep.subr.bf16.mxu0 0
      %1062 = vmatpush1.bf16.msra.mxu0 %v932
      %1063 = vmatprep.subr.bf16.mxu0 0
      %1064 = vmatpush1.bf16.msra.mxu0 %v933
      %1065 = vmatprep.subr.bf16.mxu0 0
      %1066 = vmatpush1.bf16.msra.mxu0 %v934
      %1067 = vmatprep.subr.bf16.mxu0 0
      %1068 = vmatpush1.bf16.msra.mxu0 %v935
      %1069 = vmatprep.subr.bf16.mxu0 0
      %1070 = vmatpush1.bf16.msra.mxu0 %v936
      %1071 = vmatprep.subr.bf16.mxu0 0
      %1072 = vmatpush1.bf16.msra.mxu0 %v937
      %1073 = vmatprep.subr.bf16.mxu0 0
      %1074 = vmatpush1.bf16.msra.mxu0 %v938
      %1075 = vmatprep.subr.bf16.mxu0 0
      %1076 = vmatpush1.bf16.msra.mxu0 %v939
      %1077 = vmatprep.subr.bf16.mxu0 0
      %1078 = vmatpush1.bf16.msra.mxu0 0
      %1079 = vmatprep.subr.bf16.mxu0 0
      %1080 = vmatpush1.bf16.msra.mxu0 0
      %1081 = vmatprep.subr.bf16.mxu0 0
      %1082 = vmatpush1.bf16.msra.mxu0 0
      %1083 = vmatprep.subr.bf16.mxu0 0
      %1084 = vmatpush1.bf16.msra.mxu0 0
      %1085 = vmatprep.subr.bf16.mxu0 0
      %1086 = vmatpush1.bf16.msra.mxu0 0
      %1087 = vmatprep.subr.bf16.mxu0 0
      %1088 = vmatpush1.bf16.msra.mxu0 0
      %1089 = vmatprep.subr.bf16.mxu0 0
      %1090 = vmatpush1.bf16.msra.mxu0 0
      %1091 = vmatprep.subr.bf16.mxu0 0
      %1092 = vmatpush1.bf16.msra.mxu0 0
      %1093 = vmatprep.mubr.bf16.mxu0 0
      %1094 = vmatmul.mubr.bf16.gmra.mrb[0].mxu0 %v679
      %v1095 = vpop.f32.mrb[0].mxu0
      %v1096 = vadd.f32 %v999, %v1095
      %v1097 = vpop.f32.mrb[0].mxu0
      %v1098 = vpop.f32.mrb[0].mxu0
      %v1099 = vadd.f32 %v1002, %v1098
      %v1100 = vpop.f32.mrb[0].mxu0
      %1101 = vmatprep.mubr.bf16.mxu0 0
      %1102 = vmatmul.mubr.bf16.gmra.mrb[0].mxu0 %v682
      %v1103 = vpop.f32.mrb[0].mxu0
      %v1104 = vadd.f32 %v1007, %v1103
      %v1105 = vpop.f32.mrb[0].mxu0
      %v1106 = vpop.f32.mrb[0].mxu0
      %v1107 = vadd.f32 %v1010, %v1106
      %v1108 = vpop.f32.mrb[0].mxu0
      %1109 = vmatprep.mubr.bf16.mxu0 0
      %1110 = vmatmul.mubr.bf16.gmra.mrb[0].mxu0 %v685
      %v1111 = vpop.f32.mrb[0].mxu0
      %v1112 = vadd.f32 %v1015, %v1111
      %v1113 = vpop.f32.mrb[0].mxu0
      %v1114 = vpop.f32.mrb[0].mxu0
      %v1115 = vadd.f32 %v1018, %v1114
      %v1116 = vpop.f32.mrb[0].mxu0
      %1117 = vmatprep.mubr.bf16.mxu0 0
      %1118 = vmatmul.mubr.bf16.gmra.mrb[0].mxu0 %v688
      %v1119 = vpop.f32.mrb[0].mxu0
      %v1120 = vadd.f32 %v1023, %v1119
      %v1121 = vpop.f32.mrb[0].mxu0
      %v1122 = vpop.f32.mrb[0].mxu0
      %v1123 = vadd.f32 %v1026, %v1122
      %v1124 = vpop.f32.mrb[0].mxu0
      %1125 = vmatprep.mubr.bf16.mxu0 0
      %1126 = vmatmul.mubr.bf16.gmra.mrb[0].mxu0 %v691
      %v1127 = vpop.f32.mrb[0].mxu0
      %v1128 = vadd.f32 %v1031, %v1127
      %v1129 = vpop.f32.mrb[0].mxu0
      %v1130 = vpop.f32.mrb[0].mxu0
      %v1131 = vadd.f32 %v1034, %v1130
      %v1132 = vpop.f32.mrb[0].mxu0
      %1133 = vmatprep.mubr.bf16.mxu0 0
      %1134 = vmatmul.mubr.bf16.gmra.mrb[0].mxu0 %v694
      %v1135 = vpop.f32.mrb[0].mxu0
      %v1136 = vadd.f32 %v1039, %v1135
      %v1137 = vpop.f32.mrb[0].mxu0
      %v1138 = vpop.f32.mrb[0].mxu0
      %v1139 = vadd.f32 %v1042, %v1138
      %v1140 = vpop.f32.mrb[0].mxu0
      %1141 = vmatprep.mubr.bf16.mxu0 0
      %1142 = vmatmul.mubr.bf16.gmra.mrb[0].mxu0 %v697
      %v1143 = vpop.f32.mrb[0].mxu0
      %v1144 = vadd.f32 %v1047, %v1143
      %v1145 = vpop.f32.mrb[0].mxu0
      %v1146 = vpop.f32.mrb[0].mxu0
      %v1147 = vadd.f32 %v1050, %v1146
      %v1148 = vpop.f32.mrb[0].mxu0
      %1149 = vmatprep.mubr.bf16.mxu0 0
      %1150 = vmatmul.mubr.bf16.gmra.mrb[0].mxu0 %v769
      %v1151 = vpop.f32.mrb[0].mxu0
      %v1152 = vadd.f32 %v1055, %v1151
      %v1153 = vpop.f32.mrb[0].mxu0
      %v1154 = vpop.f32.mrb[0].mxu0
      %v1155 = vadd.f32 %v1058, %v1154
      %v1156 = vpop.f32.mrb[0].mxu0
      %1157 = vdwg.mxu0
      %v1206 = vunpack.c.l.b16 %v706
      %v1207 = vunpack.c.l.b16 %v707
      %v1208 = vunpack.c.l.b16 %v708
      %v1209 = vunpack.c.l.b16 %v709
      %v1210 = vunpack.c.l.b16 %v710
      %v1211 = vunpack.c.l.b16 %v711
      %v1212 = vunpack.c.l.b16 %v712
      %v1213 = vunpack.c.l.b16 %v713
      %v1214 = vunpack.c.l.b16 %v714
      %v1215 = vunpack.c.l.b16 %v715
      %v1216 = vunpack.c.l.b16 %v716
      %v1217 = vunpack.c.l.b16 %v717
      %v1218 = vunpack.c.l.b16 %v718
      %v1219 = vunpack.c.l.b16 %v719
      %v1220 = vunpack.c.l.b16 %v720
      %v1221 = vunpack.c.l.b16 %v721
      %v1222 = vunpack.c.l.b16 %v722
      %v1223 = vunpack.c.l.b16 %v723
      %v1224 = vunpack.c.l.b16 %v724
      %v1225 = vunpack.c.l.b16 %v725
      %v1226 = vunpack.c.l.b16 %v726
      %v1227 = vunpack.c.l.b16 %v727
      %v1228 = vunpack.c.l.b16 %v728
      %v1229 = vunpack.c.l.b16 %v729
      %v1230 = vunpack.c.l.b16 %v730
      %v1231 = vunpack.c.l.b16 %v731
      %v1232 = vunpack.c.l.b16 %v732
      %v1233 = vunpack.c.l.b16 %v733
      %v1234 = vunpack.c.l.b16 %v734
      %v1235 = vunpack.c.l.b16 %v735
      %v1236 = vunpack.c.l.b16 %v736
      %v1237 = vunpack.c.l.b16 %v737
      %v1238 = vunpack.c.l.b16 %v738
      %v1239 = vunpack.c.l.b16 %v739
      %v1240 = vunpack.c.l.b16 %v740
      %v1241 = vunpack.c.l.b16 %v741
      %v1242 = vunpack.c.l.b16 %v742
      %v1243 = vunpack.c.l.b16 %v743
      %v1244 = vunpack.c.l.b16 %v744
      %v1245 = vunpack.c.l.b16 %v745
      %v1246 = vunpack.c.l.b16 %v746
      %v1247 = vunpack.c.l.b16 %v747
      %v1248 = vunpack.c.l.b16 %v748
      %v1249 = vunpack.c.l.b16 %v749
      %v1250 = vunpack.c.l.b16 %v750
      %v1251 = vunpack.c.l.b16 %v751
      %v1252 = vunpack.c.l.b16 %v752
      %v1253 = vunpack.c.l.b16 %v753
      %v1254 = vpack.c.b16 %v1207, %v1206
      %v1255 = vpack.c.b16 %v1209, %v1208
      %v1256 = vpack.c.b16 %v1211, %v1210
      %v1257 = vpack.c.b16 %v1213, %v1212
      %v1258 = vpack.c.b16 %v1215, %v1214
      %v1259 = vpack.c.b16 %v1217, %v1216
      %v1260 = vpack.c.b16 %v1219, %v1218
      %v1261 = vpack.c.b16 %v1221, %v1220
      %v1262 = vpack.c.b16 %v1223, %v1222
      %v1263 = vpack.c.b16 %v1225, %v1224
      %v1264 = vpack.c.b16 %v1227, %v1226
      %v1265 = vpack.c.b16 %v1229, %v1228
      %v1266 = vpack.c.b16 %v1231, %v1230
      %v1267 = vpack.c.b16 %v1233, %v1232
      %v1268 = vpack.c.b16 %v1235, %v1234
      %v1269 = vpack.c.b16 %v1237, %v1236
      %v1270 = vpack.c.b16 %v1239, %v1238
      %v1271 = vpack.c.b16 %v1241, %v1240
      %v1272 = vpack.c.b16 %v1243, %v1242
      %v1273 = vpack.c.b16 %v1245, %v1244
      %v1274 = vpack.c.b16 %v1247, %v1246
      %v1275 = vpack.c.b16 %v1249, %v1248
      %v1276 = vpack.c.b16 %v1251, %v1250
      %v1277 = vpack.c.b16 %v1253, %v1252
      %1302 = vmatprep.subr.bf16.mxu0 0
      %1303 = vmatpush1.bf16.msra.mxu0 %v1254
      %1304 = vmatprep.subr.bf16.mxu0 0
      %1305 = vmatpush1.bf16.msra.mxu0 %v1255
      %1306 = vmatprep.subr.bf16.mxu0 0
      %1307 = vmatpush1.bf16.msra.mxu0 %v1256
      %1308 = vmatprep.subr.bf16.mxu0 0
      %1309 = vmatpush1.bf16.msra.mxu0 %v1257
      %1310 = vmatprep.subr.bf16.mxu0 0
      %1311 = vmatpush1.bf16.msra.mxu0 %v1258
      %1312 = vmatprep.subr.bf16.mxu0 0
      %1313 = vmatpush1.bf16.msra.mxu0 %v1259
      %1314 = vmatprep.subr.bf16.mxu0 0
      %1315 = vmatpush1.bf16.msra.mxu0 %v1260
      %1316 = vmatprep.subr.bf16.mxu0 0
      %1317 = vmatpush1.bf16.msra.mxu0 %v1261
      %1318 = vmatprep.subr.bf16.mxu0 0
      %1319 = vmatpush1.bf16.msra.mxu0 %v1262
      %1320 = vmatprep.subr.bf16.mxu0 0
      %1321 = vmatpush1.bf16.msra.mxu0 %v1263
      %1322 = vmatprep.subr.bf16.mxu0 0
      %1323 = vmatpush1.bf16.msra.mxu0 %v1264
      %1324 = vmatprep.subr.bf16.mxu0 0
      %1325 = vmatpush1.bf16.msra.mxu0 %v1265
      %1326 = vmatprep.subr.bf16.mxu0 0
      %1327 = vmatpush1.bf16.msra.mxu0 %v1266
      %1328 = vmatprep.subr.bf16.mxu0 0
      %1329 = vmatpush1.bf16.msra.mxu0 %v1267
      %1330 = vmatprep.subr.bf16.mxu0 0
      %1331 = vmatpush1.bf16.msra.mxu0 %v1268
      %1332 = vmatprep.subr.bf16.mxu0 0
      %1333 = vmatpush1.bf16.msra.mxu0 %v1269
      %1334 = vmatprep.mubr.bf16.mxu0 %v578
      %1335 = vmatmul.mubr.bf16.gmra.mrb[0].mxu0 %v456
      %v1336 = vpop.f32.mrb[0].mxu0
      %v1337 = vadd.f32 %v1096, %v1336
      %v1338 = vpop.f32.mrb[0].mxu0
      %v1339 = vpop.f32.mrb[0].mxu0
      %v1340 = vadd.f32 %v1099, %v1339
      %v1341 = vpop.f32.mrb[0].mxu0
      %1342 = vmatprep.mubr.bf16.mxu0 %v590
      %1343 = vmatmul.mubr.bf16.gmra.mrb[0].mxu0 %v542
      %v1344 = vpop.f32.mrb[0].mxu0
      %v1345 = vadd.f32 %v1104, %v1344
      %v1346 = vpop.f32.mrb[0].mxu0
      %v1347 = vpop.f32.mrb[0].mxu0
      %v1348 = vadd.f32 %v1107, %v1347
      %v1349 = vpop.f32.mrb[0].mxu0
      %1350 = vmatprep.mubr.bf16.mxu0 %v602
      %1351 = vmatmul.mubr.bf16.gmra.mrb[0].mxu0 %v544
      %v1352 = vpop.f32.mrb[0].mxu0
      %v1353 = vadd.f32 %v1112, %v1352
      %v1354 = vpop.f32.mrb[0].mxu0
      %v1355 = vpop.f32.mrb[0].mxu0
      %v1356 = vadd.f32 %v1115, %v1355
      %v1357 = vpop.f32.mrb[0].mxu0
      %1358 = vmatprep.mubr.bf16.mxu0 %v614
      %1359 = vmatmul.mubr.bf16.gmra.mrb[0].mxu0 %v546
      %v1360 = vpop.f32.mrb[0].mxu0
      %v1361 = vadd.f32 %v1120, %v1360
      %v1362 = vpop.f32.mrb[0].mxu0
      %v1363 = vpop.f32.mrb[0].mxu0
      %v1364 = vadd.f32 %v1123, %v1363
      %v1365 = vpop.f32.mrb[0].mxu0
      %1366 = vmatprep.mubr.bf16.mxu0 %v626
      %1367 = vmatmul.mubr.bf16.gmra.mrb[0].mxu0 %v548
      %v1368 = vpop.f32.mrb[0].mxu0
      %v1369 = vadd.f32 %v1128, %v1368
      %v1370 = vpop.f32.mrb[0].mxu0
      %v1371 = vpop.f32.mrb[0].mxu0
      %v1372 = vadd.f32 %v1131, %v1371
      %v1373 = vpop.f32.mrb[0].mxu0
      %1374 = vmatprep.mubr.bf16.mxu0 %v638
      %1375 = vmatmul.mubr.bf16.gmra.mrb[0].mxu0 %v550
      %v1376 = vpop.f32.mrb[0].mxu0
      %v1377 = vadd.f32 %v1136, %v1376
      %v1378 = vpop.f32.mrb[0].mxu0
      %v1379 = vpop.f32.mrb[0].mxu0
      %v1380 = vadd.f32 %v1139, %v1379
      %v1381 = vpop.f32.mrb[0].mxu0
      %1382 = vmatprep.mubr.bf16.mxu0 %v650
      %1383 = vmatmul.mubr.bf16.gmra.mrb[0].mxu0 %v552
      %v1384 = vpop.f32.mrb[0].mxu0
      %v1385 = vadd.f32 %v1144, %v1384
      %v1386 = vpop.f32.mrb[0].mxu0
      %v1387 = vpop.f32.mrb[0].mxu0
      %v1388 = vadd.f32 %v1147, %v1387
      %v1389 = vpop.f32.mrb[0].mxu0
      %1390 = vmatprep.mubr.bf16.mxu0 %v662
      %1391 = vmatmul.mubr.bf16.gmra.mrb[0].mxu0 %v554
      %v1392 = vpop.f32.mrb[0].mxu0
      %v1393 = vadd.f32 %v1152, %v1392
      %v1394 = vpop.f32.mrb[0].mxu0
      %v1395 = vpop.f32.mrb[0].mxu0
      %v1396 = vadd.f32 %v1155, %v1395
      %v1397 = vpop.f32.mrb[0].mxu0
      %1398 = vdwg.mxu0
      %1399 = vmatprep.subr.bf16.mxu0 0
      %1400 = vmatpush1.bf16.msra.mxu0 %v1270
      %1401 = vmatprep.subr.bf16.mxu0 0
      %1402 = vmatpush1.bf16.msra.mxu0 %v1271
      %1403 = vmatprep.subr.bf16.mxu0 0
      %1404 = vmatpush1.bf16.msra.mxu0 %v1272
      %1405 = vmatprep.subr.bf16.mxu0 0
      %1406 = vmatpush1.bf16.msra.mxu0 %v1273
      %1407 = vmatprep.subr.bf16.mxu0 0
      %1408 = vmatpush1.bf16.msra.mxu0 %v1274
      %1409 = vmatprep.subr.bf16.mxu0 0
      %1410 = vmatpush1.bf16.msra.mxu0 %v1275
      %1411 = vmatprep.subr.bf16.mxu0 0
      %1412 = vmatpush1.bf16.msra.mxu0 %v1276
      %1413 = vmatprep.subr.bf16.mxu0 0
      %1414 = vmatpush1.bf16.msra.mxu0 %v1277
      %1415 = vmatprep.subr.bf16.mxu0 0
      %1416 = vmatpush1.bf16.msra.mxu0 0
      %1417 = vmatprep.subr.bf16.mxu0 0
      %1418 = vmatpush1.bf16.msra.mxu0 0
      %1419 = vmatprep.subr.bf16.mxu0 0
      %1420 = vmatpush1.bf16.msra.mxu0 0
      %1421 = vmatprep.subr.bf16.mxu0 0
      %1422 = vmatpush1.bf16.msra.mxu0 0
      %1423 = vmatprep.subr.bf16.mxu0 0
      %1424 = vmatpush1.bf16.msra.mxu0 0
      %1425 = vmatprep.subr.bf16.mxu0 0
      %1426 = vmatpush1.bf16.msra.mxu0 0
      %1427 = vmatprep.subr.bf16.mxu0 0
      %1428 = vmatpush1.bf16.msra.mxu0 0
      %1429 = vmatprep.subr.bf16.mxu0 0
      %1430 = vmatpush1.bf16.msra.mxu0 0
      %1431 = vmatprep.mubr.bf16.mxu0 0
      %1432 = vmatmul.mubr.bf16.gmra.mrb[0].mxu0 %v676
      %v1433 = vpop.f32.mrb[0].mxu0
      %v1434 = vadd.f32 %v1337, %v1433
      %v1435 = vpop.f32.mrb[0].mxu0
      %v1436 = vpop.f32.mrb[0].mxu0
      %v1437 = vadd.f32 %v1340, %v1436
      %v1438 = vpop.f32.mrb[0].mxu0
      %1439 = vmatprep.mubr.bf16.mxu0 0
      %1440 = vmatmul.mubr.bf16.gmra.mrb[0].mxu0 %v679
      %v1441 = vpop.f32.mrb[0].mxu0
      %v1442 = vadd.f32 %v1345, %v1441
      %v1443 = vpop.f32.mrb[0].mxu0
      %v1444 = vpop.f32.mrb[0].mxu0
      %v1445 = vadd.f32 %v1348, %v1444
      %v1446 = vpop.f32.mrb[0].mxu0
      %1447 = vmatprep.mubr.bf16.mxu0 0
      %1448 = vmatmul.mubr.bf16.gmra.mrb[0].mxu0 %v682
      %v1449 = vpop.f32.mrb[0].mxu0
      %v1450 = vadd.f32 %v1353, %v1449
      %v1451 = vpop.f32.mrb[0].mxu0
      %v1452 = vpop.f32.mrb[0].mxu0
      %v1453 = vadd.f32 %v1356, %v1452
      %v1454 = vpop.f32.mrb[0].mxu0
      %1455 = vmatprep.mubr.bf16.mxu0 0
      %1456 = vmatmul.mubr.bf16.gmra.mrb[0].mxu0 %v685
      %v1457 = vpop.f32.mrb[0].mxu0
      %v1458 = vadd.f32 %v1361, %v1457
      %v1459 = vpop.f32.mrb[0].mxu0
      %v1460 = vpop.f32.mrb[0].mxu0
      %v1461 = vadd.f32 %v1364, %v1460
      %v1462 = vpop.f32.mrb[0].mxu0
      %1463 = vmatprep.mubr.bf16.mxu0 0
      %1464 = vmatmul.mubr.bf16.gmra.mrb[0].mxu0 %v688
      %v1465 = vpop.f32.mrb[0].mxu0
      %v1466 = vadd.f32 %v1369, %v1465
      %v1467 = vpop.f32.mrb[0].mxu0
      %v1468 = vpop.f32.mrb[0].mxu0
      %v1469 = vadd.f32 %v1372, %v1468
      %v1470 = vpop.f32.mrb[0].mxu0
      %1471 = vmatprep.mubr.bf16.mxu0 0
      %1472 = vmatmul.mubr.bf16.gmra.mrb[0].mxu0 %v691
      %v1473 = vpop.f32.mrb[0].mxu0
      %v1474 = vadd.f32 %v1377, %v1473
      %v1475 = vpop.f32.mrb[0].mxu0
      %v1476 = vpop.f32.mrb[0].mxu0
      %v1477 = vadd.f32 %v1380, %v1476
      %v1478 = vpop.f32.mrb[0].mxu0
      %1479 = vmatprep.mubr.bf16.mxu0 0
      %1480 = vmatmul.mubr.bf16.gmra.mrb[0].mxu0 %v694
      %v1481 = vpop.f32.mrb[0].mxu0
      %v1482 = vadd.f32 %v1385, %v1481
      %v1483 = vpop.f32.mrb[0].mxu0
      %v1484 = vpop.f32.mrb[0].mxu0
      %v1485 = vadd.f32 %v1388, %v1484
      %v1486 = vpop.f32.mrb[0].mxu0
      %1487 = vmatprep.mubr.bf16.mxu0 0
      %1488 = vmatmul.mubr.bf16.gmra.mrb[0].mxu0 %v697
      %v1489 = vpop.f32.mrb[0].mxu0
      %v1490 = vadd.f32 %v1393, %v1489
      %v1491 = vpop.f32.mrb[0].mxu0
      %v1492 = vpop.f32.mrb[0].mxu0
      %v1493 = vadd.f32 %v1396, %v1492
      %v1494 = vpop.f32.mrb[0].mxu0
      %1495 = vdwg.mxu0
      %v1497 = vshrl.u32 %v468, 16
      %v1499 = vshll.u32 %v468, 16
      %v1501 = vrot.slane %v1499, 1
      %v1502 = vor.u32 %v1497, %v1501
      %v1504 = vshll.u32 %v469, 16
      %v1506 = vrot.slane %v1504, 1
      %v1507 = vsel %vm566, %v1502, %v1506
      %v1511 = vrot.slane %v468, 1
      %v1512 = vrot.slane %v469, 1
      %v1513 = vsel %vm673, %v1511, %v1512
      %s1515 = scalar_lea.vmem %s3, 384
      %v1516 = vld [vmem:[%s1515] sm:$0xf]
      %v1517 = vld [vmem:[%s1515 + $0x4] sm:$0xf]
      %v1518 = vld [vmem:[%s1515 + $0x8] sm:$0xf]
      %v1519 = vld [vmem:[%s1515 + $0xc] sm:$0xf]
      %v1520 = vld [vmem:[%s1515 + $0x10] sm:$0xf]
      %v1521 = vld [vmem:[%s1515 + $0x14] sm:$0xf]
      %v1522 = vld [vmem:[%s1515 + $0x18] sm:$0xf]
      %v1523 = vld [vmem:[%s1515 + $0x1c] sm:$0xf]
      %v1524 = vld [vmem:[%s1515 + $0x20] sm:$0xf]
      %v1525 = vld [vmem:[%s1515 + $0x24] sm:$0xf]
      %v1526 = vld [vmem:[%s1515 + $0x28] sm:$0xf]
      %v1527 = vld [vmem:[%s1515 + $0x2c] sm:$0xf]
      %v1528 = vld [vmem:[%s1515 + $0x30] sm:$0xf]
      %v1529 = vld [vmem:[%s1515 + $0x34] sm:$0xf]
      %v1530 = vld [vmem:[%s1515 + $0x38] sm:$0xf]
      %v1531 = vld [vmem:[%s1515 + $0x3c] sm:$0xf]
      %v1532 = vld [vmem:[%s1515 + $0x40] sm:$0xf]
      %v1533 = vld [vmem:[%s1515 + $0x44] sm:$0xf]
      %v1534 = vld [vmem:[%s1515 + $0x48] sm:$0xf]
      %v1535 = vld [vmem:[%s1515 + $0x4c] sm:$0xf]
      %v1536 = vld [vmem:[%s1515 + $0x50] sm:$0xf]
      %v1537 = vld [vmem:[%s1515 + $0x54] sm:$0xf]
      %v1538 = vld [vmem:[%s1515 + $0x58] sm:$0xf]
      %v1539 = vld [vmem:[%s1515 + $0x5c] sm:$0xf]
      %v1540 = vld [vmem:[%s1515 + $0x60] sm:$0xf]
      %v1541 = vld [vmem:[%s1515 + $0x64] sm:$0xf]
      %v1542 = vld [vmem:[%s1515 + $0x68] sm:$0xf]
      %v1543 = vld [vmem:[%s1515 + $0x6c] sm:$0xf]
      %v1544 = vld [vmem:[%s1515 + $0x70] sm:$0xf]
      %v1545 = vld [vmem:[%s1515 + $0x74] sm:$0xf]
      %v1546 = vld [vmem:[%s1515 + $0x78] sm:$0xf]
      %v1547 = vld [vmem:[%s1515 + $0x7c] sm:$0xf]
      %v1548 = vld [vmem:[%s1515 + $0x80] sm:$0xf]
      %v1549 = vld [vmem:[%s1515 + $0x84] sm:$0xf]
      %v1550 = vld [vmem:[%s1515 + $0x88] sm:$0xf]
      %v1551 = vld [vmem:[%s1515 + $0x8c] sm:$0xf]
      %v1552 = vld [vmem:[%s1515 + $0x90] sm:$0xf]
      %v1553 = vld [vmem:[%s1515 + $0x94] sm:$0xf]
      %v1554 = vld [vmem:[%s1515 + $0x98] sm:$0xf]
      %v1555 = vld [vmem:[%s1515 + $0x9c] sm:$0xf]
      %v1556 = vld [vmem:[%s1515 + $0xa0] sm:$0xf]
      %v1557 = vld [vmem:[%s1515 + $0xa4] sm:$0xf]
      %v1558 = vld [vmem:[%s1515 + $0xa8] sm:$0xf]
      %v1559 = vld [vmem:[%s1515 + $0xac] sm:$0xf]
      %v1560 = vld [vmem:[%s1515 + $0xb0] sm:$0xf]
      %v1561 = vld [vmem:[%s1515 + $0xb4] sm:$0xf]
      %v1562 = vld [vmem:[%s1515 + $0xb8] sm:$0xf]
      %v1563 = vld [vmem:[%s1515 + $0xbc] sm:$0xf]
      %v1612 = vunpack.c.l.b16 %v1516
      %v1613 = vunpack.c.l.b16 %v1517
      %v1614 = vunpack.c.l.b16 %v1518
      %v1615 = vunpack.c.l.b16 %v1519
      %v1616 = vunpack.c.l.b16 %v1520
      %v1617 = vunpack.c.l.b16 %v1521
      %v1618 = vunpack.c.l.b16 %v1522
      %v1619 = vunpack.c.l.b16 %v1523
      %v1620 = vunpack.c.l.b16 %v1524
      %v1621 = vunpack.c.l.b16 %v1525
      %v1622 = vunpack.c.l.b16 %v1526
      %v1623 = vunpack.c.l.b16 %v1527
      %v1624 = vunpack.c.l.b16 %v1528
      %v1625 = vunpack.c.l.b16 %v1529
      %v1626 = vunpack.c.l.b16 %v1530
      %v1627 = vunpack.c.l.b16 %v1531
      %v1628 = vunpack.c.l.b16 %v1532
      %v1629 = vunpack.c.l.b16 %v1533
      %v1630 = vunpack.c.l.b16 %v1534
      %v1631 = vunpack.c.l.b16 %v1535
      %v1632 = vunpack.c.l.b16 %v1536
      %v1633 = vunpack.c.l.b16 %v1537
      %v1634 = vunpack.c.l.b16 %v1538
      %v1635 = vunpack.c.l.b16 %v1539
      %v1636 = vunpack.c.l.b16 %v1540
      %v1637 = vunpack.c.l.b16 %v1541
      %v1638 = vunpack.c.l.b16 %v1542
      %v1639 = vunpack.c.l.b16 %v1543
      %v1640 = vunpack.c.l.b16 %v1544
      %v1641 = vunpack.c.l.b16 %v1545
      %v1642 = vunpack.c.l.b16 %v1546
      %v1643 = vunpack.c.l.b16 %v1547
      %v1644 = vunpack.c.l.b16 %v1548
      %v1645 = vunpack.c.l.b16 %v1549
      %v1646 = vunpack.c.l.b16 %v1550
      %v1647 = vunpack.c.l.b16 %v1551
      %v1648 = vunpack.c.l.b16 %v1552
      %v1649 = vunpack.c.l.b16 %v1553
      %v1650 = vunpack.c.l.b16 %v1554
      %v1651 = vunpack.c.l.b16 %v1555
      %v1652 = vunpack.c.l.b16 %v1556
      %v1653 = vunpack.c.l.b16 %v1557
      %v1654 = vunpack.c.l.b16 %v1558
      %v1655 = vunpack.c.l.b16 %v1559
      %v1656 = vunpack.c.l.b16 %v1560
      %v1657 = vunpack.c.l.b16 %v1561
      %v1658 = vunpack.c.l.b16 %v1562
      %v1659 = vunpack.c.l.b16 %v1563
      %v1660 = vpack.c.b16 %v1613, %v1612
      %v1661 = vpack.c.b16 %v1615, %v1614
      %v1662 = vpack.c.b16 %v1617, %v1616
      %v1663 = vpack.c.b16 %v1619, %v1618
      %v1664 = vpack.c.b16 %v1621, %v1620
      %v1665 = vpack.c.b16 %v1623, %v1622
      %v1666 = vpack.c.b16 %v1625, %v1624
      %v1667 = vpack.c.b16 %v1627, %v1626
      %v1668 = vpack.c.b16 %v1629, %v1628
      %v1669 = vpack.c.b16 %v1631, %v1630
      %v1670 = vpack.c.b16 %v1633, %v1632
      %v1671 = vpack.c.b16 %v1635, %v1634
      %v1672 = vpack.c.b16 %v1637, %v1636
      %v1673 = vpack.c.b16 %v1639, %v1638
      %v1674 = vpack.c.b16 %v1641, %v1640
      %v1675 = vpack.c.b16 %v1643, %v1642
      %v1676 = vpack.c.b16 %v1645, %v1644
      %v1677 = vpack.c.b16 %v1647, %v1646
      %v1678 = vpack.c.b16 %v1649, %v1648
      %v1679 = vpack.c.b16 %v1651, %v1650
      %v1680 = vpack.c.b16 %v1653, %v1652
      %v1681 = vpack.c.b16 %v1655, %v1654
      %v1682 = vpack.c.b16 %v1657, %v1656
      %v1683 = vpack.c.b16 %v1659, %v1658
      %1708 = vmatprep.subr.bf16.mxu0 0
      %1709 = vmatpush1.bf16.msra.mxu0 %v1660
      %1710 = vmatprep.subr.bf16.mxu0 0
      %1711 = vmatpush1.bf16.msra.mxu0 %v1661
      %1712 = vmatprep.subr.bf16.mxu0 0
      %1713 = vmatpush1.bf16.msra.mxu0 %v1662
      %1714 = vmatprep.subr.bf16.mxu0 0
      %1715 = vmatpush1.bf16.msra.mxu0 %v1663
      %1716 = vmatprep.subr.bf16.mxu0 0
      %1717 = vmatpush1.bf16.msra.mxu0 %v1664
      %1718 = vmatprep.subr.bf16.mxu0 0
      %1719 = vmatpush1.bf16.msra.mxu0 %v1665
      %1720 = vmatprep.subr.bf16.mxu0 0
      %1721 = vmatpush1.bf16.msra.mxu0 %v1666
      %1722 = vmatprep.subr.bf16.mxu0 0
      %1723 = vmatpush1.bf16.msra.mxu0 %v1667
      %1724 = vmatprep.subr.bf16.mxu0 0
      %1725 = vmatpush1.bf16.msra.mxu0 %v1668
      %1726 = vmatprep.subr.bf16.mxu0 0
      %1727 = vmatpush1.bf16.msra.mxu0 %v1669
      %1728 = vmatprep.subr.bf16.mxu0 0
      %1729 = vmatpush1.bf16.msra.mxu0 %v1670
      %1730 = vmatprep.subr.bf16.mxu0 0
      %1731 = vmatpush1.bf16.msra.mxu0 %v1671
      %1732 = vmatprep.subr.bf16.mxu0 0
      %1733 = vmatpush1.bf16.msra.mxu0 %v1672
      %1734 = vmatprep.subr.bf16.mxu0 0
      %1735 = vmatpush1.bf16.msra.mxu0 %v1673
      %1736 = vmatprep.subr.bf16.mxu0 0
      %1737 = vmatpush1.bf16.msra.mxu0 %v1674
      %1738 = vmatprep.subr.bf16.mxu0 0
      %1739 = vmatpush1.bf16.msra.mxu0 %v1675
      %1740 = vmatprep.mubr.bf16.mxu0 %v602
      %1741 = vmatmul.mubr.bf16.gmra.mrb[0].mxu0 %v544
      %v1742 = vpop.f32.mrb[0].mxu0
      %v1743 = vadd.f32 0.0, %v1742
      %v1744 = vpop.f32.mrb[0].mxu0
      %v1745 = vpop.f32.mrb[0].mxu0
      %v1746 = vadd.f32 0.0, %v1745
      %v1747 = vpop.f32.mrb[0].mxu0
      %1748 = vmatprep.mubr.bf16.mxu0 %v614
      %1749 = vmatmul.mubr.bf16.gmra.mrb[0].mxu0 %v546
      %v1750 = vpop.f32.mrb[0].mxu0
      %v1751 = vadd.f32 0.0, %v1750
      %v1752 = vpop.f32.mrb[0].mxu0
      %v1753 = vpop.f32.mrb[0].mxu0
      %v1754 = vadd.f32 0.0, %v1753
      %v1755 = vpop.f32.mrb[0].mxu0
      %1756 = vmatprep.mubr.bf16.mxu0 %v626
      %1757 = vmatmul.mubr.bf16.gmra.mrb[0].mxu0 %v548
      %v1758 = vpop.f32.mrb[0].mxu0
      %v1759 = vadd.f32 0.0, %v1758
      %v1760 = vpop.f32.mrb[0].mxu0
      %v1761 = vpop.f32.mrb[0].mxu0
      %v1762 = vadd.f32 0.0, %v1761
      %v1763 = vpop.f32.mrb[0].mxu0
      %1764 = vmatprep.mubr.bf16.mxu0 %v638
      %1765 = vmatmul.mubr.bf16.gmra.mrb[0].mxu0 %v550
      %v1766 = vpop.f32.mrb[0].mxu0
      %v1767 = vadd.f32 0.0, %v1766
      %v1768 = vpop.f32.mrb[0].mxu0
      %v1769 = vpop.f32.mrb[0].mxu0
      %v1770 = vadd.f32 0.0, %v1769
      %v1771 = vpop.f32.mrb[0].mxu0
      %1772 = vmatprep.mubr.bf16.mxu0 %v650
      %1773 = vmatmul.mubr.bf16.gmra.mrb[0].mxu0 %v552
      %v1774 = vpop.f32.mrb[0].mxu0
      %v1775 = vadd.f32 0.0, %v1774
      %v1776 = vpop.f32.mrb[0].mxu0
      %v1777 = vpop.f32.mrb[0].mxu0
      %v1778 = vadd.f32 0.0, %v1777
      %v1779 = vpop.f32.mrb[0].mxu0
      %1780 = vmatprep.mubr.bf16.mxu0 %v662
      %1781 = vmatmul.mubr.bf16.gmra.mrb[0].mxu0 %v554
      %v1782 = vpop.f32.mrb[0].mxu0
      %v1783 = vadd.f32 0.0, %v1782
      %v1784 = vpop.f32.mrb[0].mxu0
      %v1785 = vpop.f32.mrb[0].mxu0
      %v1786 = vadd.f32 0.0, %v1785
      %v1787 = vpop.f32.mrb[0].mxu0
      %1788 = vmatprep.mubr.bf16.mxu0 %v765
      %1789 = vmatmul.mubr.bf16.gmra.mrb[0].mxu0 %v556
      %v1790 = vpop.f32.mrb[0].mxu0
      %v1791 = vadd.f32 0.0, %v1790
      %v1792 = vpop.f32.mrb[0].mxu0
      %v1793 = vpop.f32.mrb[0].mxu0
      %v1794 = vadd.f32 0.0, %v1793
      %v1795 = vpop.f32.mrb[0].mxu0
      %1796 = vmatprep.mubr.bf16.mxu0 %v1507
      %1797 = vmatmul.mubr.bf16.gmra.mrb[0].mxu0 %v468
      %v1798 = vpop.f32.mrb[0].mxu0
      %v1799 = vadd.f32 0.0, %v1798
      %v1800 = vpop.f32.mrb[0].mxu0
      %v1801 = vpop.f32.mrb[0].mxu0
      %v1802 = vadd.f32 0.0, %v1801
      %v1803 = vpop.f32.mrb[0].mxu0
      %1804 = vdwg.mxu0
      %1805 = vmatprep.subr.bf16.mxu0 0
      %1806 = vmatpush1.bf16.msra.mxu0 %v1676
      %1807 = vmatprep.subr.bf16.mxu0 0
      %1808 = vmatpush1.bf16.msra.mxu0 %v1677
      %1809 = vmatprep.subr.bf16.mxu0 0
      %1810 = vmatpush1.bf16.msra.mxu0 %v1678
      %1811 = vmatprep.subr.bf16.mxu0 0
      %1812 = vmatpush1.bf16.msra.mxu0 %v1679
      %1813 = vmatprep.subr.bf16.mxu0 0
      %1814 = vmatpush1.bf16.msra.mxu0 %v1680
      %1815 = vmatprep.subr.bf16.mxu0 0
      %1816 = vmatpush1.bf16.msra.mxu0 %v1681
      %1817 = vmatprep.subr.bf16.mxu0 0
      %1818 = vmatpush1.bf16.msra.mxu0 %v1682
      %1819 = vmatprep.subr.bf16.mxu0 0
      %1820 = vmatpush1.bf16.msra.mxu0 %v1683
      %1821 = vmatprep.subr.bf16.mxu0 0
      %1822 = vmatpush1.bf16.msra.mxu0 0
      %1823 = vmatprep.subr.bf16.mxu0 0
      %1824 = vmatpush1.bf16.msra.mxu0 0
      %1825 = vmatprep.subr.bf16.mxu0 0
      %1826 = vmatpush1.bf16.msra.mxu0 0
      %1827 = vmatprep.subr.bf16.mxu0 0
      %1828 = vmatpush1.bf16.msra.mxu0 0
      %1829 = vmatprep.subr.bf16.mxu0 0
      %1830 = vmatpush1.bf16.msra.mxu0 0
      %1831 = vmatprep.subr.bf16.mxu0 0
      %1832 = vmatpush1.bf16.msra.mxu0 0
      %1833 = vmatprep.subr.bf16.mxu0 0
      %1834 = vmatpush1.bf16.msra.mxu0 0
      %1835 = vmatprep.subr.bf16.mxu0 0
      %1836 = vmatpush1.bf16.msra.mxu0 0
      %1837 = vmatprep.mubr.bf16.mxu0 0
      %1838 = vmatmul.mubr.bf16.gmra.mrb[0].mxu0 %v682
      %v1839 = vpop.f32.mrb[0].mxu0
      %v1840 = vadd.f32 %v1743, %v1839
      %v1841 = vpop.f32.mrb[0].mxu0
      %v1842 = vpop.f32.mrb[0].mxu0
      %v1843 = vadd.f32 %v1746, %v1842
      %v1844 = vpop.f32.mrb[0].mxu0
      %1845 = vmatprep.mubr.bf16.mxu0 0
      %1846 = vmatmul.mubr.bf16.gmra.mrb[0].mxu0 %v685
      %v1847 = vpop.f32.mrb[0].mxu0
      %v1848 = vadd.f32 %v1751, %v1847
      %v1849 = vpop.f32.mrb[0].mxu0
      %v1850 = vpop.f32.mrb[0].mxu0
      %v1851 = vadd.f32 %v1754, %v1850
      %v1852 = vpop.f32.mrb[0].mxu0
      %1853 = vmatprep.mubr.bf16.mxu0 0
      %1854 = vmatmul.mubr.bf16.gmra.mrb[0].mxu0 %v688
      %v1855 = vpop.f32.mrb[0].mxu0
      %v1856 = vadd.f32 %v1759, %v1855
      %v1857 = vpop.f32.mrb[0].mxu0
      %v1858 = vpop.f32.mrb[0].mxu0
      %v1859 = vadd.f32 %v1762, %v1858
      %v1860 = vpop.f32.mrb[0].mxu0
      %1861 = vmatprep.mubr.bf16.mxu0 0
      %1862 = vmatmul.mubr.bf16.gmra.mrb[0].mxu0 %v691
      %v1863 = vpop.f32.mrb[0].mxu0
      %v1864 = vadd.f32 %v1767, %v1863
      %v1865 = vpop.f32.mrb[0].mxu0
      %v1866 = vpop.f32.mrb[0].mxu0
      %v1867 = vadd.f32 %v1770, %v1866
      %v1868 = vpop.f32.mrb[0].mxu0
      %1869 = vmatprep.mubr.bf16.mxu0 0
      %1870 = vmatmul.mubr.bf16.gmra.mrb[0].mxu0 %v694
      %v1871 = vpop.f32.mrb[0].mxu0
      %v1872 = vadd.f32 %v1775, %v1871
      %v1873 = vpop.f32.mrb[0].mxu0
      %v1874 = vpop.f32.mrb[0].mxu0
      %v1875 = vadd.f32 %v1778, %v1874
      %v1876 = vpop.f32.mrb[0].mxu0
      %1877 = vmatprep.mubr.bf16.mxu0 0
      %1878 = vmatmul.mubr.bf16.gmra.mrb[0].mxu0 %v697
      %v1879 = vpop.f32.mrb[0].mxu0
      %v1880 = vadd.f32 %v1783, %v1879
      %v1881 = vpop.f32.mrb[0].mxu0
      %v1882 = vpop.f32.mrb[0].mxu0
      %v1883 = vadd.f32 %v1786, %v1882
      %v1884 = vpop.f32.mrb[0].mxu0
      %1885 = vmatprep.mubr.bf16.mxu0 0
      %1886 = vmatmul.mubr.bf16.gmra.mrb[0].mxu0 %v769
      %v1887 = vpop.f32.mrb[0].mxu0
      %v1888 = vadd.f32 %v1791, %v1887
      %v1889 = vpop.f32.mrb[0].mxu0
      %v1890 = vpop.f32.mrb[0].mxu0
      %v1891 = vadd.f32 %v1794, %v1890
      %v1892 = vpop.f32.mrb[0].mxu0
      %1893 = vmatprep.mubr.bf16.mxu0 0
      %1894 = vmatmul.mubr.bf16.gmra.mrb[0].mxu0 %v1513
      %v1895 = vpop.f32.mrb[0].mxu0
      %v1896 = vadd.f32 %v1799, %v1895
      %v1897 = vpop.f32.mrb[0].mxu0
      %v1898 = vpop.f32.mrb[0].mxu0
      %v1899 = vadd.f32 %v1802, %v1898
      %v1900 = vpop.f32.mrb[0].mxu0
      %1901 = vdwg.mxu0
      %v1902 = vadd.f32 %v1434, %v1840
      %v1903 = vadd.f32 %v1437, %v1843
      %v1904 = vadd.f32 %v1442, %v1848
      %v1905 = vadd.f32 %v1445, %v1851
      %v1906 = vadd.f32 %v1450, %v1856
      %v1907 = vadd.f32 %v1453, %v1859
      %v1908 = vadd.f32 %v1458, %v1864
      %v1909 = vadd.f32 %v1461, %v1867
      %v1910 = vadd.f32 %v1466, %v1872
      %v1911 = vadd.f32 %v1469, %v1875
      %v1912 = vadd.f32 %v1474, %v1880
      %v1913 = vadd.f32 %v1477, %v1883
      %v1914 = vadd.f32 %v1482, %v1888
      %v1915 = vadd.f32 %v1485, %v1891
      %v1916 = vadd.f32 %v1490, %v1896
      %v1917 = vadd.f32 %v1493, %v1899
      %v1918 = vld [vmem:[%s4] sm:$0x1]
      %v1920 = vlaneseq
      %v1921 = vshrl.u32 %v1920, 7
      %v1922 = vsub.s32 0, %v1921
      %v1923 = vrot.slane %v1918, %v1922
      %v1925 = vadd.f32 %v1902, %v1923
      %v1926 = vadd.f32 %v1903, %v1923
      %v1927 = vadd.f32 %v1904, %v1923
      %v1928 = vadd.f32 %v1905, %v1923
      %v1929 = vadd.f32 %v1906, %v1923
      %v1930 = vadd.f32 %v1907, %v1923
      %v1931 = vadd.f32 %v1908, %v1923
      %v1932 = vadd.f32 %v1909, %v1923
      %v1933 = vadd.f32 %v1910, %v1923
      %v1934 = vadd.f32 %v1911, %v1923
      %v1935 = vadd.f32 %v1912, %v1923
      %v1936 = vadd.f32 %v1913, %v1923
      %v1937 = vadd.f32 %v1914, %v1923
      %v1938 = vadd.f32 %v1915, %v1923
      %v1939 = vadd.f32 %v1916, %v1923
      %v1940 = vadd.f32 %v1917, %v1923
      %v1941 = vpack.c.bf16 %v1926, %v1925
      %v1942 = vpack.c.bf16 %v1928, %v1927
      %v1943 = vpack.c.bf16 %v1930, %v1929
      %v1944 = vpack.c.bf16 %v1932, %v1931
      %v1945 = vpack.c.bf16 %v1934, %v1933
      %v1946 = vpack.c.bf16 %v1936, %v1935
      %v1947 = vpack.c.bf16 %v1938, %v1937
      %v1948 = vpack.c.bf16 %v1940, %v1939
      %v1957 = vunpack.c.l.b16 %v1941
      %v1958 = vunpack.c.h.b16 %v1941
      %v1959 = vunpack.c.l.b16 %v1942
      %v1960 = vunpack.c.h.b16 %v1942
      %v1961 = vunpack.c.l.b16 %v1943
      %v1962 = vunpack.c.h.b16 %v1943
      %v1963 = vunpack.c.l.b16 %v1944
      %v1964 = vunpack.c.h.b16 %v1944
      %v1965 = vunpack.c.l.b16 %v1945
      %v1966 = vunpack.c.h.b16 %v1945
      %v1967 = vunpack.c.l.b16 %v1946
      %v1968 = vunpack.c.h.b16 %v1946
      %v1969 = vunpack.c.l.b16 %v1947
      %v1970 = vunpack.c.h.b16 %v1947
      %v1971 = vunpack.c.l.b16 %v1948
      %v1972 = vunpack.c.h.b16 %v1948
      %v1973 = vpack.c.b16 %v1957, %v1957
      %v1974 = vpack.c.b16 %v1958, %v1958
      %v1975 = vpack.c.b16 %v1959, %v1959
      %v1976 = vpack.c.b16 %v1960, %v1960
      %v1977 = vpack.c.b16 %v1961, %v1961
      %v1978 = vpack.c.b16 %v1962, %v1962
      %v1979 = vpack.c.b16 %v1963, %v1963
      %v1980 = vpack.c.b16 %v1964, %v1964
      %v1981 = vpack.c.b16 %v1965, %v1965
      %v1982 = vpack.c.b16 %v1966, %v1966
      %v1983 = vpack.c.b16 %v1967, %v1967
      %v1984 = vpack.c.b16 %v1968, %v1968
      %v1985 = vpack.c.b16 %v1969, %v1969
      %v1986 = vpack.c.b16 %v1970, %v1970
      %v1987 = vpack.c.b16 %v1971, %v1971
      %v1988 = vpack.c.b16 %v1972, %v1972
      %2005 = vst [vmem:[%s431] sm:$0xf] %v1973
      %2006 = vst [vmem:[%s431 + $0x4] sm:$0xf] %v1974
      %2007 = vst [vmem:[%s431 + $0x8] sm:$0xf] %v1975
      %2008 = vst [vmem:[%s431 + $0xc] sm:$0xf] %v1976
      %2009 = vst [vmem:[%s431 + $0x10] sm:$0xf] %v1977
      %2010 = vst [vmem:[%s431 + $0x14] sm:$0xf] %v1978
      %2011 = vst [vmem:[%s431 + $0x18] sm:$0xf] %v1979
      %2012 = vst [vmem:[%s431 + $0x1c] sm:$0xf] %v1980
      %2013 = vst [vmem:[%s431 + $0x20] sm:$0xf] %v1981
      %2014 = vst [vmem:[%s431 + $0x24] sm:$0xf] %v1982
      %2015 = vst [vmem:[%s431 + $0x28] sm:$0xf] %v1983
      %2016 = vst [vmem:[%s431 + $0x2c] sm:$0xf] %v1984
      %2017 = vst [vmem:[%s431 + $0x30] sm:$0xf] %v1985
      %2018 = vst [vmem:[%s431 + $0x34] sm:$0xf] %v1986
      %2019 = vst [vmem:[%s431 + $0x38] sm:$0xf] %v1987
      %2020 = vst [vmem:[%s431 + $0x3c] sm:$0xf] %v1988
      %v2021 = vadd.f32 %v1925, %v1926
      %v2022 = vadd.f32 %v2021, %v1927
      %v2023 = vadd.f32 %v2022, %v1928
      %v2024 = vadd.f32 %v2023, %v1929
      %v2025 = vadd.f32 %v2024, %v1930
      %v2026 = vadd.f32 %v2025, %v1931
      %v2027 = vadd.f32 %v2026, %v1932
      %v2028 = vadd.f32 %v2027, %v1933
      %v2029 = vadd.f32 %v2028, %v1934
      %v2030 = vadd.f32 %v2029, %v1935
      %v2031 = vadd.f32 %v2030, %v1936
      %v2032 = vadd.f32 %v2031, %v1937
      %v2033 = vadd.f32 %v2032, %v1938
      %v2034 = vadd.f32 %v2033, %v1939
      %v2035 = vadd.f32 %v2034, %v1940
      %v2036 = vrot.slane %v2035, 4
      %v2037 = vadd.f32 %v2035, %v2036
      %v2038 = vrot.slane %v2037, 2
      %v2039 = vadd.f32 %v2037, %v2038
      %v2040 = vrot.slane %v2039, 1
      %v2041 = vadd.f32 %v2039, %v2040
      %2042 = vst [vmem:[%s440] sm:$0x1] %v2041
      %v2043 = vmul.f32 %v1925, %v1925
      %v2044 = vmul.f32 %v1926, %v1926
      %v2045 = vmul.f32 %v1927, %v1927
      %v2046 = vmul.f32 %v1928, %v1928
      %v2047 = vmul.f32 %v1929, %v1929
      %v2048 = vmul.f32 %v1930, %v1930
      %v2049 = vmul.f32 %v1931, %v1931
      %v2050 = vmul.f32 %v1932, %v1932
      %v2051 = vmul.f32 %v1933, %v1933
      %v2052 = vmul.f32 %v1934, %v1934
      %v2053 = vmul.f32 %v1935, %v1935
      %v2054 = vmul.f32 %v1936, %v1936
      %v2055 = vmul.f32 %v1937, %v1937
      %v2056 = vmul.f32 %v1938, %v1938
      %v2057 = vmul.f32 %v1939, %v1939
      %v2058 = vmul.f32 %v1940, %v1940
      %v2059 = vadd.f32 %v2043, %v2044
      %v2060 = vadd.f32 %v2059, %v2045
      %v2061 = vadd.f32 %v2060, %v2046
      %v2062 = vadd.f32 %v2061, %v2047
      %v2063 = vadd.f32 %v2062, %v2048
      %v2064 = vadd.f32 %v2063, %v2049
      %v2065 = vadd.f32 %v2064, %v2050
      %v2066 = vadd.f32 %v2065, %v2051
      %v2067 = vadd.f32 %v2066, %v2052
      %v2068 = vadd.f32 %v2067, %v2053
      %v2069 = vadd.f32 %v2068, %v2054
      %v2070 = vadd.f32 %v2069, %v2055
      %v2071 = vadd.f32 %v2070, %v2056
      %v2072 = vadd.f32 %v2071, %v2057
      %v2073 = vadd.f32 %v2072, %v2058
      %v2074 = vrot.slane %v2073, 4
      %v2075 = vadd.f32 %v2073, %v2074
      %v2076 = vrot.slane %v2075, 2
      %v2077 = vadd.f32 %v2075, %v2076
      %v2078 = vrot.slane %v2077, 1
      %v2079 = vadd.f32 %v2077, %v2078
      %2080 = vst [vmem:[%s440 + $0x1] sm:$0x1] %v2079
      %s2081 = smul.u32 8, %s23
      %p2082 = scmp.lt.s32.totalorder %s22, 1
      %s2083 = scalar_select %p2082, %s22, 1
      %p2084 = scmp.lt.s32.totalorder %s2081, 15
      %s2085 = scalar_select %p2084, %s2081, 15
      %s2086 = smul.addr %s2085, 2
      %s2087 = smul.addr %s2083, 32
      %s2088 = sadd.s32 %s2086, %s2087
      %s2089 = smul.addr %s2088, 4
      %s2090 = scalar_lea.vmem %s5, %s2089
      %p2091 = scmp.lt.s32.totalorder %s22, 1
      %s2092 = scalar_select %p2091, %s22, 1
      %p2093 = scmp.lt.s32.totalorder %s23, 1
      %s2094 = scalar_select %p2093, %s23, 1
      %s2095 = smul.addr %s2092, 2
      %s2096 = sadd.s32 %s2094, %s2095
      %s2097 = smul.addr %s2096, 2
      %s2098 = scalar_lea.vmem %s6, %s2097
      // Predicated region
      $region41: #{residual_block.3} parent=39 // pred_check
        %p2099 = pneg %p192
      $region42: #{residual_block.3} parent=39 // pred_check_branch
        %2101 = sbr.rel (%p2099) target = $region44
      $region43: #{residual_block.3} parent=39 // pred_region
        %s2102 = smul.u32 8, %s23
      $region44: #{residual_block.3} parent=39 // pred_fallthru
        _
      // Predicated region
      $region45: #{residual_block.3} parent=39 // pred_check
        %p2103 = pneg %p220
      $region46: #{residual_block.3} parent=39 // pred_check_branch
        %2105 = sbr.rel (%p2103) target = $region48
      $region47: #{residual_block.3} parent=39 // pred_region
        _
      $region48: #{residual_block.3} parent=39 // pred_fallthru
        _
    $region40: #{residual_block.3} parent=5 // pred_fallthru
      _
    %p2106 = scmp.le.s32.totalorder 2, %s13
    // Predicated region
    $region49: #{residual_block.3} parent=5 // pred_check
      %p2107 = pneg %p2106
    $region50: #{residual_block.3} parent=5 // pred_check_branch
      %2109 = sbr.rel (%p2107) target = $region52
    $region51: #{residual_block.3} parent=5 // pred_region
      %s2110 = ssub.s32 %s13, 2
      // Predicated region
      $region53: #{residual_block.3} parent=51 // pred_check
        %p2111 = pneg %p198
      $region54: #{residual_block.3} parent=51 // pred_check_branch
        %2113 = sbr.rel (%p2111) target = $region56
      $region55: #{residual_block.3} parent=51 // pred_region
        %s2114 = smul.u32 8, %s25
        %p2115 = scmp.lt.s32.totalorder %s24, 1
        %s2116 = scalar_select %p2115, %s24, 1
        %p2117 = scmp.lt.s32.totalorder %s2114, 15
        %s2118 = scalar_select %p2117, %s2114, 15
        %s2119 = smul.addr %s2118, 2
        %s2120 = smul.addr %s2116, 32
        %s2121 = sadd.s32 %s2119, %s2120
        %s2122 = smul.addr %s2121, 4
        %s2123 = scalar_lea.vmem %s5, %s2122
      $region56: #{residual_block.3} parent=51 // pred_fallthru
        _
      // Predicated region
      $region57: #{residual_block.3} parent=51 // pred_check
        %p2124 = pneg %p226
      $region58: #{residual_block.3} parent=51 // pred_check_branch
        %2126 = sbr.rel (%p2124) target = $region60
      $region59: #{residual_block.3} parent=51 // pred_region
        %p2127 = scmp.lt.s32.totalorder %s24, 1
        %s2128 = scalar_select %p2127, %s24, 1
        %p2129 = scmp.lt.s32.totalorder %s25, 1
        %s2130 = scalar_select %p2129, %s25, 1
        %s2131 = smul.addr %s2128, 2
        %s2132 = sadd.s32 %s2130, %s2131
        %s2133 = smul.addr %s2132, 2
        %s2134 = scalar_lea.vmem %s6, %s2133
      $region60: #{residual_block.3} parent=51 // pred_fallthru
        _
    $region52: #{residual_block.3} parent=5 // pred_fallthru
      _
  $region6: #{residual_block.3} parent=0 // loop_footer
    %s17 = sadd.s32 1, %s13
  $region7: #{residual_block.3} parent=0 // loop_footer_branch
    %12 = sbr.rel target = $region3
  $region8: #{residual_block.3} parent=0 // loop_exit
    _

// kernel: residual_block.4
$region0: #{residual_block.4}
  #allocation0 [shape = 'u32[]', space=smem, size = 0x4, offset = 0x4, fixed_abs, tag = 'smem constant byte address 0x4 - core index']
  #allocation1 [shape = 'u32[144,128]{1,0:T(1,128)}', space=vmem, size = 0x12000, scoped, tag = 'internal scratch']
  %s0 = inlined_call_operand.vmem [shape: bf16[2,16,16,128], index: 0, kind: input, shape index: {}, may-alias: {0,1,2}]
  %s1 = inlined_call_operand.vmem [shape: bf16[2,16,16,128], index: 1, kind: input, shape index: {}, may-alias: {0,1,2}]
  %s2 = inlined_call_operand.vmem [shape: bf16[2,16,16,128], index: 2, kind: input, shape index: {}, may-alias: {0,1,2}]
  %s3 = inlined_call_operand.vmem [shape: f32[1,128], index: 3, kind: input, shape index: {}]
  %s4 = inlined_call_operand.vmem [shape: f32[1,128], index: 4, kind: input, shape index: {}]
  %s5 = inlined_call_operand.vmem [shape: f32[1,128], index: 5, kind: input, shape index: {}]
  %s6 = inlined_call_operand.vmem [shape: bf16[3,384,128], index: 6, kind: input, shape index: {}]
  %s7 = inlined_call_operand.vmem [shape: f32[1,128], index: 7, kind: input, shape index: {}]
  %s8 = inlined_call_operand.vmem [shape: bf16[2,16,16,128], index: 8, kind: output, shape index: {0}]
  %s9 = inlined_call_operand.vmem [shape: f32[2,2,2,128], index: 9, kind: output, shape index: {1}]
  %10 = xla_tuple %s8, %s9
  %s11 = sld [smem:[#allocation0]]
  $region73: #{residual_block.4} parent=0
    _
  %s13 = ssub.s32 1, %s11
  %s14 = scalar_select 0, %s13, %s11
  loop: start=0, step=1, limit=6
  $region2: #{residual_block.4} parent=0 // loop_pre_header
    _
  $region3: #{residual_block.4} parent=0 // loop_header
    %s16 = sphi 0, %s20
    %p17 = scmp.ge.s32.totalorder %s16, 6
    %s23 = sphi 0, %s35
    %s24 = sphi 0, %s31
    %s25 = sphi 0, %s23
    %s26 = sphi 0, %s24
    %s27 = sphi 0, %s25
    %s28 = sphi 0, %s26
    %s48 = sphi 0, %s50
    %s51 = sphi 0, %s48
    %s52 = sphi 0, %s51
    %s68 = sphi 0, %s52
    %s76 = sphi 0, %s78
    %s79 = sphi 0, %s76
    %s80 = sphi 0, %s79
    %s96 = sphi 0, %s80
    %s112 = sphi 0, %s114
    %s115 = sphi 0, %s112
    %s116 = sphi 0, %s115
    %s132 = sphi 0, %s116
    %s136 = sphi 0, %s136
    %s138 = sphi 0, %s136
    %s139 = sphi 0, %s138
    %s153 = sphi 0, %s139
    %s157 = sphi 0, %s157
    %s159 = sphi 0, %s157
    %s160 = sphi 0, %s159
    %s174 = sphi 0, %s160
    %s178 = sphi 0, %s178
    %s180 = sphi 0, %s178
    %s181 = sphi 0, %s180
    %s195 = sphi 0, %s181
    %s199 = sphi 0, %s199
    %s201 = sphi 0, %s199
    %s202 = sphi 0, %s201
    %s216 = sphi 0, %s202
    %s220 = sphi 0, %s220
    %s222 = sphi 0, %s220
    %s223 = sphi 0, %s222
    %s237 = sphi 0, %s223
    %s245 = sphi 0, %s247
    %s248 = sphi 0, %s245
    %s249 = sphi 0, %s248
    %s265 = sphi 0, %s249
    %s273 = sphi 0, %s275
    %s276 = sphi 0, %s273
    %s277 = sphi 0, %s276
    %s293 = sphi 0, %s277
  $region4: #{residual_block.4} parent=0 // loop_header_branch
    %19 = sbr.rel (%p17) target = $region8
  $region5: #{residual_block.4} parent=0 // loop_body
    %s21 = ssub.s32 %s16, 1
    %s22 = ssub.s32 %s16, 2
    %s29 = sadd.s32 1, %s24
    %p30 = scmp.ge.s32.totalorder %s29, 2
    %s31 = scalar_select %p30, 0, %s29
    %s32 = sadd.s32 1, %s23
    %s33 = scalar_select %p30, %s32, %s23
    %p34 = scmp.ge.s32.totalorder %s33, 2
    %s35 = scalar_select %p34, 0, %s33
    %s36 = smul.u32 %s24, 8
    %s37 = ssub.s32 %s36, 1
    %p38 = scmp.gt.s32.totalorder %s37, 0
    %s39 = scalar_select %p38, %s37, 0
    %s40 = smul.u32 %s31, 8
    %s41 = ssub.s32 %s40, 1
    %p42 = scmp.gt.s32.totalorder %s41, 0
    %s43 = scalar_select %p42, %s41, 0
    %s44 = ssub.s32 %s23, %s35
    %s45 = ssub.s32 %s39, %s43
    %s46 = sor.u32 %s44, %s45
    %p47 = scmp.eq.s32.totalorder %s46, 0
    %s49 = sadd.s32 %s48, 1
    %s50 = scalar_select %p47, %s48, %s49
    %p53 = pneg %p47
    %p54 = scmp.eq.s32.totalorder %s16, 3
    %p55 = por %p53, %p54
    %p56 = scmp.ne.s32.totalorder %s48, %s51
    %p57 = scmp.eq.s32.totalorder %s16, 0
    %p58 = por %p56, %p57
    %p59 = scmp.ne.s32.totalorder %s48, %s51
    %p60 = scmp.eq.s32.totalorder %s21, 3
    %p61 = por %p59, %p60
    %p62 = scmp.ne.s32.totalorder %s51, %s52
    %p63 = scmp.eq.s32.totalorder %s21, 0
    %p64 = por %p62, %p63
    %p65 = scmp.ne.s32.totalorder %s51, %s52
    %p66 = scmp.eq.s32.totalorder %s22, 3
    %p67 = por %p65, %p66
    %p69 = scmp.ne.s32.totalorder %s52, %s68
    %p70 = scmp.eq.s32.totalorder %s22, 0
    %p71 = por %p69, %p70
    %s72 = ssub.s32 %s23, %s35
    %s73 = ssub.s32 %s24, %s31
    %s74 = sor.u32 %s72, %s73
    %p75 = scmp.eq.s32.totalorder %s74, 0
    %s77 = sadd.s32 %s76, 1
    %s78 = scalar_select %p75, %s76, %s77
    %p81 = pneg %p75
    %p82 = scmp.eq.s32.totalorder %s16, 3
    %p83 = por %p81, %p82
    %p84 = scmp.ne.s32.totalorder %s76, %s79
    %p85 = scmp.eq.s32.totalorder %s16, 0
    %p86 = por %p84, %p85
    %p87 = scmp.ne.s32.totalorder %s76, %s79
    %p88 = scmp.eq.s32.totalorder %s21, 3
    %p89 = por %p87, %p88
    %p90 = scmp.ne.s32.totalorder %s79, %s80
    %p91 = scmp.eq.s32.totalorder %s21, 0
    %p92 = por %p90, %p91
    %p93 = scmp.ne.s32.totalorder %s79, %s80
    %p94 = scmp.eq.s32.totalorder %s22, 3
    %p95 = por %p93, %p94
    %p97 = scmp.ne.s32.totalorder %s80, %s96
    %p98 = scmp.eq.s32.totalorder %s22, 0
    %p99 = por %p97, %p98
    %s100 = smul.u32 %s24, 8
    %s101 = sadd.s32 %s100, 8
    %p102 = scmp.lt.s32.totalorder %s101, 15
    %s103 = scalar_select %p102, %s101, 15
    %s104 = smul.u32 %s31, 8
    %s105 = sadd.s32 %s104, 8
    %p106 = scmp.lt.s32.totalorder %s105, 15
    %s107 = scalar_select %p106, %s105, 15
    %s108 = ssub.s32 %s23, %s35
    %s109 = ssub.s32 %s103, %s107
    %s110 = sor.u32 %s108, %s109
    %p111 = scmp.eq.s32.totalorder %s110, 0
    %s113 = sadd.s32 %s112, 1
    %s114 = scalar_select %p111, %s112, %s113
    %p117 = pneg %p111
    %p118 = scmp.eq.s32.totalorder %s16, 3
    %p119 = por %p117, %p118
    %p120 = scmp.ne.s32.totalorder %s112, %s115
    %p121 = scmp.eq.s32.totalorder %s16, 0
    %p122 = por %p120, %p121
    %p123 = scmp.ne.s32.totalorder %s112, %s115
    %p124 = scmp.eq.s32.totalorder %s21, 3
    %p125 = por %p123, %p124
    %p126 = scmp.ne.s32.totalorder %s115, %s116
    %p127 = scmp.eq.s32.totalorder %s21, 0
    %p128 = por %p126, %p127
    %p129 = scmp.ne.s32.totalorder %s115, %s116
    %p130 = scmp.eq.s32.totalorder %s22, 3
    %p131 = por %p129, %p130
    %p133 = scmp.ne.s32.totalorder %s116, %s132
    %p134 = scmp.eq.s32.totalorder %s22, 0
    %p135 = por %p133, %p134
    %s137 = sadd.s32 %s136, 1
    %p140 = scmp.eq.s32.totalorder %s16, 3
    %p141 = scmp.ne.s32.totalorder %s136, %s138
    %p142 = scmp.eq.s32.totalorder %s16, 0
    %p143 = por %p141, %p142
    %p144 = scmp.ne.s32.totalorder %s136, %s138
    %p145 = scmp.eq.s32.totalorder %s21, 3
    %p146 = por %p144, %p145
    %p147 = scmp.ne.s32.totalorder %s138, %s139
    %p148 = scmp.eq.s32.totalorder %s21, 0
    %p149 = por %p147, %p148
    %p150 = scmp.ne.s32.totalorder %s138, %s139
    %p151 = scmp.eq.s32.totalorder %s22, 3
    %p152 = por %p150, %p151
    %p154 = scmp.ne.s32.totalorder %s139, %s153
    %p155 = scmp.eq.s32.totalorder %s22, 0
    %p156 = por %p154, %p155
    %s158 = sadd.s32 %s157, 1
    %p161 = scmp.eq.s32.totalorder %s16, 3
    %p162 = scmp.ne.s32.totalorder %s157, %s159
    %p163 = scmp.eq.s32.totalorder %s16, 0
    %p164 = por %p162, %p163
    %p165 = scmp.ne.s32.totalorder %s157, %s159
    %p166 = scmp.eq.s32.totalorder %s21, 3
    %p167 = por %p165, %p166
    %p168 = scmp.ne.s32.totalorder %s159, %s160
    %p169 = scmp.eq.s32.totalorder %s21, 0
    %p170 = por %p168, %p169
    %p171 = scmp.ne.s32.totalorder %s159, %s160
    %p172 = scmp.eq.s32.totalorder %s22, 3
    %p173 = por %p171, %p172
    %p175 = scmp.ne.s32.totalorder %s160, %s174
    %p176 = scmp.eq.s32.totalorder %s22, 0
    %p177 = por %p175, %p176
    %s179 = sadd.s32 %s178, 1
    %p182 = scmp.eq.s32.totalorder %s16, 3
    %p183 = scmp.ne.s32.totalorder %s178, %s180
    %p184 = scmp.eq.s32.totalorder %s16, 0
    %p185 = por %p183, %p184
    %p186 = scmp.ne.s32.totalorder %s178, %s180
    %p187 = scmp.eq.s32.totalorder %s21, 3
    %p188 = por %p186, %p187
    %p189 = scmp.ne.s32.totalorder %s180, %s181
    %p190 = scmp.eq.s32.totalorder %s21, 0
    %p191 = por %p189, %p190
    %p192 = scmp.ne.s32.totalorder %s180, %s181
    %p193 = scmp.eq.s32.totalorder %s22, 3
    %p194 = por %p192, %p193
    %p196 = scmp.ne.s32.totalorder %s181, %s195
    %p197 = scmp.eq.s32.totalorder %s22, 0
    %p198 = por %p196, %p197
    %s200 = sadd.s32 %s199, 1
    %p203 = scmp.eq.s32.totalorder %s16, 3
    %p204 = scmp.ne.s32.totalorder %s199, %s201
    %p205 = scmp.eq.s32.totalorder %s16, 0
    %p206 = por %p204, %p205
    %p207 = scmp.ne.s32.totalorder %s199, %s201
    %p208 = scmp.eq.s32.totalorder %s21, 3
    %p209 = por %p207, %p208
    %p210 = scmp.ne.s32.totalorder %s201, %s202
    %p211 = scmp.eq.s32.totalorder %s21, 0
    %p212 = por %p210, %p211
    %p213 = scmp.ne.s32.totalorder %s201, %s202
    %p214 = scmp.eq.s32.totalorder %s22, 3
    %p215 = por %p213, %p214
    %p217 = scmp.ne.s32.totalorder %s202, %s216
    %p218 = scmp.eq.s32.totalorder %s22, 0
    %p219 = por %p217, %p218
    %s221 = sadd.s32 %s220, 1
    %p224 = scmp.eq.s32.totalorder %s16, 3
    %p225 = scmp.ne.s32.totalorder %s220, %s222
    %p226 = scmp.eq.s32.totalorder %s16, 0
    %p227 = por %p225, %p226
    %p228 = scmp.ne.s32.totalorder %s220, %s222
    %p229 = scmp.eq.s32.totalorder %s21, 3
    %p230 = por %p228, %p229
    %p231 = scmp.ne.s32.totalorder %s222, %s223
    %p232 = scmp.eq.s32.totalorder %s21, 0
    %p233 = por %p231, %p232
    %p234 = scmp.ne.s32.totalorder %s222, %s223
    %p235 = scmp.eq.s32.totalorder %s22, 3
    %p236 = por %p234, %p235
    %p238 = scmp.ne.s32.totalorder %s223, %s237
    %p239 = scmp.eq.s32.totalorder %s22, 0
    %p240 = por %p238, %p239
    %s241 = ssub.s32 %s23, %s35
    %s242 = ssub.s32 %s24, %s31
    %s243 = sor.u32 %s241, %s242
    %p244 = scmp.eq.s32.totalorder %s243, 0
    %s246 = sadd.s32 %s245, 1
    %s247 = scalar_select %p244, %s245, %s246
    %p250 = pneg %p244
    %p251 = scmp.eq.s32.totalorder %s16, 3
    %p252 = por %p250, %p251
    %p253 = scmp.ne.s32.totalorder %s245, %s248
    %p254 = scmp.eq.s32.totalorder %s16, 0
    %p255 = por %p253, %p254
    %p256 = scmp.ne.s32.totalorder %s245, %s248
    %p257 = scmp.eq.s32.totalorder %s21, 3
    %p258 = por %p256, %p257
    %p259 = scmp.ne.s32.totalorder %s248, %s249
    %p260 = scmp.eq.s32.totalorder %s21, 0
    %p261 = por %p259, %p260
    %p262 = scmp.ne.s32.totalorder %s248, %s249
    %p263 = scmp.eq.s32.totalorder %s22, 3
    %p264 = por %p262, %p263
    %p266 = scmp.ne.s32.totalorder %s249, %s265
    %p267 = scmp.eq.s32.totalorder %s22, 0
    %p268 = por %p266, %p267
    %s269 = ssub.s32 %s23, %s35
    %s270 = ssub.s32 %s24, %s31
    %s271 = sor.u32 %s269, %s270
    %p272 = scmp.eq.s32.totalorder %s271, 0
    %s274 = sadd.s32 %s273, 1
    %s275 = scalar_select %p272, %s273, %s274
    %p278 = pneg %p272
    %p279 = scmp.eq.s32.totalorder %s16, 3
    %p280 = por %p278, %p279
    %p281 = scmp.ne.s32.totalorder %s273, %s276
    %p282 = scmp.eq.s32.totalorder %s16, 0
    %p283 = por %p281, %p282
    %p284 = scmp.ne.s32.totalorder %s273, %s276
    %p285 = scmp.eq.s32.totalorder %s21, 3
    %p286 = por %p284, %p285
    %p287 = scmp.ne.s32.totalorder %s276, %s277
    %p288 = scmp.eq.s32.totalorder %s21, 0
    %p289 = por %p287, %p288
    %p290 = scmp.ne.s32.totalorder %s276, %s277
    %p291 = scmp.eq.s32.totalorder %s22, 3
    %p292 = por %p290, %p291
    %p294 = scmp.ne.s32.totalorder %s277, %s293
    %p295 = scmp.eq.s32.totalorder %s22, 0
    %p296 = por %p294, %p295
    %p297 = scmp.le.s32.totalorder 1, %s16
    %p298 = scmp.lt.s32.totalorder %s16, 5
    %p299 = pnand %p297, %p298
    %p300 = pneg %p299
    // Predicated region
    $region9: #{residual_block.4} parent=5 // pred_check
      _
    $region10: #{residual_block.4} parent=5 // pred_check_branch
      %302 = sbr.rel (%p299) target = $region12
    $region11: #{residual_block.4} parent=5 // pred_region
      %s303 = ssub.s32 %s16, 1
      // Predicated region
      $region13: #{residual_block.4} parent=11 // pred_check
        %p304 = pneg %p149
      $region14: #{residual_block.4} parent=11 // pred_check_branch
        %306 = sbr.rel (%p304) target = $region16
      $region15: #{residual_block.4} parent=11 // pred_region
        _
      $region16: #{residual_block.4} parent=11 // pred_fallthru
        _
      // Predicated region
      $region17: #{residual_block.4} parent=11 // pred_check
        %p307 = pneg %p170
      $region18: #{residual_block.4} parent=11 // pred_check_branch
        %309 = sbr.rel (%p307) target = $region20
      $region19: #{residual_block.4} parent=11 // pred_region
        _
      $region20: #{residual_block.4} parent=11 // pred_fallthru
        _
      // Predicated region
      $region21: #{residual_block.4} parent=11 // pred_check
        %p310 = pneg %p191
      $region22: #{residual_block.4} parent=11 // pred_check_branch
        %312 = sbr.rel (%p310) target = $region24
      $region23: #{residual_block.4} parent=11 // pred_region
        _
      $region24: #{residual_block.4} parent=11 // pred_fallthru
        _
      // Predicated region
      $region25: #{residual_block.4} parent=11 // pred_check
        %p313 = pneg %p212
      $region26: #{residual_block.4} parent=11 // pred_check_branch
        %315 = sbr.rel (%p313) target = $region28
      $region27: #{residual_block.4} parent=11 // pred_region
        _
      $region28: #{residual_block.4} parent=11 // pred_fallthru
        _
      // Predicated region
      $region29: #{residual_block.4} parent=11 // pred_check
        %p316 = pneg %p233
      $region30: #{residual_block.4} parent=11 // pred_check_branch
        %318 = sbr.rel (%p316) target = $region32
      $region31: #{residual_block.4} parent=11 // pred_region
        _
      $region32: #{residual_block.4} parent=11 // pred_fallthru
        _
    $region12: #{residual_block.4} parent=5 // pred_fallthru
      _
    %p319 = scmp.lt.s32.totalorder %s16, 4
    // Predicated region
    $region33: #{residual_block.4} parent=5 // pred_check
      %p320 = pneg %p319
    $region34: #{residual_block.4} parent=5 // pred_check_branch
      %322 = sbr.rel (%p320) target = $region36
    $region35: #{residual_block.4} parent=5 // pred_region
      // Predicated region
      $region37: #{residual_block.4} parent=35 // pred_check
        %p323 = pneg %p58
      $region38: #{residual_block.4} parent=35 // pred_check_branch
        %325 = sbr.rel (%p323) target = $region40
      $region39: #{residual_block.4} parent=35 // pred_region
        %s326 = smul.u32 %s24, 8
        %s327 = ssub.s32 %s326, 1
        %p328 = scmp.gt.s32.totalorder %s327, 0
        %s329 = scalar_select %p328, %s327, 0
        %p330 = scmp.lt.s32.totalorder %s23, 1
        %s331 = scalar_select %p330, %s23, 1
        %p332 = scmp.lt.s32.totalorder %s329, 15
        %s333 = scalar_select %p332, %s329, 15
        %s334 = smul.addr %s333, 2
        %s335 = smul.addr %s331, 32
        %s336 = sadd.s32 %s334, %s335
        %s337 = smul.addr %s336, 4
        %s338 = scalar_lea.vmem %s0, %s337
        %s339 = smul.u32 %s24, 8
        %s340 = ssub.s32 %s339, 1
        %p341 = scmp.gt.s32.totalorder %s340, 0
        %s342 = scalar_select %p341, %s340, 0
      $region40: #{residual_block.4} parent=35 // pred_fallthru
        _
      // Predicated region
      $region41: #{residual_block.4} parent=35 // pred_check
        %p343 = pneg %p86
      $region42: #{residual_block.4} parent=35 // pred_check_branch
        %345 = sbr.rel (%p343) target = $region44
      $region43: #{residual_block.4} parent=35 // pred_region
        %s346 = smul.u32 8, %s24
        %p347 = scmp.lt.s32.totalorder %s23, 1
        %s348 = scalar_select %p347, %s23, 1
        %p349 = scmp.lt.s32.totalorder %s346, 15
        %s350 = scalar_select %p349, %s346, 15
        %s351 = smul.addr %s350, 2
        %s352 = smul.addr %s348, 32
        %s353 = sadd.s32 %s351, %s352
        %s354 = smul.addr %s353, 4
        %s355 = scalar_lea.vmem %s1, %s354
        %s356 = smul.u32 8, %s24
      $region44: #{residual_block.4} parent=35 // pred_fallthru
        _
      // Predicated region
      $region45: #{residual_block.4} parent=35 // pred_check
        %p357 = pneg %p122
      $region46: #{residual_block.4} parent=35 // pred_check_branch
        %359 = sbr.rel (%p357) target = $region48
      $region47: #{residual_block.4} parent=35 // pred_region
        %s360 = smul.u32 %s24, 8
        %s361 = sadd.s32 %s360, 8
        %p362 = scmp.lt.s32.totalorder %s361, 15
        %s363 = scalar_select %p362, %s361, 15
        %p364 = scmp.lt.s32.totalorder %s23, 1
        %s365 = scalar_select %p364, %s23, 1
        %p366 = scmp.lt.s32.totalorder %s363, 15
        %s367 = scalar_select %p366, %s363, 15
        %s368 = smul.addr %s367, 2
        %s369 = smul.addr %s365, 32
        %s370 = sadd.s32 %s368, %s369
        %s371 = smul.addr %s370, 4
        %s372 = scalar_lea.vmem %s2, %s371
        %s373 = smul.u32 %s24, 8
        %s374 = sadd.s32 %s373, 8
        %p375 = scmp.lt.s32.totalorder %s374, 15
        %s376 = scalar_select %p375, %s374, 15
      $region48: #{residual_block.4} parent=35 // pred_fallthru
        _
    $region36: #{residual_block.4} parent=5 // pred_fallthru
      _
    %p377 = scmp.le.s32.totalorder 1, %s16
    %p378 = scmp.lt.s32.totalorder %s16, 5
    %p379 = pnand %p377, %p378
    %p380 = pneg %p379
    // Predicated region
    $region49: #{residual_block.4} parent=5 // pred_check
      _
    $region50: #{residual_block.4} parent=5 // pred_check_branch
      %382 = sbr.rel (%p379) target = $region52
    $region51: #{residual_block.4} parent=5 // pred_region
      %s383 = ssub.s32 %s16, 1
      %s384 = smul.u32 %s26, 8
      %s385 = ssub.s32 %s384, 1
      %p386 = scmp.gt.s32.totalorder %s385, 0
      %s387 = scalar_select %p386, %s385, 0
      %p388 = scmp.lt.s32.totalorder %s25, 1
      %s389 = scalar_select %p388, %s25, 1
      %p390 = scmp.lt.s32.totalorder %s387, 15
      %s391 = scalar_select %p390, %s387, 15
      %s392 = smul.addr %s391, 2
      %s393 = smul.addr %s389, 32
      %s394 = sadd.s32 %s392, %s393
      %s395 = smul.addr %s394, 4
      %s396 = scalar_lea.vmem %s0, %s395
      %p397 = pneg %p64
      %p398 = pneg %p61
      %s399 = smul.u32 8, %s26
      %p400 = scmp.lt.s32.totalorder %s25, 1
      %s401 = scalar_select %p400, %s25, 1
      %p402 = scmp.lt.s32.totalorder %s399, 15
      %s403 = scalar_select %p402, %s399, 15
      %s404 = smul.addr %s403, 2
      %s405 = smul.addr %s401, 32
      %s406 = sadd.s32 %s404, %s405
      %s407 = smul.addr %s406, 4
      %s408 = scalar_lea.vmem %s1, %s407
      %p409 = pneg %p92
      %p410 = pneg %p89
      %s411 = smul.u32 %s26, 8
      %s412 = sadd.s32 %s411, 8
      %p413 = scmp.lt.s32.totalorder %s412, 15
      %s414 = scalar_select %p413, %s412, 15
      %p415 = scmp.lt.s32.totalorder %s25, 1
      %s416 = scalar_select %p415, %s25, 1
      %p417 = scmp.lt.s32.totalorder %s414, 15
      %s418 = scalar_select %p417, %s414, 15
      %s419 = smul.addr %s418, 2
      %s420 = smul.addr %s416, 32
      %s421 = sadd.s32 %s419, %s420
      %s422 = smul.addr %s421, 4
      %s423 = scalar_lea.vmem %s2, %s422
      %p424 = pneg %p128
      %p425 = pneg %p125
      %p426 = pneg %p149
      %p427 = pneg %p146
      %p428 = pneg %p170
      %p429 = pneg %p167
      %p430 = pneg %p191
      %p431 = pneg %p188
      %p432 = pneg %p212
      %p433 = pneg %p209
      %p434 = pneg %p233
      %p435 = pneg %p230
      %p436 = pneg %p261
      %p437 = pneg %p258
      %s438 = smul.u32 8, %s26
      %p439 = scmp.lt.s32.totalorder %s25, 1
      %s440 = scalar_select %p439, %s25, 1
      %p441 = scmp.lt.s32.totalorder %s438, 15
      %s442 = scalar_select %p441, %s438, 15
      %s443 = smul.addr %s442, 2
      %s444 = smul.addr %s440, 32
      %s445 = sadd.s32 %s443, %s444
      %s446 = smul.addr %s445, 4
      %s447 = scalar_lea.vmem %s8, %s446
      %p448 = pneg %p289
      %p449 = pneg %p286
      %p450 = scmp.lt.s32.totalorder %s25, 1
      %s451 = scalar_select %p450, %s25, 1
      %p452 = scmp.lt.s32.totalorder %s26, 1
      %s453 = scalar_select %p452, %s26, 1
      %s454 = smul.addr %s451, 2
      %s455 = sadd.s32 %s453, %s454
      %s456 = smul.addr %s455, 2
      %s457 = scalar_lea.vmem %s9, %s456
      %s458 = smul.u32 %s26, 8
      %s459 = ssub.s32 %s458, 1
      %p460 = scmp.gt.s32.totalorder %s459, 0
      %s461 = scalar_select %p460, %s459, 0
      %p462 = scmp.lt.s32.totalorder %s25, 1
      %s463 = scalar_select %p462, %s25, 1
      %p464 = scmp.lt.s32.totalorder %s461, 15
      %s465 = scalar_select %p464, %s461, 15
      %s466 = smul.addr %s465, 2
      %s467 = smul.addr %s463, 32
      %s468 = sadd.s32 %s466, %s467
      %s469 = smul.addr %s468, 4
      %s470 = scalar_lea.vmem %s0, %s469
      %s471 = smul.u32 %s26, 8
      %s472 = ssub.s32 %s471, 1
      %p473 = scmp.gt.s32.totalorder %s472, 0
      %s474 = scalar_select %p473, %s472, 0
      %s475 = smul.u32 8, %s26
      %p476 = scmp.lt.s32.totalorder %s25, 1
      %s477 = scalar_select %p476, %s25, 1
      %p478 = scmp.lt.s32.totalorder %s475, 15
      %s479 = scalar_select %p478, %s475, 15
      %s480 = smul.addr %s479, 2
      %s481 = smul.addr %s477, 32
      %s482 = sadd.s32 %s480, %s481
      %s483 = smul.addr %s482, 4
      %s484 = scalar_lea.vmem %s1, %s483
      %s485 = smul.u32 8, %s26
      %s486 = smul.u32 %s26, 8
      %s487 = sadd.s32 %s486, 8
      %p488 = scmp.lt.s32.totalorder %s487, 15
      %s489 = scalar_select %p488, %s487, 15
      %p490 = scmp.lt.s32.totalorder %s25, 1
      %s491 = scalar_select %p490, %s25, 1
      %p492 = scmp.lt.s32.totalorder %s489, 15
      %s493 = scalar_select %p492, %s489, 15
      %s494 = smul.addr %s493, 2
      %s495 = smul.addr %s491, 32
      %s496 = sadd.s32 %s494, %s495
      %s497 = smul.addr %s496, 4
      %s498 = scalar_lea.vmem %s2, %s497
      %s499 = smul.u32 %s26, 8
      %s500 = sadd.s32 %s499, 8
      %p501 = scmp.lt.s32.totalorder %s500, 15
      %s502 = scalar_select %p501, %s500, 15
      %s503 = smul.u32 8, %s26
      %p504 = scmp.lt.s32.totalorder %s25, 1
      %s505 = scalar_select %p504, %s25, 1
      %p506 = scmp.lt.s32.totalorder %s503, 15
      %s507 = scalar_select %p506, %s503, 15
      %s508 = smul.addr %s507, 2
      %s509 = smul.addr %s505, 32
      %s510 = sadd.s32 %s508, %s509
      %s511 = smul.addr %s510, 4
      %s512 = scalar_lea.vmem %s8, %s511
      %s513 = smul.u32 8, %s26
      %p514 = scmp.lt.s32.totalorder %s25, 1
      %s515 = scalar_select %p514, %s25, 1
      %p516 = scmp.lt.s32.totalorder %s26, 1
      %s517 = scalar_select %p516, %s26, 1
      %s518 = smul.addr %s515, 2
      %s519 = sadd.s32 %s517, %s518
      %s520 = smul.addr %s519, 2
      %s521 = scalar_lea.vmem %s9, %s520
      %v523 = vld [vmem:[%s3] sm:$0x1]
      %v524 = vld [vmem:[%s4] sm:$0x1]
      %v525 = vld [vmem:[%s5] sm:$0x1]
      %p526 = scmp.gt.s32.totalorder %s26, 0
      %s527 = scalar_select %p526, 1.0, 0.0
      %p528 = scmp.lt.s32.totalorder %s26, 1
      %s529 = scalar_select %p528, 1.0, 0.0
      %v530 = vld [vmem:[%s470] sm:$0xf]
      %v531 = vld [vmem:[%s470 + $0x4] sm:$0xf]
      %v532 = vunpack.c.l.bf16 %v530
      %v533 = vunpack.c.l.bf16 %v531
      %v535 = vlaneseq
      %v536 = vshrl.u32 %v535, 7
      %v537 = vsub.s32 0, %v536
      %v538 = vrot.slane %v523, %v537
      %v540 = vmul.f32 %v532, %v538
      %v541 = vmul.f32 %v533, %v538
      %v543 = vlaneseq
      %v544 = vshrl.u32 %v543, 7
      %v545 = vsub.s32 0, %v544
      %v546 = vrot.slane %v524, %v545
      %v548 = vadd.f32 %v540, %v546
      %v549 = vadd.f32 %v541, %v546
      %vm550 = vcmp.gt.f32.partialorder %v548, 0.0
      %vm551 = vcmp.gt.f32.partialorder %v549, 0.0
      %v553 = vlaneseq
      %v554 = vshrl.u32 %v553, 7
      %v555 = vsub.s32 0, %v554
      %v556 = vrot.slane %v525, %v555
      %v558 = vmul.f32 %v556, %v548
      %v559 = vmul.f32 %v556, %v549
      %v560 = vsel %vm550, %v548, %v558
      %v561 = vsel %vm551, %v549, %v559
      %v562 = vstv %s527
      %v563 = vmul.f32 %v560, %v562
      %v564 = vmul.f32 %v561, %v562
      %v565 = vpack.c.bf16 %v564, %v563
      %v566 = vld [vmem:[%s484] sm:$0xf]
      %v567 = vld [vmem:[%s484 + $0x4] sm:$0xf]
      %v568 = vld [vmem:[%s484 + $0x8] sm:$0xf]
      %v569 = vld [vmem:[%s484 + $0xc] sm:$0xf]
      %v570 = vld [vmem:[%s484 + $0x10] sm:$0xf]
      %v571 = vld [vmem:[%s484 + $0x14] sm:$0xf]
      %v572 = vld [vmem:[%s484 + $0x18] sm:$0xf]
      %v573 = vld [vmem:[%s484 + $0x1c] sm:$0xf]
      %v574 = vld [vmem:[%s484 + $0x20] sm:$0xf]
      %v575 = vld [vmem:[%s484 + $0x24] sm:$0xf]
      %v576 = vld [vmem:[%s484 + $0x28] sm:$0xf]
      %v577 = vld [vmem:[%s484 + $0x2c] sm:$0xf]
      %v578 = vld [vmem:[%s484 + $0x30] sm:$0xf]
      %v579 = vld [vmem:[%s484 + $0x34] sm:$0xf]
      %v580 = vld [vmem:[%s484 + $0x38] sm:$0xf]
      %v581 = vld [vmem:[%s484 + $0x3c] sm:$0xf]
      %v582 = vunpack.c.l.bf16 %v566
      %v583 = vunpack.c.l.bf16 %v567
      %v584 = vunpack.c.l.bf16 %v568
      %v585 = vunpack.c.l.bf16 %v569
      %v586 = vunpack.c.l.bf16 %v570
      %v587 = vunpack.c.l.bf16 %v571
      %v588 = vunpack.c.l.bf16 %v572
      %v589 = vunpack.c.l.bf16 %v573
      %v590 = vunpack.c.l.bf16 %v574
      %v591 = vunpack.c.l.bf16 %v575
      %v592 = vunpack.c.l.bf16 %v576
      %v593 = vunpack.c.l.bf16 %v577
      %v594 = vunpack.c.l.bf16 %v578
      %v595 = vunpack.c.l.bf16 %v579
      %v596 = vunpack.c.l.bf16 %v580
      %v597 = vunpack.c.l.bf16 %v581
      %v598 = vmul.f32 %v582, %v538
      %v599 = vmul.f32 %v583, %v538
      %v600 = vmul.f32 %v584, %v538
      %v601 = vmul.f32 %v585, %v538
      %v602 = vmul.f32 %v586, %v538
      %v603 = vmul.f32 %v587, %v538
      %v604 = vmul.f32 %v588, %v538
      %v605 = vmul.f32 %v589, %v538
      %v606 = vmul.f32 %v590, %v538
      %v607 = vmul.f32 %v591, %v538
      %v608 = vmul.f32 %v592, %v538
      %v609 = vmul.f32 %v593, %v538
      %v610 = vmul.f32 %v594, %v538
      %v611 = vmul.f32 %v595, %v538
      %v612 = vmul.f32 %v596, %v538
      %v613 = vmul.f32 %v597, %v538
      %v614 = vadd.f32 %v598, %v546
      %v615 = vadd.f32 %v599, %v546
      %v616 = vadd.f32 %v600, %v546
      %v617 = vadd.f32 %v601, %v546
      %v618 = vadd.f32 %v602, %v546
      %v619 = vadd.f32 %v603, %v546
      %v620 = vadd.f32 %v604, %v546
      %v621 = vadd.f32 %v605, %v546
      %v622 = vadd.f32 %v606, %v546
      %v623 = vadd.f32 %v607, %v546
      %v624 = vadd.f32 %v608, %v546
      %v625 = vadd.f32 %v609, %v546
      %v626 = vadd.f32 %v610, %v546
      %v627 = vadd.f32 %v611, %v546
      %v628 = vadd.f32 %v612, %v546
      %v629 = vadd.f32 %v613, %v546
      %vm630 = vcmp.gt.f32.partialorder %v614, 0.0
      %vm631 = vcmp.gt.f32.partialorder %v615, 0.0
      %vm632 = vcmp.gt.f32.partialorder %v616, 0.0
      %vm633 = vcmp.gt.f32.partialorder %v617, 0.0
      %vm634 = vcmp.gt.f32.partialorder %v618, 0.0
      %vm635 = vcmp.gt.f32.partialorder %v619, 0.0
      %vm636 = vcmp.gt.f32.partialorder %v620, 0.0
      %vm637 = vcmp.gt.f32.partialorder %v621, 0.0
      %vm638 = vcmp.gt.f32.partialorder %v622, 0.0
      %vm639 = vcmp.gt.f32.partialorder %v623, 0.0
      %vm640 = vcmp.gt.f32.partialorder %v624, 0.0
      %vm641 = vcmp.gt.f32.partialorder %v625, 0.0
      %vm642 = vcmp.gt.f32.partialorder %v626, 0.0
      %vm643 = vcmp.gt.f32.partialorder %v627, 0.0
      %vm644 = vcmp.gt.f32.partialorder %v628, 0.0
      %vm645 = vcmp.gt.f32.partialorder %v629, 0.0
      %v646 = vmul.f32 %v556, %v614
      %v647 = vmul.f32 %v556, %v615
      %v648 = vmul.f32 %v556, %v616
      %v649 = vmul.f32 %v556, %v617
      %v650 = vmul.f32 %v556, %v618
      %v651 = vmul.f32 %v556, %v619
      %v652 = vmul.f32 %v556, %v620
      %v653 = vmul.f32 %v556, %v621
      %v654 = vmul.f32 %v556, %v622
      %v655 = vmul.f32 %v556, %v623
      %v656 = vmul.f32 %v556, %v624
      %v657 = vmul.f32 %v556, %v625
      %v658 = vmul.f32 %v556, %v626
      %v659 = vmul.f32 %v556, %v627
      %v660 = vmul.f32 %v556, %v628
      %v661 = vmul.f32 %v556, %v629
      %v662 = vsel %vm630, %v614, %v646
      %v663 = vsel %vm631, %v615, %v647
      %v664 = vsel %vm632, %v616, %v648
      %v665 = vsel %vm633, %v617, %v649
      %v666 = vsel %vm634, %v618, %v650
      %v667 = vsel %vm635, %v619, %v651
      %v668 = vsel %vm636, %v620, %v652
      %v669 = vsel %vm637, %v621, %v653
      %v670 = vsel %vm638, %v622, %v654
      %v671 = vsel %vm639, %v623, %v655
      %v672 = vsel %vm640, %v624, %v656
      %v673 = vsel %vm641, %v625, %v657
      %v674 = vsel %vm642, %v626, %v658
      %v675 = vsel %vm643, %v627, %v659
      %v676 = vsel %vm644, %v628, %v660
      %v677 = vsel %vm645, %v629, %v661
      %v678 = vpack.c.bf16 %v663, %v662
      %v679 = vpack.c.bf16 %v665, %v664
      %v680 = vpack.c.bf16 %v667, %v666
      %v681 = vpack.c.bf16 %v669, %v668
      %v682 = vpack.c.bf16 %v671, %v670
      %v683 = vpack.c.bf16 %v673, %v672
      %v684 = vpack.c.bf16 %v675, %v674
      %v685 = vpack.c.bf16 %v677, %v676
      %v686 = vld [vmem:[%s498] sm:$0xf]
      %v687 = vld [vmem:[%s498 + $0x4] sm:$0xf]
      %v688 = vunpack.c.l.bf16 %v686
      %v689 = vunpack.c.l.bf16 %v687
      %v690 = vmul.f32 %v688, %v538
      %v691 = vmul.f32 %v689, %v538
      %v692 = vadd.f32 %v690, %v546
      %v693 = vadd.f32 %v691, %v546
      %vm694 = vcmp.gt.f32.partialorder %v692, 0.0
      %vm695 = vcmp.gt.f32.partialorder %v693, 0.0
      %v696 = vmul.f32 %v556, %v692
      %v697 = vmul.f32 %v556, %v693
      %v698 = vsel %vm694, %v692, %v696
      %v699 = vsel %vm695, %v693, %v697
      %v700 = vstv %s529
      %v701 = vmul.f32 %v698, %v700
      %v702 = vmul.f32 %v699, %v700
      %v703 = vpack.c.bf16 %v702, %v701
      %v705 = vshrl.u32 %v565, 16
      %v707 = vrot.slane %v705, 7
      %v708 = vshll.u32 %v565, 16
      %v710 = vor.u32 %v707, %v708
      %v712 = vshrl.u32 %v678, 16
      %v714 = vrot.slane %v712, 7
      %v715 = vshll.u32 %v678, 16
      %v717 = vor.u32 %v714, %v715
      %v719 = vshrl.u32 %v679, 16
      %v721 = vrot.slane %v719, 7
      %v722 = vshll.u32 %v679, 16
      %v724 = vor.u32 %v721, %v722
      %v726 = vshrl.u32 %v680, 16
      %v728 = vrot.slane %v726, 7
      %v729 = vshll.u32 %v680, 16
      %v731 = vor.u32 %v728, %v729
      %v733 = vshrl.u32 %v681, 16
      %v735 = vrot.slane %v733, 7
      %v736 = vshll.u32 %v681, 16
      %v738 = vor.u32 %v735, %v736
      %v740 = vshrl.u32 %v682, 16
      %v742 = vrot.slane %v740, 7
      %v743 = vshll.u32 %v682, 16
      %v745 = vor.u32 %v742, %v743
      %v747 = vshrl.u32 %v683, 16
      %v749 = vrot.slane %v747, 7
      %v750 = vshll.u32 %v683, 16
      %v752 = vor.u32 %v749, %v750
      %v754 = vshrl.u32 %v684, 16
      %v756 = vrot.slane %v754, 7
      %v757 = vshll.u32 %v684, 16
      %v759 = vor.u32 %v756, %v757
      %v761 = vshrl.u32 %v685, 16
      %v763 = vrot.slane %v761, 7
      %v764 = vshll.u32 %v685, 16
      %v766 = vor.u32 %v763, %v764
      %v768 = vshrl.u32 %v703, 16
      %v770 = vrot.slane %v768, 7
      %v771 = vshll.u32 %v703, 16
      %v773 = vor.u32 %v770, %v771
      %vm794 = vcmask 1040384
      %vm795 = vsmask.f32 256
      %vm796 = vmand %vm794, %vm795
      %v797 = vsel %vm796, 0, %v710
      %v798 = vsel %vm796, 0, %v717
      %v799 = vsel %vm796, 0, %v724
      %v800 = vsel %vm796, 0, %v731
      %v801 = vsel %vm796, 0, %v738
      %v802 = vsel %vm796, 0, %v745
      %v803 = vsel %vm796, 0, %v752
      %v804 = vsel %vm796, 0, %v759
      %v805 = vsel %vm796, 0, %v766
      %v806 = vsel %vm796, 0, %v773
      %v807 = vsel %vm796, %v707, 0
      %v808 = vsel %vm796, %v714, 0
      %v809 = vsel %vm796, %v721, 0
      %v810 = vsel %vm796, %v728, 0
      %v811 = vsel %vm796, %v735, 0
      %v812 = vsel %vm796, %v742, 0
      %v813 = vsel %vm796, %v749, 0
      %v814 = vsel %vm796, %v756, 0
      %v815 = vsel %vm796, %v763, 0
      %v816 = vsel %vm796, %v770, 0
      %vm817 = vsmask.f32 7424
      %v819 = vshrl.u32 %v797, 16
      %v821 = vshll.u32 %v797, 16
      %v823 = vrot.slane %v821, 1
      %v824 = vor.u32 %v819, %v823
      %v826 = vshll.u32 %v807, 16
      %v828 = vrot.slane %v826, 1
      %v829 = vsel %vm817, %v824, %v828
      %v831 = vshrl.u32 %v798, 16
      %v833 = vshll.u32 %v798, 16
      %v835 = vrot.slane %v833, 1
      %v836 = vor.u32 %v831, %v835
      %v838 = vshll.u32 %v808, 16
      %v840 = vrot.slane %v838, 1
      %v841 = vsel %vm817, %v836, %v840
      %v843 = vshrl.u32 %v799, 16
      %v845 = vshll.u32 %v799, 16
      %v847 = vrot.slane %v845, 1
      %v848 = vor.u32 %v843, %v847
      %v850 = vshll.u32 %v809, 16
      %v852 = vrot.slane %v850, 1
      %v853 = vsel %vm817, %v848, %v852
      %v855 = vshrl.u32 %v800, 16
      %v857 = vshll.u32 %v800, 16
      %v859 = vrot.slane %v857, 1
      %v860 = vor.u32 %v855, %v859
      %v862 = vshll.u32 %v810, 16
      %v864 = vrot.slane %v862, 1
      %v865 = vsel %vm817, %v860, %v864
      %v867 = vshrl.u32 %v801, 16
      %v869 = vshll.u32 %v801, 16
      %v871 = vrot.slane %v869, 1
      %v872 = vor.u32 %v867, %v871
      %v874 = vshll.u32 %v811, 16
      %v876 = vrot.slane %v874, 1
      %v877 = vsel %vm817, %v872, %v876
      %v879 = vshrl.u32 %v802, 16
      %v881 = vshll.u32 %v802, 16
      %v883 = vrot.slane %v881, 1
      %v884 = vor.u32 %v879, %v883
      %v886 = vshll.u32 %v812, 16
      %v888 = vrot.slane %v886, 1
      %v889 = vsel %vm817, %v884, %v888
      %v891 = vshrl.u32 %v803, 16
      %v893 = vshll.u32 %v803, 16
      %v895 = vrot.slane %v893, 1
      %v896 = vor.u32 %v891, %v895
      %v898 = vshll.u32 %v813, 16
      %v900 = vrot.slane %v898, 1
      %v901 = vsel %vm817, %v896, %v900
      %v903 = vshrl.u32 %v804, 16
      %v905 = vshll.u32 %v804, 16
      %v907 = vrot.slane %v905, 1
      %v908 = vor.u32 %v903, %v907
      %v910 = vshll.u32 %v814, 16
      %v912 = vrot.slane %v910, 1
      %v913 = vsel %vm817, %v908, %v912
      %vm938 = vcmask 1046528
      %v939 = vrot.slane %v797, 1
      %v940 = vrot.slane %v807, 1
      %v941 = vsel %vm938, %v939, %v940
      %v942 = vrot.slane %v798, 1
      %v943 = vrot.slane %v808, 1
      %v944 = vsel %vm938, %v942, %v943
      %v945 = vrot.slane %v799, 1
      %v946 = vrot.slane %v809, 1
      %v947 = vsel %vm938, %v945, %v946
      %v948 = vrot.slane %v800, 1
      %v949 = vrot.slane %v810, 1
      %v950 = vsel %vm938, %v948, %v949
      %v951 = vrot.slane %v801, 1
      %v952 = vrot.slane %v811, 1
      %v953 = vsel %vm938, %v951, %v952
      %v954 = vrot.slane %v802, 1
      %v955 = vrot.slane %v812, 1
      %v956 = vsel %vm938, %v954, %v955
      %v957 = vrot.slane %v803, 1
      %v958 = vrot.slane %v813, 1
      %v959 = vsel %vm938, %v957, %v958
      %v960 = vrot.slane %v804, 1
      %v961 = vrot.slane %v814, 1
      %v962 = vsel %vm938, %v960, %v961
      %v971 = vld [vmem:[%s6] sm:$0xf]
      %v972 = vld [vmem:[%s6 + $0x4] sm:$0xf]
      %v973 = vld [vmem:[%s6 + $0x8] sm:$0xf]
      %v974 = vld [vmem:[%s6 + $0xc] sm:$0xf]
      %v975 = vld [vmem:[%s6 + $0x10] sm:$0xf]
      %v976 = vld [vmem:[%s6 + $0x14] sm:$0xf]
      %v977 = vld [vmem:[%s6 + $0x18] sm:$0xf]
      %v978 = vld [vmem:[%s6 + $0x1c] sm:$0xf]
      %v979 = vld [vmem:[%s6 + $0x20] sm:$0xf]
      %v980 = vld [vmem:[%s6 + $0x24] sm:$0xf]
      %v981 = vld [vmem:[%s6 + $0x28] sm:$0xf]
      %v982 = vld [vmem:[%s6 + $0x2c] sm:$0xf]
      %v983 = vld [vmem:[%s6 + $0x30] sm:$0xf]
      %v984 = vld [vmem:[%s6 + $0x34] sm:$0xf]
      %v985 = vld [vmem:[%s6 + $0x38] sm:$0xf]
      %v986 = vld [vmem:[%s6 + $0x3c] sm:$0xf]
      %v987 = vld [vmem:[%s6 + $0x40] sm:$0xf]
      %v988 = vld [vmem:[%s6 + $0x44] sm:$0xf]
      %v989 = vld [vmem:[%s6 + $0x48] sm:$0xf]
      %v990 = vld [vmem:[%s6 + $0x4c] sm:$0xf]
      %v991 = vld [vmem:[%s6 + $0x50] sm:$0xf]
      %v992 = vld [vmem:[%s6 + $0x54] sm:$0xf]
      %v993 = vld [vmem:[%s6 + $0x58] sm:$0xf]
      %v994 = vld [vmem:[%s6 + $0x5c] sm:$0xf]
      %v995 = vld [vmem:[%s6 + $0x60] sm:$0xf]
      %v996 = vld [vmem:[%s6 + $0x64] sm:$0xf]
      %v997 = vld [vmem:[%s6 + $0x68] sm:$0xf]
      %v998 = vld [vmem:[%s6 + $0x6c] sm:$0xf]
      %v999 = vld [vmem:[%s6 + $0x70] sm:$0xf]
      %v1000 = vld [vmem:[%s6 + $0x74] sm:$0xf]
      %v1001 = vld [vmem:[%s6 + $0x78] sm:$0xf]
      %v1002 = vld [vmem:[%s6 + $0x7c] sm:$0xf]
      %v1003 = vld [vmem:[%s6 + $0x80] sm:$0xf]
      %v1004 = vld [vmem:[%s6 + $0x84] sm:$0xf]
      %v1005 = vld [vmem:[%s6 + $0x88] sm:$0xf]
      %v1006 = vld [vmem:[%s6 + $0x8c] sm:$0xf]
      %v1007 = vld [vmem:[%s6 + $0x90] sm:$0xf]
      %v1008 = vld [vmem:[%s6 + $0x94] sm:$0xf]
      %v1009 = vld [vmem:[%s6 + $0x98] sm:$0xf]
      %v1010 = vld [vmem:[%s6 + $0x9c] sm:$0xf]
      %v1011 = vld [vmem:[%s6 + $0xa0] sm:$0xf]
      %v1012 = vld [vmem:[%s6 + $0xa4] sm:$0xf]
      %v1013 = vld [vmem:[%s6 + $0xa8] sm:$0xf]
      %v1014 = vld [vmem:[%s6 + $0xac] sm:$0xf]
      %v1015 = vld [vmem:[%s6 + $0xb0] sm:$0xf]
      %v1016 = vld [vmem:[%s6 + $0xb4] sm:$0xf]
      %v1017 = vld [vmem:[%s6 + $0xb8] sm:$0xf]
      %v1018 = vld [vmem:[%s6 + $0xbc] sm:$0xf]
      %v1020 = vshrl.u32 %v805, 16
      %v1022 = vshll.u32 %v805, 16
      %v1024 = vrot.slane %v1022, 1
      %v1025 = vor.u32 %v1020, %v1024
      %v1027 = vshll.u32 %v815, 16
      %v1029 = vrot.slane %v1027, 1
      %v1030 = vsel %vm817, %v1025, %v1029
      %v1034 = vrot.slane %v805, 1
      %v1035 = vrot.slane %v815, 1
      %v1036 = vsel %vm938, %v1034, %v1035
      %s1038 = scalar_lea.vmem %s6, 192
      %v1039 = vld [vmem:[%s1038] sm:$0xf]
      %v1040 = vld [vmem:[%s1038 + $0x4] sm:$0xf]
      %v1041 = vld [vmem:[%s1038 + $0x8] sm:$0xf]
      %v1042 = vld [vmem:[%s1038 + $0xc] sm:$0xf]
      %v1043 = vld [vmem:[%s1038 + $0x10] sm:$0xf]
      %v1044 = vld [vmem:[%s1038 + $0x14] sm:$0xf]
      %v1045 = vld [vmem:[%s1038 + $0x18] sm:$0xf]
      %v1046 = vld [vmem:[%s1038 + $0x1c] sm:$0xf]
      %v1047 = vld [vmem:[%s1038 + $0x20] sm:$0xf]
      %v1048 = vld [vmem:[%s1038 + $0x24] sm:$0xf]
      %v1049 = vld [vmem:[%s1038 + $0x28] sm:$0xf]
      %v1050 = vld [vmem:[%s1038 + $0x2c] sm:$0xf]
      %v1051 = vld [vmem:[%s1038 + $0x30] sm:$0xf]
      %v1052 = vld [vmem:[%s1038 + $0x34] sm:$0xf]
      %v1053 = vld [vmem:[%s1038 + $0x38] sm:$0xf]
      %v1054 = vld [vmem:[%s1038 + $0x3c] sm:$0xf]
      %v1055 = vld [vmem:[%s1038 + $0x40] sm:$0xf]
      %v1056 = vld [vmem:[%s1038 + $0x44] sm:$0xf]
      %v1057 = vld [vmem:[%s1038 + $0x48] sm:$0xf]
      %v1058 = vld [vmem:[%s1038 + $0x4c] sm:$0xf]
      %v1059 = vld [vmem:[%s1038 + $0x50] sm:$0xf]
      %v1060 = vld [vmem:[%s1038 + $0x54] sm:$0xf]
      %v1061 = vld [vmem:[%s1038 + $0x58] sm:$0xf]
      %v1062 = vld [vmem:[%s1038 + $0x5c] sm:$0xf]
      %v1063 = vld [vmem:[%s1038 + $0x60] sm:$0xf]
      %v1064 = vld [vmem:[%s1038 + $0x64] sm:$0xf]
      %v1065 = vld [vmem:[%s1038 + $0x68] sm:$0xf]
      %v1066 = vld [vmem:[%s1038 + $0x6c] sm:$0xf]
      %v1067 = vld [vmem:[%s1038 + $0x70] sm:$0xf]
      %v1068 = vld [vmem:[%s1038 + $0x74] sm:$0xf]
      %v1069 = vld [vmem:[%s1038 + $0x78] sm:$0xf]
      %v1070 = vld [vmem:[%s1038 + $0x7c] sm:$0xf]
      %v1071 = vld [vmem:[%s1038 + $0x80] sm:$0xf]
      %v1072 = vld [vmem:[%s1038 + $0x84] sm:$0xf]
      %v1073 = vld [vmem:[%s1038 + $0x88] sm:$0xf]
      %v1074 = vld [vmem:[%s1038 + $0x8c] sm:$0xf]
      %v1075 = vld [vmem:[%s1038 + $0x90] sm:$0xf]
      %v1076 = vld [vmem:[%s1038 + $0x94] sm:$0xf]
      %v1077 = vld [vmem:[%s1038 + $0x98] sm:$0xf]
      %v1078 = vld [vmem:[%s1038 + $0x9c] sm:$0xf]
      %v1079 = vld [vmem:[%s1038 + $0xa0] sm:$0xf]
      %v1080 = vld [vmem:[%s1038 + $0xa4] sm:$0xf]
      %v1081 = vld [vmem:[%s1038 + $0xa8] sm:$0xf]
      %v1082 = vld [vmem:[%s1038 + $0xac] sm:$0xf]
      %v1083 = vld [vmem:[%s1038 + $0xb0] sm:$0xf]
      %v1084 = vld [vmem:[%s1038 + $0xb4] sm:$0xf]
      %v1085 = vld [vmem:[%s1038 + $0xb8] sm:$0xf]
      %v1086 = vld [vmem:[%s1038 + $0xbc] sm:$0xf]
      %v1135 = vunpack.c.l.b16 %v1039
      %v1136 = vunpack.c.l.b16 %v1040
      %v1137 = vunpack.c.l.b16 %v1041
      %v1138 = vunpack.c.l.b16 %v1042
      %v1139 = vunpack.c.l.b16 %v1043
      %v1140 = vunpack.c.l.b16 %v1044
      %v1141 = vunpack.c.l.b16 %v1045
      %v1142 = vunpack.c.l.b16 %v1046
      %v1143 = vunpack.c.l.b16 %v1047
      %v1144 = vunpack.c.l.b16 %v1048
      %v1145 = vunpack.c.l.b16 %v1049
      %v1146 = vunpack.c.l.b16 %v1050
      %v1147 = vunpack.c.l.b16 %v1051
      %v1148 = vunpack.c.l.b16 %v1052
      %v1149 = vunpack.c.l.b16 %v1053
      %v1150 = vunpack.c.l.b16 %v1054
      %v1151 = vunpack.c.l.b16 %v1055
      %v1152 = vunpack.c.l.b16 %v1056
      %v1153 = vunpack.c.l.b16 %v1057
      %v1154 = vunpack.c.l.b16 %v1058
      %v1155 = vunpack.c.l.b16 %v1059
      %v1156 = vunpack.c.l.b16 %v1060
      %v1157 = vunpack.c.l.b16 %v1061
      %v1158 = vunpack.c.l.b16 %v1062
      %v1159 = vunpack.c.l.b16 %v1063
      %v1160 = vunpack.c.l.b16 %v1064
      %v1161 = vunpack.c.l.b16 %v1065
      %v1162 = vunpack.c.l.b16 %v1066
      %v1163 = vunpack.c.l.b16 %v1067
      %v1164 = vunpack.c.l.b16 %v1068
      %v1165 = vunpack.c.l.b16 %v1069
      %v1166 = vunpack.c.l.b16 %v1070
      %v1167 = vunpack.c.l.b16 %v1071
      %v1168 = vunpack.c.l.b16 %v1072
      %v1169 = vunpack.c.l.b16 %v1073
      %v1170 = vunpack.c.l.b16 %v1074
      %v1171 = vunpack.c.l.b16 %v1075
      %v1172 = vunpack.c.l.b16 %v1076
      %v1173 = vunpack.c.l.b16 %v1077
      %v1174 = vunpack.c.l.b16 %v1078
      %v1175 = vunpack.c.l.b16 %v1079
      %v1176 = vunpack.c.l.b16 %v1080
      %v1177 = vunpack.c.l.b16 %v1081
      %v1178 = vunpack.c.l.b16 %v1082
      %v1179 = vunpack.c.l.b16 %v1083
      %v1180 = vunpack.c.l.b16 %v1084
      %v1181 = vunpack.c.l.b16 %v1085
      %v1182 = vunpack.c.l.b16 %v1086
      %v1183 = vpack.c.b16 %v1136, %v1135
      %v1184 = vpack.c.b16 %v1138, %v1137
      %v1185 = vpack.c.b16 %v1140, %v1139
      %v1186 = vpack.c.b16 %v1142, %v1141
      %v1187 = vpack.c.b16 %v1144, %v1143
      %v1188 = vpack.c.b16 %v1146, %v1145
      %v1189 = vpack.c.b16 %v1148, %v1147
      %v1190 = vpack.c.b16 %v1150, %v1149
      %v1191 = vpack.c.b16 %v1152, %v1151
      %v1192 = vpack.c.b16 %v1154, %v1153
      %v1193 = vpack.c.b16 %v1156, %v1155
      %v1194 = vpack.c.b16 %v1158, %v1157
      %v1195 = vpack.c.b16 %v1160, %v1159
      %v1196 = vpack.c.b16 %v1162, %v1161
      %v1197 = vpack.c.b16 %v1164, %v1163
      %v1198 = vpack.c.b16 %v1166, %v1165
      %v1199 = vpack.c.b16 %v1168, %v1167
      %v1200 = vpack.c.b16 %v1170, %v1169
      %v1201 = vpack.c.b16 %v1172, %v1171
      %v1202 = vpack.c.b16 %v1174, %v1173
      %v1203 = vpack.c.b16 %v1176, %v1175
      %v1204 = vpack.c.b16 %v1178, %v1177
      %v1205 = vpack.c.b16 %v1180, %v1179
      %v1206 = vpack.c.b16 %v1182, %v1181
      %1231 = vmatprep.subr.bf16.mxu0 0
      %1232 = vmatpush1.bf16.msra.mxu0 %v1183
      %1233 = vmatprep.subr.bf16.mxu0 0
      %1234 = vmatpush1.bf16.msra.mxu0 %v1184
      %1235 = vmatprep.subr.bf16.mxu0 0
      %1236 = vmatpush1.bf16.msra.mxu0 %v1185
      %1237 = vmatprep.subr.bf16.mxu0 0
      %1238 = vmatpush1.bf16.msra.mxu0 %v1186
      %1239 = vmatprep.subr.bf16.mxu0 0
      %1240 = vmatpush1.bf16.msra.mxu0 %v1187
      %1241 = vmatprep.subr.bf16.mxu0 0
      %1242 = vmatpush1.bf16.msra.mxu0 %v1188
      %1243 = vmatprep.subr.bf16.mxu0 0
      %1244 = vmatpush1.bf16.msra.mxu0 %v1189
      %1245 = vmatprep.subr.bf16.mxu0 0
      %1246 = vmatpush1.bf16.msra.mxu0 %v1190
      %1247 = vmatprep.subr.bf16.mxu0 0
      %1248 = vmatpush1.bf16.msra.mxu0 %v1191
      %1249 = vmatprep.subr.bf16.mxu0 0
      %1250 = vmatpush1.bf16.msra.mxu0 %v1192
      %1251 = vmatprep.subr.bf16.mxu0 0
      %1252 = vmatpush1.bf16.msra.mxu0 %v1193
      %1253 = vmatprep.subr.bf16.mxu0 0
      %1254 = vmatpush1.bf16.msra.mxu0 %v1194
      %1255 = vmatprep.subr.bf16.mxu0 0
      %1256 = vmatpush1.bf16.msra.mxu0 %v1195
      %1257 = vmatprep.subr.bf16.mxu0 0
      %1258 = vmatpush1.bf16.msra.mxu0 %v1196
      %1259 = vmatprep.subr.bf16.mxu0 0
      %1260 = vmatpush1.bf16.msra.mxu0 %v1197
      %1261 = vmatprep.subr.bf16.mxu0 0
      %1262 = vmatpush1.bf16.msra.mxu0 %v1198
      %1263 = vmatprep.mubr.bf16.mxu0 %v841
      %1264 = vmatmul.mubr.bf16.gmra.mrb[0].mxu0 %v798
      %v1265 = vpop.f32.mrb[0].mxu0
      %v1266 = vadd.f32 0.0, %v1265
      %v1267 = vpop.f32.mrb[0].mxu0
      %v1268 = vpop.f32.mrb[0].mxu0
      %v1269 = vadd.f32 0.0, %v1268
      %v1270 = vpop.f32.mrb[0].mxu0
      %1271 = vmatprep.mubr.bf16.mxu0 %v853
      %1272 = vmatmul.mubr.bf16.gmra.mrb[0].mxu0 %v799
      %v1273 = vpop.f32.mrb[0].mxu0
      %v1274 = vadd.f32 0.0, %v1273
      %v1275 = vpop.f32.mrb[0].mxu0
      %v1276 = vpop.f32.mrb[0].mxu0
      %v1277 = vadd.f32 0.0, %v1276
      %v1278 = vpop.f32.mrb[0].mxu0
      %1279 = vmatprep.mubr.bf16.mxu0 %v865
      %1280 = vmatmul.mubr.bf16.gmra.mrb[0].mxu0 %v800
      %v1281 = vpop.f32.mrb[0].mxu0
      %v1282 = vadd.f32 0.0, %v1281
      %v1283 = vpop.f32.mrb[0].mxu0
      %v1284 = vpop.f32.mrb[0].mxu0
      %v1285 = vadd.f32 0.0, %v1284
      %v1286 = vpop.f32.mrb[0].mxu0
      %1287 = vmatprep.mubr.bf16.mxu0 %v877
      %1288 = vmatmul.mubr.bf16.gmra.mrb[0].mxu0 %v801
      %v1289 = vpop.f32.mrb[0].mxu0
      %v1290 = vadd.f32 0.0, %v1289
      %v1291 = vpop.f32.mrb[0].mxu0
      %v1292 = vpop.f32.mrb[0].mxu0
      %v1293 = vadd.f32 0.0, %v1292
      %v1294 = vpop.f32.mrb[0].mxu0
      %1295 = vmatprep.mubr.bf16.mxu0 %v889
      %1296 = vmatmul.mubr.bf16.gmra.mrb[0].mxu0 %v802
      %v1297 = vpop.f32.mrb[0].mxu0
      %v1298 = vadd.f32 0.0, %v1297
      %v1299 = vpop.f32.mrb[0].mxu0
      %v1300 = vpop.f32.mrb[0].mxu0
      %v1301 = vadd.f32 0.0, %v1300
      %v1302 = vpop.f32.mrb[0].mxu0
      %1303 = vmatprep.mubr.bf16.mxu0 %v901
      %1304 = vmatmul.mubr.bf16.gmra.mrb[0].mxu0 %v803
      %v1305 = vpop.f32.mrb[0].mxu0
      %v1306 = vadd.f32 0.0, %v1305
      %v1307 = vpop.f32.mrb[0].mxu0
      %v1308 = vpop.f32.mrb[0].mxu0
      %v1309 = vadd.f32 0.0, %v1308
      %v1310 = vpop.f32.mrb[0].mxu0
      %1311 = vmatprep.mubr.bf16.mxu0 %v913
      %1312 = vmatmul.mubr.bf16.gmra.mrb[0].mxu0 %v804
      %v1313 = vpop.f32.mrb[0].mxu0
      %v1314 = vadd.f32 0.0, %v1313
      %v1315 = vpop.f32.mrb[0].mxu0
      %v1316 = vpop.f32.mrb[0].mxu0
      %v1317 = vadd.f32 0.0, %v1316
      %v1318 = vpop.f32.mrb[0].mxu0
      %1319 = vmatprep.mubr.bf16.mxu0 %v1030
      %1320 = vmatmul.mubr.bf16.gmra.mrb[0].mxu0 %v805
      %v1321 = vpop.f32.mrb[0].mxu0
      %v1322 = vadd.f32 0.0, %v1321
      %v1323 = vpop.f32.mrb[0].mxu0
      %v1324 = vpop.f32.mrb[0].mxu0
      %v1325 = vadd.f32 0.0, %v1324
      %v1326 = vpop.f32.mrb[0].mxu0
      %1327 = vdwg.mxu0
      %1328 = vmatprep.subr.bf16.mxu0 0
      %1329 = vmatpush1.bf16.msra.mxu0 %v1199
      %1330 = vmatprep.subr.bf16.mxu0 0
      %1331 = vmatpush1.bf16.msra.mxu0 %v1200
      %1332 = vmatprep.subr.bf16.mxu0 0
      %1333 = vmatpush1.bf16.msra.mxu0 %v1201
      %1334 = vmatprep.subr.bf16.mxu0 0
      %1335 = vmatpush1.bf16.msra.mxu0 %v1202
      %1336 = vmatprep.subr.bf16.mxu0 0
      %1337 = vmatpush1.bf16.msra.mxu0 %v1203
      %1338 = vmatprep.subr.bf16.mxu0 0
      %1339 = vmatpush1.bf16.msra.mxu0 %v1204
      %1340 = vmatprep.subr.bf16.mxu0 0
      %1341 = vmatpush1.bf16.msra.mxu0 %v1205
      %1342 = vmatprep.subr.bf16.mxu0 0
      %1343 = vmatpush1.bf16.msra.mxu0 %v1206
      %1344 = vmatprep.subr.bf16.mxu0 0
      %1345 = vmatpush1.bf16.msra.mxu0 0
      %1346 = vmatprep.subr.bf16.mxu0 0
      %1347 = vmatpush1.bf16.msra.mxu0 0
      %1348 = vmatprep.subr.bf16.mxu0 0
      %1349 = vmatpush1.bf16.msra.mxu0 0
      %1350 = vmatprep.subr.bf16.mxu0 0
      %1351 = vmatpush1.bf16.msra.mxu0 0
      %1352 = vmatprep.subr.bf16.mxu0 0
      %1353 = vmatpush1.bf16.msra.mxu0 0
      %1354 = vmatprep.subr.bf16.mxu0 0
      %1355 = vmatpush1.bf16.msra.mxu0 0
      %1356 = vmatprep.subr.bf16.mxu0 0
      %1357 = vmatpush1.bf16.msra.mxu0 0
      %1358 = vmatprep.subr.bf16.mxu0 0
      %1359 = vmatpush1.bf16.msra.mxu0 0
      %1360 = vmatprep.mubr.bf16.mxu0 0
      %1361 = vmatmul.mubr.bf16.gmra.mrb[0].mxu0 %v944
      %v1362 = vpop.f32.mrb[0].mxu0
      %v1363 = vadd.f32 %v1266, %v1362
      %v1364 = vpop.f32.mrb[0].mxu0
      %v1365 = vpop.f32.mrb[0].mxu0
      %v1366 = vadd.f32 %v1269, %v1365
      %v1367 = vpop.f32.mrb[0].mxu0
      %1368 = vmatprep.mubr.bf16.mxu0 0
      %1369 = vmatmul.mubr.bf16.gmra.mrb[0].mxu0 %v947
      %v1370 = vpop.f32.mrb[0].mxu0
      %v1371 = vadd.f32 %v1274, %v1370
      %v1372 = vpop.f32.mrb[0].mxu0
      %v1373 = vpop.f32.mrb[0].mxu0
      %v1374 = vadd.f32 %v1277, %v1373
      %v1375 = vpop.f32.mrb[0].mxu0
      %1376 = vmatprep.mubr.bf16.mxu0 0
      %1377 = vmatmul.mubr.bf16.gmra.mrb[0].mxu0 %v950
      %v1378 = vpop.f32.mrb[0].mxu0
      %v1379 = vadd.f32 %v1282, %v1378
      %v1380 = vpop.f32.mrb[0].mxu0
      %v1381 = vpop.f32.mrb[0].mxu0
      %v1382 = vadd.f32 %v1285, %v1381
      %v1383 = vpop.f32.mrb[0].mxu0
      %1384 = vmatprep.mubr.bf16.mxu0 0
      %1385 = vmatmul.mubr.bf16.gmra.mrb[0].mxu0 %v953
      %v1386 = vpop.f32.mrb[0].mxu0
      %v1387 = vadd.f32 %v1290, %v1386
      %v1388 = vpop.f32.mrb[0].mxu0
      %v1389 = vpop.f32.mrb[0].mxu0
      %v1390 = vadd.f32 %v1293, %v1389
      %v1391 = vpop.f32.mrb[0].mxu0
      %1392 = vmatprep.mubr.bf16.mxu0 0
      %1393 = vmatmul.mubr.bf16.gmra.mrb[0].mxu0 %v956
      %v1394 = vpop.f32.mrb[0].mxu0
      %v1395 = vadd.f32 %v1298, %v1394
      %v1396 = vpop.f32.mrb[0].mxu0
      %v1397 = vpop.f32.mrb[0].mxu0
      %v1398 = vadd.f32 %v1301, %v1397
      %v1399 = vpop.f32.mrb[0].mxu0
      %1400 = vmatprep.mubr.bf16.mxu0 0
      %1401 = vmatmul.mubr.bf16.gmra.mrb[0].mxu0 %v959
      %v1402 = vpop.f32.mrb[0].mxu0
      %v1403 = vadd.f32 %v1306, %v1402
      %v1404 = vpop.f32.mrb[0].mxu0
      %v1405 = vpop.f32.mrb[0].mxu0
      %v1406 = vadd.f32 %v1309, %v1405
      %v1407 = vpop.f32.mrb[0].mxu0
      %1408 = vmatprep.mubr.bf16.mxu0 0
      %1409 = vmatmul.mubr.bf16.gmra.mrb[0].mxu0 %v962
      %v1410 = vpop.f32.mrb[0].mxu0
      %v1411 = vadd.f32 %v1314, %v1410
      %v1412 = vpop.f32.mrb[0].mxu0
      %v1413 = vpop.f32.mrb[0].mxu0
      %v1414 = vadd.f32 %v1317, %v1413
      %v1415 = vpop.f32.mrb[0].mxu0
      %1416 = vmatprep.mubr.bf16.mxu0 0
      %1417 = vmatmul.mubr.bf16.gmra.mrb[0].mxu0 %v1036
      %v1418 = vpop.f32.mrb[0].mxu0
      %v1419 = vadd.f32 %v1322, %v1418
      %v1420 = vpop.f32.mrb[0].mxu0
      %v1421 = vpop.f32.mrb[0].mxu0
      %v1422 = vadd.f32 %v1325, %v1421
      %v1423 = vpop.f32.mrb[0].mxu0
      %1424 = vdwg.mxu0
      %v1473 = vunpack.c.l.b16 %v971
      %v1474 = vunpack.c.l.b16 %v972
      %v1475 = vunpack.c.l.b16 %v973
      %v1476 = vunpack.c.l.b16 %v974
      %v1477 = vunpack.c.l.b16 %v975
      %v1478 = vunpack.c.l.b16 %v976
      %v1479 = vunpack.c.l.b16 %v977
      %v1480 = vunpack.c.l.b16 %v978
      %v1481 = vunpack.c.l.b16 %v979
      %v1482 = vunpack.c.l.b16 %v980
      %v1483 = vunpack.c.l.b16 %v981
      %v1484 = vunpack.c.l.b16 %v982
      %v1485 = vunpack.c.l.b16 %v983
      %v1486 = vunpack.c.l.b16 %v984
      %v1487 = vunpack.c.l.b16 %v985
      %v1488 = vunpack.c.l.b16 %v986
      %v1489 = vunpack.c.l.b16 %v987
      %v1490 = vunpack.c.l.b16 %v988
      %v1491 = vunpack.c.l.b16 %v989
      %v1492 = vunpack.c.l.b16 %v990
      %v1493 = vunpack.c.l.b16 %v991
      %v1494 = vunpack.c.l.b16 %v992
      %v1495 = vunpack.c.l.b16 %v993
      %v1496 = vunpack.c.l.b16 %v994
      %v1497 = vunpack.c.l.b16 %v995
      %v1498 = vunpack.c.l.b16 %v996
      %v1499 = vunpack.c.l.b16 %v997
      %v1500 = vunpack.c.l.b16 %v998
      %v1501 = vunpack.c.l.b16 %v999
      %v1502 = vunpack.c.l.b16 %v1000
      %v1503 = vunpack.c.l.b16 %v1001
      %v1504 = vunpack.c.l.b16 %v1002
      %v1505 = vunpack.c.l.b16 %v1003
      %v1506 = vunpack.c.l.b16 %v1004
      %v1507 = vunpack.c.l.b16 %v1005
      %v1508 = vunpack.c.l.b16 %v1006
      %v1509 = vunpack.c.l.b16 %v1007
      %v1510 = vunpack.c.l.b16 %v1008
      %v1511 = vunpack.c.l.b16 %v1009
      %v1512 = vunpack.c.l.b16 %v1010
      %v1513 = vunpack.c.l.b16 %v1011
      %v1514 = vunpack.c.l.b16 %v1012
      %v1515 = vunpack.c.l.b16 %v1013
      %v1516 = vunpack.c.l.b16 %v1014
      %v1517 = vunpack.c.l.b16 %v1015
      %v1518 = vunpack.c.l.b16 %v1016
      %v1519 = vunpack.c.l.b16 %v1017
      %v1520 = vunpack.c.l.b16 %v1018
      %v1521 = vpack.c.b16 %v1474, %v1473
      %v1522 = vpack.c.b16 %v1476, %v1475
      %v1523 = vpack.c.b16 %v1478, %v1477
      %v1524 = vpack.c.b16 %v1480, %v1479
      %v1525 = vpack.c.b16 %v1482, %v1481
      %v1526 = vpack.c.b16 %v1484, %v1483
      %v1527 = vpack.c.b16 %v1486, %v1485
      %v1528 = vpack.c.b16 %v1488, %v1487
      %v1529 = vpack.c.b16 %v1490, %v1489
      %v1530 = vpack.c.b16 %v1492, %v1491
      %v1531 = vpack.c.b16 %v1494, %v1493
      %v1532 = vpack.c.b16 %v1496, %v1495
      %v1533 = vpack.c.b16 %v1498, %v1497
      %v1534 = vpack.c.b16 %v1500, %v1499
      %v1535 = vpack.c.b16 %v1502, %v1501
      %v1536 = vpack.c.b16 %v1504, %v1503
      %v1537 = vpack.c.b16 %v1506, %v1505
      %v1538 = vpack.c.b16 %v1508, %v1507
      %v1539 = vpack.c.b16 %v1510, %v1509
      %v1540 = vpack.c.b16 %v1512, %v1511
      %v1541 = vpack.c.b16 %v1514, %v1513
      %v1542 = vpack.c.b16 %v1516, %v1515
      %v1543 = vpack.c.b16 %v1518, %v1517
      %v1544 = vpack.c.b16 %v1520, %v1519
      %1569 = vmatprep.subr.bf16.mxu0 0
      %1570 = vmatpush1.bf16.msra.mxu0 %v1521
      %1571 = vmatprep.subr.bf16.mxu0 0
      %1572 = vmatpush1.bf16.msra.mxu0 %v1522
      %1573 = vmatprep.subr.bf16.mxu0 0
      %1574 = vmatpush1.bf16.msra.mxu0 %v1523
      %1575 = vmatprep.subr.bf16.mxu0 0
      %1576 = vmatpush1.bf16.msra.mxu0 %v1524
      %1577 = vmatprep.subr.bf16.mxu0 0
      %1578 = vmatpush1.bf16.msra.mxu0 %v1525
      %1579 = vmatprep.subr.bf16.mxu0 0
      %1580 = vmatpush1.bf16.msra.mxu0 %v1526
      %1581 = vmatprep.subr.bf16.mxu0 0
      %1582 = vmatpush1.bf16.msra.mxu0 %v1527
      %1583 = vmatprep.subr.bf16.mxu0 0
      %1584 = vmatpush1.bf16.msra.mxu0 %v1528
      %1585 = vmatprep.subr.bf16.mxu0 0
      %1586 = vmatpush1.bf16.msra.mxu0 %v1529
      %1587 = vmatprep.subr.bf16.mxu0 0
      %1588 = vmatpush1.bf16.msra.mxu0 %v1530
      %1589 = vmatprep.subr.bf16.mxu0 0
      %1590 = vmatpush1.bf16.msra.mxu0 %v1531
      %1591 = vmatprep.subr.bf16.mxu0 0
      %1592 = vmatpush1.bf16.msra.mxu0 %v1532
      %1593 = vmatprep.subr.bf16.mxu0 0
      %1594 = vmatpush1.bf16.msra.mxu0 %v1533
      %1595 = vmatprep.subr.bf16.mxu0 0
      %1596 = vmatpush1.bf16.msra.mxu0 %v1534
      %1597 = vmatprep.subr.bf16.mxu0 0
      %1598 = vmatpush1.bf16.msra.mxu0 %v1535
      %1599 = vmatprep.subr.bf16.mxu0 0
      %1600 = vmatpush1.bf16.msra.mxu0 %v1536
      %1601 = vmatprep.mubr.bf16.mxu0 %v829
      %1602 = vmatmul.mubr.bf16.gmra.mrb[0].mxu0 %v797
      %v1603 = vpop.f32.mrb[0].mxu0
      %v1604 = vadd.f32 %v1363, %v1603
      %v1605 = vpop.f32.mrb[0].mxu0
      %v1606 = vpop.f32.mrb[0].mxu0
      %v1607 = vadd.f32 %v1366, %v1606
      %v1608 = vpop.f32.mrb[0].mxu0
      %1609 = vmatprep.mubr.bf16.mxu0 %v841
      %1610 = vmatmul.mubr.bf16.gmra.mrb[0].mxu0 %v798
      %v1611 = vpop.f32.mrb[0].mxu0
      %v1612 = vadd.f32 %v1371, %v1611
      %v1613 = vpop.f32.mrb[0].mxu0
      %v1614 = vpop.f32.mrb[0].mxu0
      %v1615 = vadd.f32 %v1374, %v1614
      %v1616 = vpop.f32.mrb[0].mxu0
      %1617 = vmatprep.mubr.bf16.mxu0 %v853
      %1618 = vmatmul.mubr.bf16.gmra.mrb[0].mxu0 %v799
      %v1619 = vpop.f32.mrb[0].mxu0
      %v1620 = vadd.f32 %v1379, %v1619
      %v1621 = vpop.f32.mrb[0].mxu0
      %v1622 = vpop.f32.mrb[0].mxu0
      %v1623 = vadd.f32 %v1382, %v1622
      %v1624 = vpop.f32.mrb[0].mxu0
      %1625 = vmatprep.mubr.bf16.mxu0 %v865
      %1626 = vmatmul.mubr.bf16.gmra.mrb[0].mxu0 %v800
      %v1627 = vpop.f32.mrb[0].mxu0
      %v1628 = vadd.f32 %v1387, %v1627
      %v1629 = vpop.f32.mrb[0].mxu0
      %v1630 = vpop.f32.mrb[0].mxu0
      %v1631 = vadd.f32 %v1390, %v1630
      %v1632 = vpop.f32.mrb[0].mxu0
      %1633 = vmatprep.mubr.bf16.mxu0 %v877
      %1634 = vmatmul.mubr.bf16.gmra.mrb[0].mxu0 %v801
      %v1635 = vpop.f32.mrb[0].mxu0
      %v1636 = vadd.f32 %v1395, %v1635
      %v1637 = vpop.f32.mrb[0].mxu0
      %v1638 = vpop.f32.mrb[0].mxu0
      %v1639 = vadd.f32 %v1398, %v1638
      %v1640 = vpop.f32.mrb[0].mxu0
      %1641 = vmatprep.mubr.bf16.mxu0 %v889
      %1642 = vmatmul.mubr.bf16.gmra.mrb[0].mxu0 %v802
      %v1643 = vpop.f32.mrb[0].mxu0
      %v1644 = vadd.f32 %v1403, %v1643
      %v1645 = vpop.f32.mrb[0].mxu0
      %v1646 = vpop.f32.mrb[0].mxu0
      %v1647 = vadd.f32 %v1406, %v1646
      %v1648 = vpop.f32.mrb[0].mxu0
      %1649 = vmatprep.mubr.bf16.mxu0 %v901
      %1650 = vmatmul.mubr.bf16.gmra.mrb[0].mxu0 %v803
      %v1651 = vpop.f32.mrb[0].mxu0
      %v1652 = vadd.f32 %v1411, %v1651
      %v1653 = vpop.f32.mrb[0].mxu0
      %v1654 = vpop.f32.mrb[0].mxu0
      %v1655 = vadd.f32 %v1414, %v1654
      %v1656 = vpop.f32.mrb[0].mxu0
      %1657 = vmatprep.mubr.bf16.mxu0 %v913
      %1658 = vmatmul.mubr.bf16.gmra.mrb[0].mxu0 %v804
      %v1659 = vpop.f32.mrb[0].mxu0
      %v1660 = vadd.f32 %v1419, %v1659
      %v1661 = vpop.f32.mrb[0].mxu0
      %v1662 = vpop.f32.mrb[0].mxu0
      %v1663 = vadd.f32 %v1422, %v1662
      %v1664 = vpop.f32.mrb[0].mxu0
      %1665 = vdwg.mxu0
      %1666 = vmatprep.subr.bf16.mxu0 0
      %1667 = vmatpush1.bf16.msra.mxu0 %v1537
      %1668 = vmatprep.subr.bf16.mxu0 0
      %1669 = vmatpush1.bf16.msra.mxu0 %v1538
      %1670 = vmatprep.subr.bf16.mxu0 0
      %1671 = vmatpush1.bf16.msra.mxu0 %v1539
      %1672 = vmatprep.subr.bf16.mxu0 0
      %1673 = vmatpush1.bf16.msra.mxu0 %v1540
      %1674 = vmatprep.subr.bf16.mxu0 0
      %1675 = vmatpush1.bf16.msra.mxu0 %v1541
      %1676 = vmatprep.subr.bf16.mxu0 0
      %1677 = vmatpush1.bf16.msra.mxu0 %v1542
      %1678 = vmatprep.subr.bf16.mxu0 0
      %1679 = vmatpush1.bf16.msra.mxu0 %v1543
      %1680 = vmatprep.subr.bf16.mxu0 0
      %1681 = vmatpush1.bf16.msra.mxu0 %v1544
      %1682 = vmatprep.subr.bf16.mxu0 0
      %1683 = vmatpush1.bf16.msra.mxu0 0
      %1684 = vmatprep.subr.bf16.mxu0 0
      %1685 = vmatpush1.bf16.msra.mxu0 0
      %1686 = vmatprep.subr.bf16.mxu0 0
      %1687 = vmatpush1.bf16.msra.mxu0 0
      %1688 = vmatprep.subr.bf16.mxu0 0
      %1689 = vmatpush1.bf16.msra.mxu0 0
      %1690 = vmatprep.subr.bf16.mxu0 0
      %1691 = vmatpush1.bf16.msra.mxu0 0
      %1692 = vmatprep.subr.bf16.mxu0 0
      %1693 = vmatpush1.bf16.msra.mxu0 0
      %1694 = vmatprep.subr.bf16.mxu0 0
      %1695 = vmatpush1.bf16.msra.mxu0 0
      %1696 = vmatprep.subr.bf16.mxu0 0
      %1697 = vmatpush1.bf16.msra.mxu0 0
      %1698 = vmatprep.mubr.bf16.mxu0 0
      %1699 = vmatmul.mubr.bf16.gmra.mrb[0].mxu0 %v941
      %v1700 = vpop.f32.mrb[0].mxu0
      %v1701 = vadd.f32 %v1604, %v1700
      %v1702 = vpop.f32.mrb[0].mxu0
      %v1703 = vpop.f32.mrb[0].mxu0
      %v1704 = vadd.f32 %v1607, %v1703
      %v1705 = vpop.f32.mrb[0].mxu0
      %1706 = vmatprep.mubr.bf16.mxu0 0
      %1707 = vmatmul.mubr.bf16.gmra.mrb[0].mxu0 %v944
      %v1708 = vpop.f32.mrb[0].mxu0
      %v1709 = vadd.f32 %v1612, %v1708
      %v1710 = vpop.f32.mrb[0].mxu0
      %v1711 = vpop.f32.mrb[0].mxu0
      %v1712 = vadd.f32 %v1615, %v1711
      %v1713 = vpop.f32.mrb[0].mxu0
      %1714 = vmatprep.mubr.bf16.mxu0 0
      %1715 = vmatmul.mubr.bf16.gmra.mrb[0].mxu0 %v947
      %v1716 = vpop.f32.mrb[0].mxu0
      %v1717 = vadd.f32 %v1620, %v1716
      %v1718 = vpop.f32.mrb[0].mxu0
      %v1719 = vpop.f32.mrb[0].mxu0
      %v1720 = vadd.f32 %v1623, %v1719
      %v1721 = vpop.f32.mrb[0].mxu0
      %1722 = vmatprep.mubr.bf16.mxu0 0
      %1723 = vmatmul.mubr.bf16.gmra.mrb[0].mxu0 %v950
      %v1724 = vpop.f32.mrb[0].mxu0
      %v1725 = vadd.f32 %v1628, %v1724
      %v1726 = vpop.f32.mrb[0].mxu0
      %v1727 = vpop.f32.mrb[0].mxu0
      %v1728 = vadd.f32 %v1631, %v1727
      %v1729 = vpop.f32.mrb[0].mxu0
      %1730 = vmatprep.mubr.bf16.mxu0 0
      %1731 = vmatmul.mubr.bf16.gmra.mrb[0].mxu0 %v953
      %v1732 = vpop.f32.mrb[0].mxu0
      %v1733 = vadd.f32 %v1636, %v1732
      %v1734 = vpop.f32.mrb[0].mxu0
      %v1735 = vpop.f32.mrb[0].mxu0
      %v1736 = vadd.f32 %v1639, %v1735
      %v1737 = vpop.f32.mrb[0].mxu0
      %1738 = vmatprep.mubr.bf16.mxu0 0
      %1739 = vmatmul.mubr.bf16.gmra.mrb[0].mxu0 %v956
      %v1740 = vpop.f32.mrb[0].mxu0
      %v1741 = vadd.f32 %v1644, %v1740
      %v1742 = vpop.f32.mrb[0].mxu0
      %v1743 = vpop.f32.mrb[0].mxu0
      %v1744 = vadd.f32 %v1647, %v1743
      %v1745 = vpop.f32.mrb[0].mxu0
      %1746 = vmatprep.mubr.bf16.mxu0 0
      %1747 = vmatmul.mubr.bf16.gmra.mrb[0].mxu0 %v959
      %v1748 = vpop.f32.mrb[0].mxu0
      %v1749 = vadd.f32 %v1652, %v1748
      %v1750 = vpop.f32.mrb[0].mxu0
      %v1751 = vpop.f32.mrb[0].mxu0
      %v1752 = vadd.f32 %v1655, %v1751
      %v1753 = vpop.f32.mrb[0].mxu0
      %1754 = vmatprep.mubr.bf16.mxu0 0
      %1755 = vmatmul.mubr.bf16.gmra.mrb[0].mxu0 %v962
      %v1756 = vpop.f32.mrb[0].mxu0
      %v1757 = vadd.f32 %v1660, %v1756
      %v1758 = vpop.f32.mrb[0].mxu0
      %v1759 = vpop.f32.mrb[0].mxu0
      %v1760 = vadd.f32 %v1663, %v1759
      %v1761 = vpop.f32.mrb[0].mxu0
      %1762 = vdwg.mxu0
      %v1764 = vshrl.u32 %v806, 16
      %v1766 = vshll.u32 %v806, 16
      %v1768 = vrot.slane %v1766, 1
      %v1769 = vor.u32 %v1764, %v1768
      %v1771 = vshll.u32 %v816, 16
      %v1773 = vrot.slane %v1771, 1
      %v1774 = vsel %vm817, %v1769, %v1773
      %v1778 = vrot.slane %v806, 1
      %v1779 = vrot.slane %v816, 1
      %v1780 = vsel %vm938, %v1778, %v1779
      %s1782 = scalar_lea.vmem %s6, 384
      %v1783 = vld [vmem:[%s1782] sm:$0xf]
      %v1784 = vld [vmem:[%s1782 + $0x4] sm:$0xf]
      %v1785 = vld [vmem:[%s1782 + $0x8] sm:$0xf]
      %v1786 = vld [vmem:[%s1782 + $0xc] sm:$0xf]
      %v1787 = vld [vmem:[%s1782 + $0x10] sm:$0xf]
      %v1788 = vld [vmem:[%s1782 + $0x14] sm:$0xf]
      %v1789 = vld [vmem:[%s1782 + $0x18] sm:$0xf]
      %v1790 = vld [vmem:[%s1782 + $0x1c] sm:$0xf]
      %v1791 = vld [vmem:[%s1782 + $0x20] sm:$0xf]
      %v1792 = vld [vmem:[%s1782 + $0x24] sm:$0xf]
      %v1793 = vld [vmem:[%s1782 + $0x28] sm:$0xf]
      %v1794 = vld [vmem:[%s1782 + $0x2c] sm:$0xf]
      %v1795 = vld [vmem:[%s1782 + $0x30] sm:$0xf]
      %v1796 = vld [vmem:[%s1782 + $0x34] sm:$0xf]
      %v1797 = vld [vmem:[%s1782 + $0x38] sm:$0xf]
      %v1798 = vld [vmem:[%s1782 + $0x3c] sm:$0xf]
      %v1799 = vld [vmem:[%s1782 + $0x40] sm:$0xf]
      %v1800 = vld [vmem:[%s1782 + $0x44] sm:$0xf]
      %v1801 = vld [vmem:[%s1782 + $0x48] sm:$0xf]
      %v1802 = vld [vmem:[%s1782 + $0x4c] sm:$0xf]
      %v1803 = vld [vmem:[%s1782 + $0x50] sm:$0xf]
      %v1804 = vld [vmem:[%s1782 + $0x54] sm:$0xf]
      %v1805 = vld [vmem:[%s1782 + $0x58] sm:$0xf]
      %v1806 = vld [vmem:[%s1782 + $0x5c] sm:$0xf]
      %v1807 = vld [vmem:[%s1782 + $0x60] sm:$0xf]
      %v1808 = vld [vmem:[%s1782 + $0x64] sm:$0xf]
      %v1809 = vld [vmem:[%s1782 + $0x68] sm:$0xf]
      %v1810 = vld [vmem:[%s1782 + $0x6c] sm:$0xf]
      %v1811 = vld [vmem:[%s1782 + $0x70] sm:$0xf]
      %v1812 = vld [vmem:[%s1782 + $0x74] sm:$0xf]
      %v1813 = vld [vmem:[%s1782 + $0x78] sm:$0xf]
      %v1814 = vld [vmem:[%s1782 + $0x7c] sm:$0xf]
      %v1815 = vld [vmem:[%s1782 + $0x80] sm:$0xf]
      %v1816 = vld [vmem:[%s1782 + $0x84] sm:$0xf]
      %v1817 = vld [vmem:[%s1782 + $0x88] sm:$0xf]
      %v1818 = vld [vmem:[%s1782 + $0x8c] sm:$0xf]
      %v1819 = vld [vmem:[%s1782 + $0x90] sm:$0xf]
      %v1820 = vld [vmem:[%s1782 + $0x94] sm:$0xf]
      %v1821 = vld [vmem:[%s1782 + $0x98] sm:$0xf]
      %v1822 = vld [vmem:[%s1782 + $0x9c] sm:$0xf]
      %v1823 = vld [vmem:[%s1782 + $0xa0] sm:$0xf]
      %v1824 = vld [vmem:[%s1782 + $0xa4] sm:$0xf]
      %v1825 = vld [vmem:[%s1782 + $0xa8] sm:$0xf]
      %v1826 = vld [vmem:[%s1782 + $0xac] sm:$0xf]
      %v1827 = vld [vmem:[%s1782 + $0xb0] sm:$0xf]
      %v1828 = vld [vmem:[%s1782 + $0xb4] sm:$0xf]
      %v1829 = vld [vmem:[%s1782 + $0xb8] sm:$0xf]
      %v1830 = vld [vmem:[%s1782 + $0xbc] sm:$0xf]
      %v1879 = vunpack.c.l.b16 %v1783
      %v1880 = vunpack.c.l.b16 %v1784
      %v1881 = vunpack.c.l.b16 %v1785
      %v1882 = vunpack.c.l.b16 %v1786
      %v1883 = vunpack.c.l.b16 %v1787
      %v1884 = vunpack.c.l.b16 %v1788
      %v1885 = vunpack.c.l.b16 %v1789
      %v1886 = vunpack.c.l.b16 %v1790
      %v1887 = vunpack.c.l.b16 %v1791
      %v1888 = vunpack.c.l.b16 %v1792
      %v1889 = vunpack.c.l.b16 %v1793
      %v1890 = vunpack.c.l.b16 %v1794
      %v1891 = vunpack.c.l.b16 %v1795
      %v1892 = vunpack.c.l.b16 %v1796
      %v1893 = vunpack.c.l.b16 %v1797
      %v1894 = vunpack.c.l.b16 %v1798
      %v1895 = vunpack.c.l.b16 %v1799
      %v1896 = vunpack.c.l.b16 %v1800
      %v1897 = vunpack.c.l.b16 %v1801
      %v1898 = vunpack.c.l.b16 %v1802
      %v1899 = vunpack.c.l.b16 %v1803
      %v1900 = vunpack.c.l.b16 %v1804
      %v1901 = vunpack.c.l.b16 %v1805
      %v1902 = vunpack.c.l.b16 %v1806
      %v1903 = vunpack.c.l.b16 %v1807
      %v1904 = vunpack.c.l.b16 %v1808
      %v1905 = vunpack.c.l.b16 %v1809
      %v1906 = vunpack.c.l.b16 %v1810
      %v1907 = vunpack.c.l.b16 %v1811
      %v1908 = vunpack.c.l.b16 %v1812
      %v1909 = vunpack.c.l.b16 %v1813
      %v1910 = vunpack.c.l.b16 %v1814
      %v1911 = vunpack.c.l.b16 %v1815
      %v1912 = vunpack.c.l.b16 %v1816
      %v1913 = vunpack.c.l.b16 %v1817
      %v1914 = vunpack.c.l.b16 %v1818
      %v1915 = vunpack.c.l.b16 %v1819
      %v1916 = vunpack.c.l.b16 %v1820
      %v1917 = vunpack.c.l.b16 %v1821
      %v1918 = vunpack.c.l.b16 %v1822
      %v1919 = vunpack.c.l.b16 %v1823
      %v1920 = vunpack.c.l.b16 %v1824
      %v1921 = vunpack.c.l.b16 %v1825
      %v1922 = vunpack.c.l.b16 %v1826
      %v1923 = vunpack.c.l.b16 %v1827
      %v1924 = vunpack.c.l.b16 %v1828
      %v1925 = vunpack.c.l.b16 %v1829
      %v1926 = vunpack.c.l.b16 %v1830
      %v1927 = vpack.c.b16 %v1880, %v1879
      %v1928 = vpack.c.b16 %v1882, %v1881
      %v1929 = vpack.c.b16 %v1884, %v1883
      %v1930 = vpack.c.b16 %v1886, %v1885
      %v1931 = vpack.c.b16 %v1888, %v1887
      %v1932 = vpack.c.b16 %v1890, %v1889
      %v1933 = vpack.c.b16 %v1892, %v1891
      %v1934 = vpack.c.b16 %v1894, %v1893
      %v1935 = vpack.c.b16 %v1896, %v1895
      %v1936 = vpack.c.b16 %v1898, %v1897
      %v1937 = vpack.c.b16 %v1900, %v1899
      %v1938 = vpack.c.b16 %v1902, %v1901
      %v1939 = vpack.c.b16 %v1904, %v1903
      %v1940 = vpack.c.b16 %v1906, %v1905
      %v1941 = vpack.c.b16 %v1908, %v1907
      %v1942 = vpack.c.b16 %v1910, %v1909
      %v1943 = vpack.c.b16 %v1912, %v1911
      %v1944 = vpack.c.b16 %v1914, %v1913
      %v1945 = vpack.c.b16 %v1916, %v1915
      %v1946 = vpack.c.b16 %v1918, %v1917
      %v1947 = vpack.c.b16 %v1920, %v1919
      %v1948 = vpack.c.b16 %v1922, %v1921
      %v1949 = vpack.c.b16 %v1924, %v1923
      %v1950 = vpack.c.b16 %v1926, %v1925
      %1975 = vmatprep.subr.bf16.mxu0 0
      %1976 = vmatpush1.bf16.msra.mxu0 %v1927
      %1977 = vmatprep.subr.bf16.mxu0 0
      %1978 = vmatpush1.bf16.msra.mxu0 %v1928
      %1979 = vmatprep.subr.bf16.mxu0 0
      %1980 = vmatpush1.bf16.msra.mxu0 %v1929
      %1981 = vmatprep.subr.bf16.mxu0 0
      %1982 = vmatpush1.bf16.msra.mxu0 %v1930
      %1983 = vmatprep.subr.bf16.mxu0 0
      %1984 = vmatpush1.bf16.msra.mxu0 %v1931
      %1985 = vmatprep.subr.bf16.mxu0 0
      %1986 = vmatpush1.bf16.msra.mxu0 %v1932
      %1987 = vmatprep.subr.bf16.mxu0 0
      %1988 = vmatpush1.bf16.msra.mxu0 %v1933
      %1989 = vmatprep.subr.bf16.mxu0 0
      %1990 = vmatpush1.bf16.msra.mxu0 %v1934
      %1991 = vmatprep.subr.bf16.mxu0 0
      %1992 = vmatpush1.bf16.msra.mxu0 %v1935
      %1993 = vmatprep.subr.bf16.mxu0 0
      %1994 = vmatpush1.bf16.msra.mxu0 %v1936
      %1995 = vmatprep.subr.bf16.mxu0 0
      %1996 = vmatpush1.bf16.msra.mxu0 %v1937
      %1997 = vmatprep.subr.bf16.mxu0 0
      %1998 = vmatpush1.bf16.msra.mxu0 %v1938
      %1999 = vmatprep.subr.bf16.mxu0 0
      %2000 = vmatpush1.bf16.msra.mxu0 %v1939
      %2001 = vmatprep.subr.bf16.mxu0 0
      %2002 = vmatpush1.bf16.msra.mxu0 %v1940
      %2003 = vmatprep.subr.bf16.mxu0 0
      %2004 = vmatpush1.bf16.msra.mxu0 %v1941
      %2005 = vmatprep.subr.bf16.mxu0 0
      %2006 = vmatpush1.bf16.msra.mxu0 %v1942
      %2007 = vmatprep.mubr.bf16.mxu0 %v853
      %2008 = vmatmul.mubr.bf16.gmra.mrb[0].mxu0 %v799
      %v2009 = vpop.f32.mrb[0].mxu0
      %v2010 = vadd.f32 0.0, %v2009
      %v2011 = vpop.f32.mrb[0].mxu0
      %v2012 = vpop.f32.mrb[0].mxu0
      %v2013 = vadd.f32 0.0, %v2012
      %v2014 = vpop.f32.mrb[0].mxu0
      %2015 = vmatprep.mubr.bf16.mxu0 %v865
      %2016 = vmatmul.mubr.bf16.gmra.mrb[0].mxu0 %v800
      %v2017 = vpop.f32.mrb[0].mxu0
      %v2018 = vadd.f32 0.0, %v2017
      %v2019 = vpop.f32.mrb[0].mxu0
      %v2020 = vpop.f32.mrb[0].mxu0
      %v2021 = vadd.f32 0.0, %v2020
      %v2022 = vpop.f32.mrb[0].mxu0
      %2023 = vmatprep.mubr.bf16.mxu0 %v877
      %2024 = vmatmul.mubr.bf16.gmra.mrb[0].mxu0 %v801
      %v2025 = vpop.f32.mrb[0].mxu0
      %v2026 = vadd.f32 0.0, %v2025
      %v2027 = vpop.f32.mrb[0].mxu0
      %v2028 = vpop.f32.mrb[0].mxu0
      %v2029 = vadd.f32 0.0, %v2028
      %v2030 = vpop.f32.mrb[0].mxu0
      %2031 = vmatprep.mubr.bf16.mxu0 %v889
      %2032 = vmatmul.mubr.bf16.gmra.mrb[0].mxu0 %v802
      %v2033 = vpop.f32.mrb[0].mxu0
      %v2034 = vadd.f32 0.0, %v2033
      %v2035 = vpop.f32.mrb[0].mxu0
      %v2036 = vpop.f32.mrb[0].mxu0
      %v2037 = vadd.f32 0.0, %v2036
      %v2038 = vpop.f32.mrb[0].mxu0
      %2039 = vmatprep.mubr.bf16.mxu0 %v901
      %2040 = vmatmul.mubr.bf16.gmra.mrb[0].mxu0 %v803
      %v2041 = vpop.f32.mrb[0].mxu0
      %v2042 = vadd.f32 0.0, %v2041
      %v2043 = vpop.f32.mrb[0].mxu0
      %v2044 = vpop.f32.mrb[0].mxu0
      %v2045 = vadd.f32 0.0, %v2044
      %v2046 = vpop.f32.mrb[0].mxu0
      %2047 = vmatprep.mubr.bf16.mxu0 %v913
      %2048 = vmatmul.mubr.bf16.gmra.mrb[0].mxu0 %v804
      %v2049 = vpop.f32.mrb[0].mxu0
      %v2050 = vadd.f32 0.0, %v2049
      %v2051 = vpop.f32.mrb[0].mxu0
      %v2052 = vpop.f32.mrb[0].mxu0
      %v2053 = vadd.f32 0.0, %v2052
      %v2054 = vpop.f32.mrb[0].mxu0
      %2055 = vmatprep.mubr.bf16.mxu0 %v1030
      %2056 = vmatmul.mubr.bf16.gmra.mrb[0].mxu0 %v805
      %v2057 = vpop.f32.mrb[0].mxu0
      %v2058 = vadd.f32 0.0, %v2057
      %v2059 = vpop.f32.mrb[0].mxu0
      %v2060 = vpop.f32.mrb[0].mxu0
      %v2061 = vadd.f32 0.0, %v2060
      %v2062 = vpop.f32.mrb[0].mxu0
      %2063 = vmatprep.mubr.bf16.mxu0 %v1774
      %2064 = vmatmul.mubr.bf16.gmra.mrb[0].mxu0 %v806
      %v2065 = vpop.f32.mrb[0].mxu0
      %v2066 = vadd.f32 0.0, %v2065
      %v2067 = vpop.f32.mrb[0].mxu0
      %v2068 = vpop.f32.mrb[0].mxu0
      %v2069 = vadd.f32 0.0, %v2068
      %v2070 = vpop.f32.mrb[0].mxu0
      %2071 = vdwg.mxu0
      %2072 = vmatprep.subr.bf16.mxu0 0
      %2073 = vmatpush1.bf16.msra.mxu0 %v1943
      %2074 = vmatprep.subr.bf16.mxu0 0
      %2075 = vmatpush1.bf16.msra.mxu0 %v1944
      %2076 = vmatprep.subr.bf16.mxu0 0
      %2077 = vmatpush1.bf16.msra.mxu0 %v1945
      %2078 = vmatprep.subr.bf16.mxu0 0
      %2079 = vmatpush1.bf16.msra.mxu0 %v1946
      %2080 = vmatprep.subr.bf16.mxu0 0
      %2081 = vmatpush1.bf16.msra.mxu0 %v1947
      %2082 = vmatprep.subr.bf16.mxu0 0
      %2083 = vmatpush1.bf16.msra.mxu0 %v1948
      %2084 = vmatprep.subr.bf16.mxu0 0
      %2085 = vmatpush1.bf16.msra.mxu0 %v1949
      %2086 = vmatprep.subr.bf16.mxu0 0
      %2087 = vmatpush1.bf16.msra.mxu0 %v1950
      %2088 = vmatprep.subr.bf16.mxu0 0
      %2089 = vmatpush1.bf16.msra.mxu0 0
      %2090 = vmatprep.subr.bf16.mxu0 0
      %2091 = vmatpush1.bf16.msra.mxu0 0
      %2092 = vmatprep.subr.bf16.mxu0 0
      %2093 = vmatpush1.bf16.msra.mxu0 0
      %2094 = vmatprep.subr.bf16.mxu0 0
      %2095 = vmatpush1.bf16.msra.mxu0 0
      %2096 = vmatprep.subr.bf16.mxu0 0
      %2097 = vmatpush1.bf16.msra.mxu0 0
      %2098 = vmatprep.subr.bf16.mxu0 0
      %2099 = vmatpush1.bf16.msra.mxu0 0
      %2100 = vmatprep.subr.bf16.mxu0 0
      %2101 = vmatpush1.bf16.msra.mxu0 0
      %2102 = vmatprep.subr.bf16.mxu0 0
      %2103 = vmatpush1.bf16.msra.mxu0 0
      %2104 = vmatprep.mubr.bf16.mxu0 0
      %2105 = vmatmul.mubr.bf16.gmra.mrb[0].mxu0 %v947
      %v2106 = vpop.f32.mrb[0].mxu0
      %v2107 = vadd.f32 %v2010, %v2106
      %v2108 = vpop.f32.mrb[0].mxu0
      %v2109 = vpop.f32.mrb[0].mxu0
      %v2110 = vadd.f32 %v2013, %v2109
      %v2111 = vpop.f32.mrb[0].mxu0
      %2112 = vmatprep.mubr.bf16.mxu0 0
      %2113 = vmatmul.mubr.bf16.gmra.mrb[0].mxu0 %v950
      %v2114 = vpop.f32.mrb[0].mxu0
      %v2115 = vadd.f32 %v2018, %v2114
      %v2116 = vpop.f32.mrb[0].mxu0
      %v2117 = vpop.f32.mrb[0].mxu0
      %v2118 = vadd.f32 %v2021, %v2117
      %v2119 = vpop.f32.mrb[0].mxu0
      %2120 = vmatprep.mubr.bf16.mxu0 0
      %2121 = vmatmul.mubr.bf16.gmra.mrb[0].mxu0 %v953
      %v2122 = vpop.f32.mrb[0].mxu0
      %v2123 = vadd.f32 %v2026, %v2122
      %v2124 = vpop.f32.mrb[0].mxu0
      %v2125 = vpop.f32.mrb[0].mxu0
      %v2126 = vadd.f32 %v2029, %v2125
      %v2127 = vpop.f32.mrb[0].mxu0
      %2128 = vmatprep.mubr.bf16.mxu0 0
      %2129 = vmatmul.mubr.bf16.gmra.mrb[0].mxu0 %v956
      %v2130 = vpop.f32.mrb[0].mxu0
      %v2131 = vadd.f32 %v2034, %v2130
      %v2132 = vpop.f32.mrb[0].mxu0
      %v2133 = vpop.f32.mrb[0].mxu0
      %v2134 = vadd.f32 %v2037, %v2133
      %v2135 = vpop.f32.mrb[0].mxu0
      %2136 = vmatprep.mubr.bf16.mxu0 0
      %2137 = vmatmul.mubr.bf16.gmra.mrb[0].mxu0 %v959
      %v2138 = vpop.f32.mrb[0].mxu0
      %v2139 = vadd.f32 %v2042, %v2138
      %v2140 = vpop.f32.mrb[0].mxu0
      %v2141 = vpop.f32.mrb[0].mxu0
      %v2142 = vadd.f32 %v2045, %v2141
      %v2143 = vpop.f32.mrb[0].mxu0
      %2144 = vmatprep.mubr.bf16.mxu0 0
      %2145 = vmatmul.mubr.bf16.gmra.mrb[0].mxu0 %v962
      %v2146 = vpop.f32.mrb[0].mxu0
      %v2147 = vadd.f32 %v2050, %v2146
      %v2148 = vpop.f32.mrb[0].mxu0
      %v2149 = vpop.f32.mrb[0].mxu0
      %v2150 = vadd.f32 %v2053, %v2149
      %v2151 = vpop.f32.mrb[0].mxu0
      %2152 = vmatprep.mubr.bf16.mxu0 0
      %2153 = vmatmul.mubr.bf16.gmra.mrb[0].mxu0 %v1036
      %v2154 = vpop.f32.mrb[0].mxu0
      %v2155 = vadd.f32 %v2058, %v2154
      %v2156 = vpop.f32.mrb[0].mxu0
      %v2157 = vpop.f32.mrb[0].mxu0
      %v2158 = vadd.f32 %v2061, %v2157
      %v2159 = vpop.f32.mrb[0].mxu0
      %2160 = vmatprep.mubr.bf16.mxu0 0
      %2161 = vmatmul.mubr.bf16.gmra.mrb[0].mxu0 %v1780
      %v2162 = vpop.f32.mrb[0].mxu0
      %v2163 = vadd.f32 %v2066, %v2162
      %v2164 = vpop.f32.mrb[0].mxu0
      %v2165 = vpop.f32.mrb[0].mxu0
      %v2166 = vadd.f32 %v2069, %v2165
      %v2167 = vpop.f32.mrb[0].mxu0
      %2168 = vdwg.mxu0
      %v2169 = vadd.f32 %v1701, %v2107
      %v2170 = vadd.f32 %v1704, %v2110
      %v2171 = vadd.f32 %v1709, %v2115
      %v2172 = vadd.f32 %v1712, %v2118
      %v2173 = vadd.f32 %v1717, %v2123
      %v2174 = vadd.f32 %v1720, %v2126
      %v2175 = vadd.f32 %v1725, %v2131
      %v2176 = vadd.f32 %v1728, %v2134
      %v2177 = vadd.f32 %v1733, %v2139
      %v2178 = vadd.f32 %v1736, %v2142
      %v2179 = vadd.f32 %v1741, %v2147
      %v2180 = vadd.f32 %v1744, %v2150
      %v2181 = vadd.f32 %v1749, %v2155
      %v2182 = vadd.f32 %v1752, %v2158
      %v2183 = vadd.f32 %v1757, %v2163
      %v2184 = vadd.f32 %v1760, %v2166
      %v2185 = vld [vmem:[%s7] sm:$0x1]
      %v2187 = vlaneseq
      %v2188 = vshrl.u32 %v2187, 7
      %v2189 = vsub.s32 0, %v2188
      %v2190 = vrot.slane %v2185, %v2189
      %v2192 = vadd.f32 %v2169, %v2190
      %v2193 = vadd.f32 %v2170, %v2190
      %v2194 = vadd.f32 %v2171, %v2190
      %v2195 = vadd.f32 %v2172, %v2190
      %v2196 = vadd.f32 %v2173, %v2190
      %v2197 = vadd.f32 %v2174, %v2190
      %v2198 = vadd.f32 %v2175, %v2190
      %v2199 = vadd.f32 %v2176, %v2190
      %v2200 = vadd.f32 %v2177, %v2190
      %v2201 = vadd.f32 %v2178, %v2190
      %v2202 = vadd.f32 %v2179, %v2190
      %v2203 = vadd.f32 %v2180, %v2190
      %v2204 = vadd.f32 %v2181, %v2190
      %v2205 = vadd.f32 %v2182, %v2190
      %v2206 = vadd.f32 %v2183, %v2190
      %v2207 = vadd.f32 %v2184, %v2190
      %v2208 = vpack.c.bf16 %v2193, %v2192
      %v2209 = vpack.c.bf16 %v2195, %v2194
      %v2210 = vpack.c.bf16 %v2197, %v2196
      %v2211 = vpack.c.bf16 %v2199, %v2198
      %v2212 = vpack.c.bf16 %v2201, %v2200
      %v2213 = vpack.c.bf16 %v2203, %v2202
      %v2214 = vpack.c.bf16 %v2205, %v2204
      %v2215 = vpack.c.bf16 %v2207, %v2206
      %v2224 = vunpack.c.l.b16 %v2208
      %v2225 = vunpack.c.h.b16 %v2208
      %v2226 = vunpack.c.l.b16 %v2209
      %v2227 = vunpack.c.h.b16 %v2209
      %v2228 = vunpack.c.l.b16 %v2210
      %v2229 = vunpack.c.h.b16 %v2210
      %v2230 = vunpack.c.l.b16 %v2211
      %v2231 = vunpack.c.h.b16 %v2211
      %v2232 = vunpack.c.l.b16 %v2212
      %v2233 = vunpack.c.h.b16 %v2212
      %v2234 = vunpack.c.l.b16 %v2213
      %v2235 = vunpack.c.h.b16 %v2213
      %v2236 = vunpack.c.l.b16 %v2214
      %v2237 = vunpack.c.h.b16 %v2214
      %v2238 = vunpack.c.l.b16 %v2215
      %v2239 = vunpack.c.h.b16 %v2215
      %v2240 = vpack.c.b16 %v2224, %v2224
      %v2241 = vpack.c.b16 %v2225, %v2225
      %v2242 = vpack.c.b16 %v2226, %v2226
      %v2243 = vpack.c.b16 %v2227, %v2227
      %v2244 = vpack.c.b16 %v2228, %v2228
      %v2245 = vpack.c.b16 %v2229, %v2229
      %v2246 = vpack.c.b16 %v2230, %v2230
      %v2247 = vpack.c.b16 %v2231, %v2231
      %v2248 = vpack.c.b16 %v2232, %v2232
      %v2249 = vpack.c.b16 %v2233, %v2233
      %v2250 = vpack.c.b16 %v2234, %v2234
      %v2251 = vpack.c.b16 %v2235, %v2235
      %v2252 = vpack.c.b16 %v2236, %v2236
      %v2253 = vpack.c.b16 %v2237, %v2237
      %v2254 = vpack.c.b16 %v2238, %v2238
      %v2255 = vpack.c.b16 %v2239, %v2239
      %2272 = vst [vmem:[%s512] sm:$0xf] %v2240
      %2273 = vst [vmem:[%s512 + $0x4] sm:$0xf] %v2241
      %2274 = vst [vmem:[%s512 + $0x8] sm:$0xf] %v2242
      %2275 = vst [vmem:[%s512 + $0xc] sm:$0xf] %v2243
      %2276 = vst [vmem:[%s512 + $0x10] sm:$0xf] %v2244
      %2277 = vst [vmem:[%s512 + $0x14] sm:$0xf] %v2245
      %2278 = vst [vmem:[%s512 + $0x18] sm:$0xf] %v2246
      %2279 = vst [vmem:[%s512 + $0x1c] sm:$0xf] %v2247
      %2280 = vst [vmem:[%s512 + $0x20] sm:$0xf] %v2248
      %2281 = vst [vmem:[%s512 + $0x24] sm:$0xf] %v2249
      %2282 = vst [vmem:[%s512 + $0x28] sm:$0xf] %v2250
      %2283 = vst [vmem:[%s512 + $0x2c] sm:$0xf] %v2251
      %2284 = vst [vmem:[%s512 + $0x30] sm:$0xf] %v2252
      %2285 = vst [vmem:[%s512 + $0x34] sm:$0xf] %v2253
      %2286 = vst [vmem:[%s512 + $0x38] sm:$0xf] %v2254
      %2287 = vst [vmem:[%s512 + $0x3c] sm:$0xf] %v2255
      %v2288 = vadd.f32 %v2192, %v2193
      %v2289 = vadd.f32 %v2288, %v2194
      %v2290 = vadd.f32 %v2289, %v2195
      %v2291 = vadd.f32 %v2290, %v2196
      %v2292 = vadd.f32 %v2291, %v2197
      %v2293 = vadd.f32 %v2292, %v2198
      %v2294 = vadd.f32 %v2293, %v2199
      %v2295 = vadd.f32 %v2294, %v2200
      %v2296 = vadd.f32 %v2295, %v2201
      %v2297 = vadd.f32 %v2296, %v2202
      %v2298 = vadd.f32 %v2297, %v2203
      %v2299 = vadd.f32 %v2298, %v2204
      %v2300 = vadd.f32 %v2299, %v2205
      %v2301 = vadd.f32 %v2300, %v2206
      %v2302 = vadd.f32 %v2301, %v2207
      %v2303 = vrot.slane %v2302, 4
      %v2304 = vadd.f32 %v2302, %v2303
      %v2305 = vrot.slane %v2304, 2
      %v2306 = vadd.f32 %v2304, %v2305
      %v2307 = vrot.slane %v2306, 1
      %v2308 = vadd.f32 %v2306, %v2307
      %2309 = vst [vmem:[%s521] sm:$0x1] %v2308
      %v2310 = vmul.f32 %v2192, %v2192
      %v2311 = vmul.f32 %v2193, %v2193
      %v2312 = vmul.f32 %v2194, %v2194
      %v2313 = vmul.f32 %v2195, %v2195
      %v2314 = vmul.f32 %v2196, %v2196
      %v2315 = vmul.f32 %v2197, %v2197
      %v2316 = vmul.f32 %v2198, %v2198
      %v2317 = vmul.f32 %v2199, %v2199
      %v2318 = vmul.f32 %v2200, %v2200
      %v2319 = vmul.f32 %v2201, %v2201
      %v2320 = vmul.f32 %v2202, %v2202
      %v2321 = vmul.f32 %v2203, %v2203
      %v2322 = vmul.f32 %v2204, %v2204
      %v2323 = vmul.f32 %v2205, %v2205
      %v2324 = vmul.f32 %v2206, %v2206
      %v2325 = vmul.f32 %v2207, %v2207
      %v2326 = vadd.f32 %v2310, %v2311
      %v2327 = vadd.f32 %v2326, %v2312
      %v2328 = vadd.f32 %v2327, %v2313
      %v2329 = vadd.f32 %v2328, %v2314
      %v2330 = vadd.f32 %v2329, %v2315
      %v2331 = vadd.f32 %v2330, %v2316
      %v2332 = vadd.f32 %v2331, %v2317
      %v2333 = vadd.f32 %v2332, %v2318
      %v2334 = vadd.f32 %v2333, %v2319
      %v2335 = vadd.f32 %v2334, %v2320
      %v2336 = vadd.f32 %v2335, %v2321
      %v2337 = vadd.f32 %v2336, %v2322
      %v2338 = vadd.f32 %v2337, %v2323
      %v2339 = vadd.f32 %v2338, %v2324
      %v2340 = vadd.f32 %v2339, %v2325
      %v2341 = vrot.slane %v2340, 4
      %v2342 = vadd.f32 %v2340, %v2341
      %v2343 = vrot.slane %v2342, 2
      %v2344 = vadd.f32 %v2342, %v2343
      %v2345 = vrot.slane %v2344, 1
      %v2346 = vadd.f32 %v2344, %v2345
      %2347 = vst [vmem:[%s521 + $0x1] sm:$0x1] %v2346
      %s2348 = smul.u32 8, %s26
      %p2349 = scmp.lt.s32.totalorder %s25, 1
      %s2350 = scalar_select %p2349, %s25, 1
      %p2351 = scmp.lt.s32.totalorder %s2348, 15
      %s2352 = scalar_select %p2351, %s2348, 15
      %s2353 = smul.addr %s2352, 2
      %s2354 = smul.addr %s2350, 32
      %s2355 = sadd.s32 %s2353, %s2354
      %s2356 = smul.addr %s2355, 4
      %s2357 = scalar_lea.vmem %s8, %s2356
      %p2358 = scmp.lt.s32.totalorder %s25, 1
      %s2359 = scalar_select %p2358, %s25, 1
      %p2360 = scmp.lt.s32.totalorder %s26, 1
      %s2361 = scalar_select %p2360, %s26, 1
      %s2362 = smul.addr %s2359, 2
      %s2363 = sadd.s32 %s2361, %s2362
      %s2364 = smul.addr %s2363, 2
      %s2365 = scalar_lea.vmem %s9, %s2364
      // Predicated region
      $region53: #{residual_block.4} parent=51 // pred_check
        %p2366 = pneg %p258
      $region54: #{residual_block.4} parent=51 // pred_check_branch
        %2368 = sbr.rel (%p2366) target = $region56
      $region55: #{residual_block.4} parent=51 // pred_region
        %s2369 = smul.u32 8, %s26
      $region56: #{residual_block.4} parent=51 // pred_fallthru
        _
      // Predicated region
      $region57: #{residual_block.4} parent=51 // pred_check
        %p2370 = pneg %p286
      $region58: #{residual_block.4} parent=51 // pred_check_branch
        %2372 = sbr.rel (%p2370) target = $region60
      $region59: #{residual_block.4} parent=51 // pred_region
        _
      $region60: #{residual_block.4} parent=51 // pred_fallthru
        _
    $region52: #{residual_block.4} parent=5 // pred_fallthru
      _
    %p2373 = scmp.le.s32.totalorder 2, %s16
    // Predicated region
    $region61: #{residual_block.4} parent=5 // pred_check
      %p2374 = pneg %p2373
    $region62: #{residual_block.4} parent=5 // pred_check_branch
      %2376 = sbr.rel (%p2374) target = $region64
    $region63: #{residual_block.4} parent=5 // pred_region
      %s2377 = ssub.s32 %s16, 2
      // Predicated region
      $region65: #{residual_block.4} parent=63 // pred_check
        %p2378 = pneg %p264
      $region66: #{residual_block.4} parent=63 // pred_check_branch
        %2380 = sbr.rel (%p2378) target = $region68
      $region67: #{residual_block.4} parent=63 // pred_region
        %s2381 = smul.u32 8, %s28
        %p2382 = scmp.lt.s32.totalorder %s27, 1
        %s2383 = scalar_select %p2382, %s27, 1
        %p2384 = scmp.lt.s32.totalorder %s2381, 15
        %s2385 = scalar_select %p2384, %s2381, 15
        %s2386 = smul.addr %s2385, 2
        %s2387 = smul.addr %s2383, 32
        %s2388 = sadd.s32 %s2386, %s2387
        %s2389 = smul.addr %s2388, 4
        %s2390 = scalar_lea.vmem %s8, %s2389
      $region68: #{residual_block.4} parent=63 // pred_fallthru
        _
      // Predicated region
      $region69: #{residual_block.4} parent=63 // pred_check
        %p2391 = pneg %p292
      $region70: #{residual_block.4} parent=63 // pred_check_branch
        %2393 = sbr.rel (%p2391) target = $region72
      $region71: #{residual_block.4} parent=63 // pred_region
        %p2394 = scmp.lt.s32.totalorder %s27, 1
        %s2395 = scalar_select %p2394, %s27, 1
        %p2396 = scmp.lt.s32.totalorder %s28, 1
        %s2397 = scalar_select %p2396, %s28, 1
        %s2398 = smul.addr %s2395, 2
        %s2399 = sadd.s32 %s2397, %s2398
        %s2400 = smul.addr %s2399, 2
        %s2401 = scalar_lea.vmem %s9, %s2400
      $region72: #{residual_block.4} parent=63 // pred_fallthru
        _
    $region64: #{residual_block.4} parent=5 // pred_fallthru
      _
  $region6: #{residual_block.4} parent=0 // loop_footer
    %s20 = sadd.s32 1, %s16
  $region7: #{residual_block.4} parent=0 // loop_footer_branch
    %15 = sbr.rel target = $region3
  $region8: #{residual_block.4} parent=0 // loop_exit
    _

</llo_original>
